<compile_context>
chip_gen: v6e
topology: v6e:2x2x1
jax: 0.10.0
libtpu: 0.0.40
codegen_flags: <defaults>
</compile_context>

<pallas_src>
import numpy as np
import jax
import jax.numpy as jnp
from jax import lax
from jax.experimental import pallas as pl
from jax.experimental.pallas import tpu as pltpu


def _round_up(x, m):
    return ((x + m - 1) // m) * m


# --------------------------------------------------------------------------------------
# Fused triple-GRU kernel (spatial GRU + two tau GRUs), lane-packed state, time loop
# internalized.  State layout (lanes): [h_s(0:H) | h_t1(H:2H) | h_t2(2H:3H) | pad(..GB)]
# LHS layout per step:                [packed state (GB) | x_loc(LE) | x_tau(1) | pad(..XB)]
# Gate column layout (4*GB):          [ r-block | z-block | n_in-block | n_hid-block ]
# with the three GRUs occupying lanes 0:H / H:2H / 2H:3H inside every block.
# Pad lanes (zero weights + zero bias) provably stay exactly 0 across steps.
# --------------------------------------------------------------------------------------

def make_fused_gru_kernel(GB, T, unroll):
    def kernel(x_ref, w_ref, b_ref, out_ref):
        B = x_ref.shape[1]

        def step(t, h):
            # shuffle-free concat at a 128-lane boundary; bf16 MXU operands
            lhs = jnp.concatenate([h.astype(jnp.bfloat16), x_ref[t]], axis=1)
            g = (jnp.dot(lhs, w_ref[...], preferred_element_type=jnp.float32)
                 + b_ref[...])
            r = jax.nn.sigmoid(g[:, 0:GB])                   # full-vreg slices
            z = jax.nn.sigmoid(g[:, GB:2 * GB])
            n = jnp.tanh(g[:, 2 * GB:3 * GB] + r * g[:, 3 * GB:4 * GB])
            h_new = (1.0 - z) * n + z * h
            out_ref[t] = h_new                               # ONE unmasked 128-lane vst
            return h_new

        h0 = jnp.zeros((B, GB), jnp.float32)
        lax.fori_loop(0, T, step, h0, unroll=unroll)

    return kernel


def build_fused_gru_weights(p_rnn, p_tau, p_mom, LE, H):
    """Fused (K, 4*GB) weight + (1, 4*GB) bias in the packed-lane layout above."""
    GB = _round_up(3 * H, 128)        # packed hidden / per-gate block width
    XB = _round_up(LE + 1, 128)       # packed input block width
    K = GB + XB

    W = np.zeros((K, 4 * GB), np.float32)
    b = np.zeros((1, 4 * GB), np.float32)

    def put_hidden(row0, whh, bhh, lane0):
        # hidden contributes to r(0), z(1), n_hid(3) blocks
        W[row0:row0 + H, 0 * GB + lane0:0 * GB + lane0 + H] = whh[:, 0:H]
        W[row0:row0 + H, 1 * GB + lane0:1 * GB + lane0 + H] = whh[:, H:2 * H]
        W[row0:row0 + H, 3 * GB + lane0:3 * GB + lane0 + H] = whh[:, 2 * H:3 * H]
        b[0, 0 * GB + lane0:0 * GB + lane0 + H] += bhh[0, 0:H]
        b[0, 1 * GB + lane0:1 * GB + lane0 + H] += bhh[0, H:2 * H]
        b[0, 3 * GB + lane0:3 * GB + lane0 + H] += bhh[0, 2 * H:3 * H]

    def put_input(row0, rows, wih, bih, lane0):
        # input contributes to r(0), z(1), n_in(2) blocks
        W[row0:row0 + rows, 0 * GB + lane0:0 * GB + lane0 + H] = wih[:, 0:H]
        W[row0:row0 + rows, 1 * GB + lane0:1 * GB + lane0 + H] = wih[:, H:2 * H]
        W[row0:row0 + rows, 2 * GB + lane0:2 * GB + lane0 + H] = wih[:, 2 * H:3 * H]
        b[0, 0 * GB + lane0:0 * GB + lane0 + H] += bih[0, 0:H]
        b[0, 1 * GB + lane0:1 * GB + lane0 + H] += bih[0, H:2 * H]
        b[0, 2 * GB + lane0:2 * GB + lane0 + H] += bih[0, 2 * H:3 * H]

    # hidden-side rows (lanes 0:3H of the LHS)
    put_hidden(0 * H, np.asarray(p_rnn['whh']), np.asarray(p_rnn['bhh']), 0 * H)
    put_hidden(1 * H, np.asarray(p_tau['whh']), np.asarray(p_tau['bhh']), 1 * H)
    put_hidden(2 * H, np.asarray(p_mom['whh']), np.asarray(p_mom['bhh']), 2 * H)
    # input-side rows (lanes GB:GB+LE+1 of the LHS)
    put_input(GB, LE, np.asarray(p_rnn['wih']), np.asarray(p_rnn['bih']), 0 * H)
    put_input(GB + LE, 1, np.asarray(p_tau['wih']), np.asarray(p_tau['bih']), 1 * H)
    put_input(GB + LE, 1, np.asarray(p_mom['wih']), np.asarray(p_mom['bih']), 2 * H)

    return jnp.asarray(W), jnp.asarray(b), GB, XB, K


def fused_gru_forward(x_loc_btd, x_tau_bt, params):
    """x_loc_btd: (B, T, LE) f32;  x_tau_bt: (B, T) f32.
       Returns (spatial_out, temporal_out, temporal_out_momentum), each (B, T, H)."""
    B, T, LE = x_loc_btd.shape
    H = params['rnn']['whh'].shape[0]
    W, bb, GB, XB, K = build_fused_gru_weights(
        params['rnn'], params['rnn_tau'], params['temporal_momentum'], LE, H)
    W = W.astype(jnp.bfloat16)        # bf16 MXU operands, f32 accumulate

    x_loc_tbd = jnp.transpose(x_loc_btd, (1, 0, 2)).astype(jnp.float32)
    x_tau_tb1 = jnp.transpose(x_tau_bt, (1, 0))[:, :, None].astype(jnp.float32)
    pieces = [x_loc_tbd, x_tau_tb1]
    if XB - LE - 1 > 0:
        pieces.append(jnp.zeros((T, B, XB - LE - 1), jnp.float32))
    x_comb = jnp.concatenate(pieces, axis=-1).astype(jnp.bfloat16)   # (T, B, XB)

    unroll = T if T <= 32 else 8      # guard full unroll for long sequences
    kernel = make_fused_gru_kernel(GB, T, unroll)

    out = pl.pallas_call(
        kernel,
        out_shape=jax.ShapeDtypeStruct((T, B, GB), jnp.float32),
        grid=(1,),
        in_specs=[
            pl.BlockSpec((T, B, XB), lambda i: (0, 0, 0)),
            pl.BlockSpec((K, 4 * GB), lambda i: (0, 0)),
            pl.BlockSpec((1, 4 * GB), lambda i: (0, 0)),
        ],
        out_specs=pl.BlockSpec((T, B, GB), lambda i: (0, 0, 0)),
        compiler_params=pltpu.CompilerParams(dimension_semantics=("arbitrary",)),
    )(x_comb, W, bb)

    out_bt = jnp.transpose(out, (1, 0, 2))        # (B, T, GB) — single transpose
    return out_bt[..., 0:H], out_bt[..., H:2 * H], out_bt[..., 2 * H:3 * H]


# --------------------------------------------------------------------------------------
# SwAV projection head kernel (loc_cont branch)
# --------------------------------------------------------------------------------------

def _proj_head_kernel(x_ref, w1_ref, b1_ref, g_ref, be_ref, w4_ref, b4_ref, pT_ref,
                      xnorm_ref, score_ref):
    """projection_head1 -> BatchNorm1d(train, batch stats) -> ReLU ->
       projection_head4 -> L2-normalize -> prototypes (no bias).
       Matmul operands bf16, accumulation + BN / activations f32."""
    xb = x_ref[...].astype(jnp.bfloat16)
    h = jnp.dot(xb, w1_ref[...], preferred_element_type=jnp.float32) + b1_ref[...]
    mu = jnp.mean(h, axis=0, keepdims=True)
    var = jnp.mean((h - mu) ** 2, axis=0, keepdims=True)
    h = (h - mu) * jax.lax.rsqrt(var + 1e-5)
    h = g_ref[...] * h + be_ref[...]
    h = jnp.maximum(h, 0.0)
    z = (jnp.dot(h.astype(jnp.bfloat16), w4_ref[...],
                 preferred_element_type=jnp.float32) + b4_ref[...])
    nrm = jnp.sqrt(jnp.sum(z * z, axis=1, keepdims=True))
    z = z / jnp.maximum(nrm, 1e-12)
    xnorm_ref[...] = z
    score_ref[...] = jnp.dot(z.astype(jnp.bfloat16), pT_ref[...],
                             preferred_element_type=jnp.float32)


# --------------------------------------------------------------------------------------
# Fused tail kernel: time_cont cosine + angular-margin CE, st_cont projections +
# cosine CE, and the TP head (linear0/1/2/3) + MAE — one pallas_call, shared loads.
# (Tail matmuls kept f32: MXU volume here is negligible and f32 keeps the cosine /
#  cross-entropy numerics tight.)
# --------------------------------------------------------------------------------------

def make_tail_kernel(theta, inv_temp, scale, shift):
    cos_t = float(np.cos(theta))
    sin_t = float(np.sin(theta))
    inv_temp = float(inv_temp)
    scale = float(scale)
    shift = float(shift)

    def kernel(sp_ref, tp_ref, tm_ref, ue_ref, nbrow_ref, y_ref,
               ws_ref, bs_ref, wtu_ref, wtt_ref, bt_ref,
               w0s_ref, w0t_ref, b0_ref,
               w1h_ref, w1u_ref, b1_ref,
               w2_ref, b2_ref, w3_ref, b3_ref,
               tloss_ref, sloss_ref, mae_ref, mt_ref):
        sp = sp_ref[...]
        tp = tp_ref[...]
        tm = tm_ref[...]
        ue = ue_ref[...]
        N = sp.shape[0]

        rows = lax.broadcasted_iota(jnp.int32, (N, N), 0)
        cols = lax.broadcasted_iota(jnp.int32, (N, N), 1)
        eye = (rows == cols).astype(jnp.float32)

        def ce_loss(logits, picked):
            m = jnp.max(logits, axis=1, keepdims=True)
            lse = jnp.log(jnp.sum(jnp.exp(logits - m), axis=1, keepdims=True)) + m
            return jnp.mean(lse - picked, axis=0, keepdims=True)     # (1,1)

        # ---- time_cont: cosine(momentum, temporal) with angular margin on diag ----
        dots = lax.dot_general(tm, tp, (((1,), (1,)), ((), ())),
                               preferred_element_type=jnp.float32)   # (N,N)
        na = jnp.sqrt(jnp.sum(tm * tm, axis=1, keepdims=True))       # (N,1)
        cos_time = dots / jnp.maximum(na * nbrow_ref[...], 1e-8)     # VPU broadcast denom
        diag = jnp.sum(cos_time * eye, axis=1, keepdims=True)        # (N,1)
        dc = jnp.clip(diag, -1.0 + 1e-7, 1.0 - 1e-7)
        # cos(arccos(x) + theta) = x cos(theta) - sqrt(1-x^2) sin(theta)
        diag_adj = dc * cos_t - jnp.sqrt(1.0 - dc * dc) * sin_t
        logits_t = (cos_time * (1.0 - eye) + diag_adj * eye) * inv_temp
        tloss_ref[...] = ce_loss(logits_t, diag_adj * inv_temp)

        # ---- st_cont: s2st(spatial) vs t2st([user_emb, temporal]) cosine CE ----
        a_st = (jnp.dot(sp, ws_ref[...], preferred_element_type=jnp.float32)
                + bs_ref[...])
        b_st = (jnp.dot(ue, wtu_ref[...], preferred_element_type=jnp.float32)
                + jnp.dot(tp, wtt_ref[...], preferred_element_type=jnp.float32)
                + bt_ref[...])
        dots_st = lax.dot_general(a_st, b_st, (((1,), (1,)), ((), ())),
                                  preferred_element_type=jnp.float32)
        na_st = jnp.sqrt(jnp.sum(a_st * a_st, axis=1, keepdims=True))
        nb_st = jnp.sqrt(jnp.sum(b_st * b_st, axis=1, keepdims=True))
        denom = lax.dot_general(na_st, nb_st, (((1,), (1,)), ((), ())),
                                preferred_element_type=jnp.float32)
        logits_st = (dots_st / jnp.maximum(denom, 1e-8)) * inv_temp
        picked_st = jnp.sum(logits_st * eye, axis=1, keepdims=True)
        sloss_ref[...] = ce_loss(logits_st, picked_st)

        # ---- TP head: linear0(cat(sp,tp)) ++ user_emb -> l1 -> sig -> l2 -> sig -> l3
        f0 = (jnp.dot(sp, w0s_ref[...], preferred_element_type=jnp.float32)
              + jnp.dot(tp, w0t_ref[...], preferred_element_type=jnp.float32)
              + b0_ref[...])
        h1 = jax.nn.sigmoid(
            jnp.dot(f0, w1h_ref[...], preferred_element_type=jnp.float32)
            + jnp.dot(ue, w1u_ref[...], preferred_element_type=jnp.float32)
            + b1_ref[...])
        h2 = jax.nn.sigmoid(
            jnp.dot(h1, w2_ref[...], preferred_element_type=jnp.float32)
            + b2_ref[...])
        mt = (jnp.dot(h2, w3_ref[...], preferred_element_type=jnp.float32)
              + b3_ref[...])                                          # (N,1) raw
        mae_ref[...] = jnp.mean(jnp.abs(mt - y_ref[...]), axis=0, keepdims=True)
        mt_ref[...] = jnp.exp(scale * mt + shift)

    return kernel


# --------------------------------------------------------------------------------------
# Single-block pallas_call helper (whole arrays in VMEM, grid=(1,))
# --------------------------------------------------------------------------------------

def _full_spec(shape):
    n = len(shape)
    return pl.BlockSpec(tuple(shape), lambda i, _n=n: (0,) * _n)


def _single_call(kernel, out_shapes, *args):
    multi = isinstance(out_shapes, (list, tuple)) and isinstance(out_shapes[0], (list, tuple))
    outs = list(out_shapes) if multi else [out_shapes]
    out_shape = [jax.ShapeDtypeStruct(tuple(s), jnp.float32) for s in outs]
    out_specs = [_full_spec(tuple(s)) for s in outs]
    return pl.pallas_call(
        kernel,
        out_shape=out_shape if multi else out_shape[0],
        grid=(1,),
        in_specs=[_full_spec(a.shape) for a in args],
        out_specs=out_specs if multi else out_specs[0],
    )(*args)


# --------------------------------------------------------------------------------------
# Small JAX glue (tiny reductions, kept outside Pallas)
# --------------------------------------------------------------------------------------

def sinkhorn(out, epsilon, world_size, bs):
    # TODO(synk): Sinkhorn is a tiny (k x bs) iterative reduction; kept in plain JAX.
    q = jnp.exp(out / epsilon).T
    Q = q / jnp.sum(q)
    K_, M_ = Q.shape
    r = jnp.ones((K_,), jnp.float32) / K_
    c = jnp.ones((M_,), jnp.float32) / (world_size * M_)
    curr_sum = jnp.sum(Q, axis=1)
    for _ in range(3):
        u = curr_sum
        Q = Q * (r / u)[:, None]
        Q = Q * (c / jnp.sum(Q, axis=0))[None, :]
        curr_sum = jnp.sum(Q, axis=1)
    q = (Q / jnp.sum(Q, axis=0, keepdims=True)).T
    return q[-bs:]


# --------------------------------------------------------------------------------------
# Parameter initialization (deterministic, synthetic)
# --------------------------------------------------------------------------------------

def init_params(key, cfg):
    H = cfg['hidden_size']
    LE = cfg['loc_emb_size']
    UE = cfg['uid_emb_size']
    K = cfg['k']
    keys = list(jax.random.split(key, 40))
    _it = iter(keys)

    def nxt():
        return next(_it)

    def glorot(shape):
        lim = float(np.sqrt(6.0 / (shape[0] + shape[1])))
        return jax.random.uniform(nxt(), shape, jnp.float32, -lim, lim)

    def gru_params(in_size):
        return dict(wih=glorot((in_size, 3 * H)),
                    whh=glorot((H, 3 * H)),
                    bih=jnp.zeros((1, 3 * H), jnp.float32),
                    bhh=jnp.zeros((1, 3 * H), jnp.float32))

    F = H + UE
    p = {
        'emb_loc': jax.random.normal(nxt(), (cfg['loc_num'], LE), jnp.float32) * 0.1,
        'emb_uid': jax.random.normal(nxt(), (cfg['uid_num'], UE), jnp.float32) * 0.1,
        'rnn': gru_params(LE),
        'rnn_tau': gru_params(1),
        'temporal_momentum': gru_params(1),
        'linear0': dict(w=glorot((2 * H, H)), b=jnp.zeros((1, H), jnp.float32)),
        'linear1': dict(w=glorot((F, F // 4)), b=jnp.zeros((1, F // 4), jnp.float32)),
        'linear2': dict(w=glorot((F // 4, F // 16)), b=jnp.zeros((1, F // 16), jnp.float32)),
        'linear3': dict(w=glorot((F // 16, 1)), b=jnp.zeros((1, 1), jnp.float32)),
        's2st': dict(w=glorot((H, H)), b=jnp.zeros((1, H), jnp.float32)),
        't2st': dict(w=glorot((H + cfg['user_emb_size'], H)), b=jnp.zeros((1, H), jnp.float32)),
        'proj1': dict(w=glorot((H, 2048)), b=jnp.zeros((1, 2048), jnp.float32)),
        'bn': dict(gamma=jnp.ones((1, 2048), jnp.float32), beta=jnp.zeros((1, 2048), jnp.float32)),
        'proj4': dict(w=glorot((2048, H)), b=jnp.zeros((1, H), jnp.float32)),
        'prototypes_T': glorot((H, K)),   # = prototypes.weight.T
    }
    return p


# --------------------------------------------------------------------------------------
# Forward pass (mirrors STCCR_TP.forward with downstream='TP')
# --------------------------------------------------------------------------------------

def stccr_tp_forward(params, cfg, inp, cont_conf, mode='train', queue=None):
    X_length = np.asarray(inp['X_length'], np.int64)
    X_tau = np.asarray(inp['X_tau'], np.float32)
    Y_tau = np.asarray(inp['Y_tau'], np.float32)
    X_location = np.asarray(inp['X_location'], np.int64)
    Y_location = np.asarray(inp['Y_location'], np.int64)
    X_user = np.asarray(inp['X_user'], np.int64)

    H = cfg['hidden_size']
    history_len = X_length - 1
    B = X_location.shape[0]
    cur_len = np.array([int(np.count_nonzero(Y_tau[i])) for i in range(B)])

    # build all_tau / all_loc / all_len (host glue, concrete lengths)
    all_tau_list, all_loc_list, all_len = [], [], []
    for i in range(B):
        t = np.concatenate([X_tau[i, :history_len[i] - cur_len[i]], Y_tau[i]])
        l = np.concatenate([X_location[i, :history_len[i] - cur_len[i] + 1], Y_location[i]])
        all_tau_list.append(t)
        all_loc_list.append(l)
        nz_t, nz_l = np.nonzero(t)[0], np.nonzero(l)[0]
        if len(nz_t) > 0 and len(nz_l) > 0:
            L = max(nz_t[-1] + 1, nz_l[-1] + 1)
        elif len(nz_t) > 0:
            L = nz_t[-1] + 1
        elif len(nz_l) > 0:
            L = nz_l[-1] + 1
        else:
            L = (history_len - cur_len)[i]
        all_len.append(int(L))
    all_len = np.array(all_len)

    # pad both modalities to the same T (GRU is causal; padded tail never gathered)
    T = max(max(len(t) for t in all_tau_list), max(len(l) for l in all_loc_list))
    all_tau = np.zeros((B, T), np.float32)
    all_loc = np.zeros((B, T), np.int32)
    for i in range(B):
        all_tau[i, :len(all_tau_list[i])] = all_tau_list[i]
        all_loc[i, :len(all_loc_list[i])] = all_loc_list[i]

    # embeddings + fused triple GRU (single Pallas kernel, internal time loop)
    all_loc_emb = jnp.take(params['emb_loc'], jnp.asarray(all_loc), axis=0)   # (B, T, LE)
    spatial_out, temporal_out, temporal_out_m = fused_gru_forward(
        all_loc_emb, jnp.asarray(all_tau), params)                            # (B, T, H) x3
    uid_emb = jnp.take(params['emb_uid'], jnp.asarray(X_user), axis=0)        # (B, UE)

    # window gathering (identical to the first / conditional-cat logic)
    sp_chunks, tp_chunks, tm_chunks, usr_chunks, truth_chunks = [], [], [], [], []
    for i in range(B):
        s = int(all_len[i] - cur_len[i])
        e = int(all_len[i])
        if s - 2 >= 0:
            sp_chunks.append(spatial_out[i, s - 1:e - 1, :])
            tp_chunks.append(temporal_out[i, s - 2:e - 2, :])
            tm_chunks.append(temporal_out_m[i, s - 2:e - 2, :])
            usr_chunks.append(jnp.tile(uid_emb[i][None, :], (int(cur_len[i]), 1)))
            truth_chunks.append(Y_tau[i, :int(cur_len[i])])
    final_spatial_out = jnp.concatenate(sp_chunks, axis=0)
    final_temporal_out = jnp.concatenate(tp_chunks, axis=0)
    final_temporal_out_m = jnp.concatenate(tm_chunks, axis=0)
    all_user_emb = jnp.concatenate(usr_chunks, axis=0)
    truth_Y_tau_np = np.concatenate(truth_chunks, axis=0).astype(np.float32)
    truth_Y_tau = jnp.asarray(truth_Y_tau_np)

    N = final_spatial_out.shape[0]
    UE = all_user_emb.shape[1]

    # ---- fused tail kernel (time_cont CE + st_cont CE + TP head + MAE) ----
    y = (jnp.log(truth_Y_tau + 0.01)[:, None] - cfg['shift_init']) / cfg['scale_init']
    nbrow = jnp.sqrt(jnp.sum(final_temporal_out * final_temporal_out, axis=1))[None, :]
    tail_kernel = make_tail_kernel(cfg['theta'], 1.0 / cfg['temperature'],
                                   float(cfg['scale_init']), float(cfg['shift_init']))
    w0, b0 = params['linear0']['w'], params['linear0']['b']
    w1, b1 = params['linear1']['w'], params['linear1']['b']
    tw = params['t2st']['w']
    time_loss_m, st_loss_m, mae_m, mean_time = _single_call(
        tail_kernel,
        [(1, 1), (1, 1), (1, 1), (N, 1)],
        final_spatial_out, final_temporal_out, final_temporal_out_m, all_user_emb,
        nbrow, y,
        params['s2st']['w'], params['s2st']['b'],
        tw[:UE], tw[UE:], params['t2st']['b'],       # t2st concat order: [user_emb, temporal]
        w0[:H], w0[H:], b0,
        w1[:H], w1[H:], b1,
        params['linear2']['w'], params['linear2']['b'],
        params['linear3']['w'], params['linear3']['b'])
    loss = mae_m[0, 0]

    cont_loss_ls = [0, 0, 0, 0]
    if mode == 'train':
        loc_cont, time_cont, user_cont, st_cont = cont_conf
        if loc_cont == 1:
            # Dropout(p=0.0) -> the two crops are identical rows: run the 2048-wide
            # projection head ONCE on N rows (BN batch stats are identical) and tile.
            emb_N, scores_N = _single_call(
                _proj_head_kernel,
                [(N, H), (N, cfg['k'])],
                final_spatial_out,
                params['proj1']['w'].astype(jnp.bfloat16), params['proj1']['b'],
                params['bn']['gamma'], params['bn']['beta'],
                params['proj4']['w'].astype(jnp.bfloat16), params['proj4']['b'],
                params['prototypes_T'].astype(jnp.bfloat16))
            _ = jax.lax.stop_gradient(emb_N)   # used only for the (absent) queue
            scores = jnp.concatenate([scores_N, scores_N], axis=0)
            bs = N
            n_crops = int(np.sum(cfg['nmb_crops']))
            loc_loss = 0.0
            for crop_id in cfg['crops_for_assign']:
                out = scores[bs * crop_id:bs * (crop_id + 1)]
                q = sinkhorn(out, cfg['epsilon'], cfg['world_size'], bs)
                subloss = 0.0
                for v in np.delete(np.arange(n_crops), crop_id):
                    v = int(v)
                    p_soft = jax.nn.softmax(scores[bs * v:bs * (v + 1)] / cfg['temperature'], axis=1)
                    subloss = subloss - jnp.mean(jnp.sum(q * jnp.log(p_soft), axis=1))
                loc_loss = loc_loss + subloss / (n_crops - 1)
            loc_loss = loc_loss / len(cfg['crops_for_assign'])
            cont_loss_ls[0] = loc_loss
        if time_cont == 1:
            cont_loss_ls[1] = time_loss_m[0, 0]
        if user_cont == 1:
            pass
        if st_cont == 1:
            cont_loss_ls[3] = st_loss_m[0, 0]

    if mode == 'train' and sum(cont_conf) != 0:
        return loss, mean_time, cont_loss_ls, queue, truth_Y_tau_np
    else:
        return loss, mean_time, queue, truth_Y_tau_np


# --------------------------------------------------------------------------------------
# Main
# --------------------------------------------------------------------------------------

if __name__ == "__main__":
    cfg = dict(
        hidden_size=32, loc_emb_size=32, uid_emb_size=16, user_emb_size=16,
        loc_num=50, uid_num=10, tim_num=24, tim_emb_size=8,
        k=16, crops_for_assign=[0, 1], nmb_crops=[2], world_size=1,
        temperature=0.1, epsilon=0.05, theta=0.1, dropout=0.0,
        shift_init=jnp.float32(0.0), scale_init=jnp.float32(1.0),
    )

    key = jax.random.PRNGKey(0)
    kp, k0, k1, k2, k3, k4 = jax.random.split(key, 6)
    params = init_params(kp, cfg)

    B, Tx, Ty = 4, 12, 3
    inp = dict(
        X_tau=jax.random.uniform(k0, (B, Tx), jnp.float32, 0.1, 2.0),
        Y_tau=jax.random.uniform(k1, (B, Ty), jnp.float32, 0.1, 2.0),
        X_location=jax.random.randint(k2, (B, Tx), 1, cfg['loc_num']),
        Y_location=jax.random.randint(k3, (B, Ty), 1, cfg['loc_num']),
        X_length=jnp.array([9, 10, 8, 11], jnp.int32),
        X_user=jax.random.randint(k4, (B,), 0, cfg['uid_num']),
    )
    cont_conf = [1, 1, 0, 1]

    loss, mean_time, cont_loss_ls, queue, truth_np = stccr_tp_forward(
        params, cfg, inp, cont_conf, mode='train', queue=None)

    to_block = [loss, mean_time] + [c for c in cont_loss_ls if isinstance(c, jax.Array)]
    jax.block_until_ready(to_block)
    print("KERNEL_OK")
</pallas_src>

<mosaic_0001>
module attributes {stable_mosaic.version = 11 : i64} {
  func.func @kernel(%arg0: i32, %arg1: memref<11x4x128xbf16, #tpu.memory_space<vmem>>, %arg2: memref<256x512xbf16, #tpu.memory_space<vmem>>, %arg3: memref<1x512xf32, #tpu.memory_space<vmem>>, %arg4: memref<11x4x128xf32, #tpu.memory_space<vmem>>) attributes {dimension_semantics = [#tpu.dimension_semantics<arbitrary>], iteration_bounds = array<i64: 1>, scalar_prefetch = 0 : i64, scratch_operands = 0 : i64, tpu.core_type = #tpu.core_type<tc>, window_params = [{pipeline_mode = #tpu.pipeline_mode<synchronous>, transform_indices = @transform_0, window_bounds = array<i64: 11, 4, 128>}, {pipeline_mode = #tpu.pipeline_mode<synchronous>, transform_indices = @transform_1, window_bounds = array<i64: 256, 512>}, {pipeline_mode = #tpu.pipeline_mode<synchronous>, transform_indices = @transform_2, window_bounds = array<i64: 1, 512>}, {pipeline_mode = #tpu.pipeline_mode<synchronous>, transform_indices = @transform_3, window_bounds = array<i64: 11, 4, 128>}]} {
    %cst = arith.constant 0.000000e+00 : f32
    %0 = vector.broadcast %cst : f32 to vector<4x128xf32>
    %c0_i32 = arith.constant 0 : i32
    %1 = arith.truncf %0 : vector<4x128xf32> to vector<4x128xbf16>
    %2 = arith.index_cast %c0_i32 : i32 to index
    %c0 = arith.constant 0 : index
    %c0_0 = arith.constant 0 : index
    %3 = vector.load %arg1[%2, %c0, %c0_0] : memref<11x4x128xbf16, #tpu.memory_space<vmem>>, vector<1x4x128xbf16>
    %4 = vector.shape_cast %3 : vector<1x4x128xbf16> to vector<4x128xbf16>
    %5 = tpu.concatenate %1, %4 in 1 : vector<4x128xbf16>, vector<4x128xbf16> -> vector<4x256xbf16>
    %c0_1 = arith.constant 0 : index
    %c0_2 = arith.constant 0 : index
    %6 = vector.load %arg2[%c0_1, %c0_2] : memref<256x512xbf16, #tpu.memory_space<vmem>>, vector<256x512xbf16>
    %cst_3 = arith.constant dense<0.000000e+00> : vector<4x512xf32>
    %7 = tpu.matmul %5, %6, %cst_3 {dimension_numbers = #tpu.dot_dimension_numbers<[1], [0], [0], [1], [0, 0, 1, 1], [], []>} : vector<4x256xbf16>, vector<256x512xbf16>, vector<4x512xf32> -> vector<4x512xf32>
    %c0_4 = arith.constant 0 : index
    %c0_5 = arith.constant 0 : index
    %8 = vector.load %arg3[%c0_4, %c0_5] : memref<1x512xf32, #tpu.memory_space<vmem>>, vector<1x512xf32>
    %9 = vector.broadcast %8 : vector<1x512xf32> to vector<4x512xf32>
    %10 = arith.addf %7, %9 : vector<4x512xf32>
    %11 = vector.extract_strided_slice %10 {offsets = [0, 0], sizes = [4, 128], strides = [1, 1]} : vector<4x512xf32> to vector<4x128xf32>
    %12 = arith.negf %11 : vector<4x128xf32>
    %13 = math.exp %12 : vector<4x128xf32>
    %cst_6 = arith.constant 1.000000e+00 : f32
    %14 = vector.broadcast %cst_6 : f32 to vector<4x128xf32>
    %15 = arith.addf %14, %13 : vector<4x128xf32>
    %16 = arith.divf %14, %15 : vector<4x128xf32>
    %17 = vector.extract_strided_slice %10 {offsets = [0, 128], sizes = [4, 128], strides = [1, 1]} : vector<4x512xf32> to vector<4x128xf32>
    %18 = arith.negf %17 : vector<4x128xf32>
    %19 = math.exp %18 : vector<4x128xf32>
    %cst_7 = arith.constant 1.000000e+00 : f32
    %20 = vector.broadcast %cst_7 : f32 to vector<4x128xf32>
    %21 = arith.addf %20, %19 : vector<4x128xf32>
    %22 = arith.divf %20, %21 : vector<4x128xf32>
    %23 = vector.extract_strided_slice %10 {offsets = [0, 256], sizes = [4, 128], strides = [1, 1]} : vector<4x512xf32> to vector<4x128xf32>
    %24 = vector.extract_strided_slice %10 {offsets = [0, 384], sizes = [4, 128], strides = [1, 1]} : vector<4x512xf32> to vector<4x128xf32>
    %25 = arith.mulf %16, %24 : vector<4x128xf32>
    %26 = arith.addf %23, %25 : vector<4x128xf32>
    %27 = math.tanh %26 : vector<4x128xf32>
    %cst_8 = arith.constant 1.000000e+00 : f32
    %28 = vector.broadcast %cst_8 : f32 to vector<4x128xf32>
    %29 = arith.subf %28, %22 : vector<4x128xf32>
    %30 = arith.mulf %29, %27 : vector<4x128xf32>
    %31 = arith.mulf %22, %0 : vector<4x128xf32>
    %32 = arith.addf %30, %31 : vector<4x128xf32>
    %33 = arith.index_cast %c0_i32 : i32 to index
    %c0_9 = arith.constant 0 : index
    %c0_10 = arith.constant 0 : index
    %34 = vector.load %arg4[%33, %c0_9, %c0_10] : memref<11x4x128xf32, #tpu.memory_space<vmem>>, vector<1x4x128xf32>
    %35 = vector.shape_cast %34 : vector<1x4x128xf32> to vector<4x128xf32>
    %36 = vector.shape_cast %32 : vector<4x128xf32> to vector<1x4x128xf32>
    tpu.vector_store %arg4[%33, %c0_9, %c0_10], %36 {strides = array<i32>} : memref<11x4x128xf32, #tpu.memory_space<vmem>>, vector<1x4x128xf32>,
    %c1_i32 = arith.constant 1 : i32
    %37 = arith.truncf %32 : vector<4x128xf32> to vector<4x128xbf16>
    %38 = arith.index_cast %c1_i32 : i32 to index
    %c0_11 = arith.constant 0 : index
    %c0_12 = arith.constant 0 : index
    %39 = vector.load %arg1[%38, %c0_11, %c0_12] : memref<11x4x128xbf16, #tpu.memory_space<vmem>>, vector<1x4x128xbf16>
    %40 = vector.shape_cast %39 : vector<1x4x128xbf16> to vector<4x128xbf16>
    %41 = tpu.concatenate %37, %40 in 1 : vector<4x128xbf16>, vector<4x128xbf16> -> vector<4x256xbf16>
    %c0_13 = arith.constant 0 : index
    %c0_14 = arith.constant 0 : index
    %42 = vector.load %arg2[%c0_13, %c0_14] : memref<256x512xbf16, #tpu.memory_space<vmem>>, vector<256x512xbf16>
    %cst_15 = arith.constant dense<0.000000e+00> : vector<4x512xf32>
    %43 = tpu.matmul %41, %42, %cst_15 {dimension_numbers = #tpu.dot_dimension_numbers<[1], [0], [0], [1], [0, 0, 1, 1], [], []>} : vector<4x256xbf16>, vector<256x512xbf16>, vector<4x512xf32> -> vector<4x512xf32>
    %c0_16 = arith.constant 0 : index
    %c0_17 = arith.constant 0 : index
    %44 = vector.load %arg3[%c0_16, %c0_17] : memref<1x512xf32, #tpu.memory_space<vmem>>, vector<1x512xf32>
    %45 = vector.broadcast %44 : vector<1x512xf32> to vector<4x512xf32>
    %46 = arith.addf %43, %45 : vector<4x512xf32>
    %47 = vector.extract_strided_slice %46 {offsets = [0, 0], sizes = [4, 128], strides = [1, 1]} : vector<4x512xf32> to vector<4x128xf32>
    %48 = arith.negf %47 : vector<4x128xf32>
    %49 = math.exp %48 : vector<4x128xf32>
    %cst_18 = arith.constant 1.000000e+00 : f32
    %50 = vector.broadcast %cst_18 : f32 to vector<4x128xf32>
    %51 = arith.addf %50, %49 : vector<4x128xf32>
    %52 = arith.divf %50, %51 : vector<4x128xf32>
    %53 = vector.extract_strided_slice %46 {offsets = [0, 128], sizes = [4, 128], strides = [1, 1]} : vector<4x512xf32> to vector<4x128xf32>
    %54 = arith.negf %53 : vector<4x128xf32>
    %55 = math.exp %54 : vector<4x128xf32>
    %cst_19 = arith.constant 1.000000e+00 : f32
    %56 = vector.broadcast %cst_19 : f32 to vector<4x128xf32>
    %57 = arith.addf %56, %55 : vector<4x128xf32>
    %58 = arith.divf %56, %57 : vector<4x128xf32>
    %59 = vector.extract_strided_slice %46 {offsets = [0, 256], sizes = [4, 128], strides = [1, 1]} : vector<4x512xf32> to vector<4x128xf32>
    %60 = vector.extract_strided_slice %46 {offsets = [0, 384], sizes = [4, 128], strides = [1, 1]} : vector<4x512xf32> to vector<4x128xf32>
    %61 = arith.mulf %52, %60 : vector<4x128xf32>
    %62 = arith.addf %59, %61 : vector<4x128xf32>
    %63 = math.tanh %62 : vector<4x128xf32>
    %cst_20 = arith.constant 1.000000e+00 : f32
    %64 = vector.broadcast %cst_20 : f32 to vector<4x128xf32>
    %65 = arith.subf %64, %58 : vector<4x128xf32>
    %66 = arith.mulf %65, %63 : vector<4x128xf32>
    %67 = arith.mulf %58, %32 : vector<4x128xf32>
    %68 = arith.addf %66, %67 : vector<4x128xf32>
    %69 = arith.index_cast %c1_i32 : i32 to index
    %c0_21 = arith.constant 0 : index
    %c0_22 = arith.constant 0 : index
    %70 = vector.load %arg4[%69, %c0_21, %c0_22] : memref<11x4x128xf32, #tpu.memory_space<vmem>>, vector<1x4x128xf32>
    %71 = vector.shape_cast %70 : vector<1x4x128xf32> to vector<4x128xf32>
    %72 = vector.shape_cast %68 : vector<4x128xf32> to vector<1x4x128xf32>
    tpu.vector_store %arg4[%69, %c0_21, %c0_22], %72 {strides = array<i32>} : memref<11x4x128xf32, #tpu.memory_space<vmem>>, vector<1x4x128xf32>,
    %c2_i32 = arith.constant 2 : i32
    %73 = arith.truncf %68 : vector<4x128xf32> to vector<4x128xbf16>
    %74 = arith.index_cast %c2_i32 : i32 to index
    %c0_23 = arith.constant 0 : index
    %c0_24 = arith.constant 0 : index
    %75 = vector.load %arg1[%74, %c0_23, %c0_24] : memref<11x4x128xbf16, #tpu.memory_space<vmem>>, vector<1x4x128xbf16>
    %76 = vector.shape_cast %75 : vector<1x4x128xbf16> to vector<4x128xbf16>
    %77 = tpu.concatenate %73, %76 in 1 : vector<4x128xbf16>, vector<4x128xbf16> -> vector<4x256xbf16>
    %c0_25 = arith.constant 0 : index
    %c0_26 = arith.constant 0 : index
    %78 = vector.load %arg2[%c0_25, %c0_26] : memref<256x512xbf16, #tpu.memory_space<vmem>>, vector<256x512xbf16>
    %cst_27 = arith.constant dense<0.000000e+00> : vector<4x512xf32>
    %79 = tpu.matmul %77, %78, %cst_27 {dimension_numbers = #tpu.dot_dimension_numbers<[1], [0], [0], [1], [0, 0, 1, 1], [], []>} : vector<4x256xbf16>, vector<256x512xbf16>, vector<4x512xf32> -> vector<4x512xf32>
    %c0_28 = arith.constant 0 : index
    %c0_29 = arith.constant 0 : index
    %80 = vector.load %arg3[%c0_28, %c0_29] : memref<1x512xf32, #tpu.memory_space<vmem>>, vector<1x512xf32>
    %81 = vector.broadcast %80 : vector<1x512xf32> to vector<4x512xf32>
    %82 = arith.addf %79, %81 : vector<4x512xf32>
    %83 = vector.extract_strided_slice %82 {offsets = [0, 0], sizes = [4, 128], strides = [1, 1]} : vector<4x512xf32> to vector<4x128xf32>
    %84 = arith.negf %83 : vector<4x128xf32>
    %85 = math.exp %84 : vector<4x128xf32>
    %cst_30 = arith.constant 1.000000e+00 : f32
    %86 = vector.broadcast %cst_30 : f32 to vector<4x128xf32>
    %87 = arith.addf %86, %85 : vector<4x128xf32>
    %88 = arith.divf %86, %87 : vector<4x128xf32>
    %89 = vector.extract_strided_slice %82 {offsets = [0, 128], sizes = [4, 128], strides = [1, 1]} : vector<4x512xf32> to vector<4x128xf32>
    %90 = arith.negf %89 : vector<4x128xf32>
    %91 = math.exp %90 : vector<4x128xf32>
    %cst_31 = arith.constant 1.000000e+00 : f32
    %92 = vector.broadcast %cst_31 : f32 to vector<4x128xf32>
    %93 = arith.addf %92, %91 : vector<4x128xf32>
    %94 = arith.divf %92, %93 : vector<4x128xf32>
    %95 = vector.extract_strided_slice %82 {offsets = [0, 256], sizes = [4, 128], strides = [1, 1]} : vector<4x512xf32> to vector<4x128xf32>
    %96 = vector.extract_strided_slice %82 {offsets = [0, 384], sizes = [4, 128], strides = [1, 1]} : vector<4x512xf32> to vector<4x128xf32>
    %97 = arith.mulf %88, %96 : vector<4x128xf32>
    %98 = arith.addf %95, %97 : vector<4x128xf32>
    %99 = math.tanh %98 : vector<4x128xf32>
    %cst_32 = arith.constant 1.000000e+00 : f32
    %100 = vector.broadcast %cst_32 : f32 to vector<4x128xf32>
    %101 = arith.subf %100, %94 : vector<4x128xf32>
    %102 = arith.mulf %101, %99 : vector<4x128xf32>
    %103 = arith.mulf %94, %68 : vector<4x128xf32>
    %104 = arith.addf %102, %103 : vector<4x128xf32>
    %105 = arith.index_cast %c2_i32 : i32 to index
    %c0_33 = arith.constant 0 : index
    %c0_34 = arith.constant 0 : index
    %106 = vector.load %arg4[%105, %c0_33, %c0_34] : memref<11x4x128xf32, #tpu.memory_space<vmem>>, vector<1x4x128xf32>
    %107 = vector.shape_cast %106 : vector<1x4x128xf32> to vector<4x128xf32>
    %108 = vector.shape_cast %104 : vector<4x128xf32> to vector<1x4x128xf32>
    tpu.vector_store %arg4[%105, %c0_33, %c0_34], %108 {strides = array<i32>} : memref<11x4x128xf32, #tpu.memory_space<vmem>>, vector<1x4x128xf32>,
    %c3_i32 = arith.constant 3 : i32
    %109 = arith.truncf %104 : vector<4x128xf32> to vector<4x128xbf16>
    %110 = arith.index_cast %c3_i32 : i32 to index
    %c0_35 = arith.constant 0 : index
    %c0_36 = arith.constant 0 : index
    %111 = vector.load %arg1[%110, %c0_35, %c0_36] : memref<11x4x128xbf16, #tpu.memory_space<vmem>>, vector<1x4x128xbf16>
    %112 = vector.shape_cast %111 : vector<1x4x128xbf16> to vector<4x128xbf16>
    %113 = tpu.concatenate %109, %112 in 1 : vector<4x128xbf16>, vector<4x128xbf16> -> vector<4x256xbf16>
    %c0_37 = arith.constant 0 : index
    %c0_38 = arith.constant 0 : index
    %114 = vector.load %arg2[%c0_37, %c0_38] : memref<256x512xbf16, #tpu.memory_space<vmem>>, vector<256x512xbf16>
    %cst_39 = arith.constant dense<0.000000e+00> : vector<4x512xf32>
    %115 = tpu.matmul %113, %114, %cst_39 {dimension_numbers = #tpu.dot_dimension_numbers<[1], [0], [0], [1], [0, 0, 1, 1], [], []>} : vector<4x256xbf16>, vector<256x512xbf16>, vector<4x512xf32> -> vector<4x512xf32>
    %c0_40 = arith.constant 0 : index
    %c0_41 = arith.constant 0 : index
    %116 = vector.load %arg3[%c0_40, %c0_41] : memref<1x512xf32, #tpu.memory_space<vmem>>, vector<1x512xf32>
    %117 = vector.broadcast %116 : vector<1x512xf32> to vector<4x512xf32>
    %118 = arith.addf %115, %117 : vector<4x512xf32>
    %119 = vector.extract_strided_slice %118 {offsets = [0, 0], sizes = [4, 128], strides = [1, 1]} : vector<4x512xf32> to vector<4x128xf32>
    %120 = arith.negf %119 : vector<4x128xf32>
    %121 = math.exp %120 : vector<4x128xf32>
    %cst_42 = arith.constant 1.000000e+00 : f32
    %122 = vector.broadcast %cst_42 : f32 to vector<4x128xf32>
    %123 = arith.addf %122, %121 : vector<4x128xf32>
    %124 = arith.divf %122, %123 : vector<4x128xf32>
    %125 = vector.extract_strided_slice %118 {offsets = [0, 128], sizes = [4, 128], strides = [1, 1]} : vector<4x512xf32> to vector<4x128xf32>
    %126 = arith.negf %125 : vector<4x128xf32>
    %127 = math.exp %126 : vector<4x128xf32>
    %cst_43 = arith.constant 1.000000e+00 : f32
    %128 = vector.broadcast %cst_43 : f32 to vector<4x128xf32>
    %129 = arith.addf %128, %127 : vector<4x128xf32>
    %130 = arith.divf %128, %129 : vector<4x128xf32>
    %131 = vector.extract_strided_slice %118 {offsets = [0, 256], sizes = [4, 128], strides = [1, 1]} : vector<4x512xf32> to vector<4x128xf32>
    %132 = vector.extract_strided_slice %118 {offsets = [0, 384], sizes = [4, 128], strides = [1, 1]} : vector<4x512xf32> to vector<4x128xf32>
    %133 = arith.mulf %124, %132 : vector<4x128xf32>
    %134 = arith.addf %131, %133 : vector<4x128xf32>
    %135 = math.tanh %134 : vector<4x128xf32>
    %cst_44 = arith.constant 1.000000e+00 : f32
    %136 = vector.broadcast %cst_44 : f32 to vector<4x128xf32>
    %137 = arith.subf %136, %130 : vector<4x128xf32>
    %138 = arith.mulf %137, %135 : vector<4x128xf32>
    %139 = arith.mulf %130, %104 : vector<4x128xf32>
    %140 = arith.addf %138, %139 : vector<4x128xf32>
    %141 = arith.index_cast %c3_i32 : i32 to index
    %c0_45 = arith.constant 0 : index
    %c0_46 = arith.constant 0 : index
    %142 = vector.load %arg4[%141, %c0_45, %c0_46] : memref<11x4x128xf32, #tpu.memory_space<vmem>>, vector<1x4x128xf32>
    %143 = vector.shape_cast %142 : vector<1x4x128xf32> to vector<4x128xf32>
    %144 = vector.shape_cast %140 : vector<4x128xf32> to vector<1x4x128xf32>
    tpu.vector_store %arg4[%141, %c0_45, %c0_46], %144 {strides = array<i32>} : memref<11x4x128xf32, #tpu.memory_space<vmem>>, vector<1x4x128xf32>,
    %c4_i32 = arith.constant 4 : i32
    %145 = arith.truncf %140 : vector<4x128xf32> to vector<4x128xbf16>
    %146 = arith.index_cast %c4_i32 : i32 to index
    %c0_47 = arith.constant 0 : index
    %c0_48 = arith.constant 0 : index
    %147 = vector.load %arg1[%146, %c0_47, %c0_48] : memref<11x4x128xbf16, #tpu.memory_space<vmem>>, vector<1x4x128xbf16>
    %148 = vector.shape_cast %147 : vector<1x4x128xbf16> to vector<4x128xbf16>
    %149 = tpu.concatenate %145, %148 in 1 : vector<4x128xbf16>, vector<4x128xbf16> -> vector<4x256xbf16>
    %c0_49 = arith.constant 0 : index
    %c0_50 = arith.constant 0 : index
    %150 = vector.load %arg2[%c0_49, %c0_50] : memref<256x512xbf16, #tpu.memory_space<vmem>>, vector<256x512xbf16>
    %cst_51 = arith.constant dense<0.000000e+00> : vector<4x512xf32>
    %151 = tpu.matmul %149, %150, %cst_51 {dimension_numbers = #tpu.dot_dimension_numbers<[1], [0], [0], [1], [0, 0, 1, 1], [], []>} : vector<4x256xbf16>, vector<256x512xbf16>, vector<4x512xf32> -> vector<4x512xf32>
    %c0_52 = arith.constant 0 : index
    %c0_53 = arith.constant 0 : index
    %152 = vector.load %arg3[%c0_52, %c0_53] : memref<1x512xf32, #tpu.memory_space<vmem>>, vector<1x512xf32>
    %153 = vector.broadcast %152 : vector<1x512xf32> to vector<4x512xf32>
    %154 = arith.addf %151, %153 : vector<4x512xf32>
    %155 = vector.extract_strided_slice %154 {offsets = [0, 0], sizes = [4, 128], strides = [1, 1]} : vector<4x512xf32> to vector<4x128xf32>
    %156 = arith.negf %155 : vector<4x128xf32>
    %157 = math.exp %156 : vector<4x128xf32>
    %cst_54 = arith.constant 1.000000e+00 : f32
    %158 = vector.broadcast %cst_54 : f32 to vector<4x128xf32>
    %159 = arith.addf %158, %157 : vector<4x128xf32>
    %160 = arith.divf %158, %159 : vector<4x128xf32>
    %161 = vector.extract_strided_slice %154 {offsets = [0, 128], sizes = [4, 128], strides = [1, 1]} : vector<4x512xf32> to vector<4x128xf32>
    %162 = arith.negf %161 : vector<4x128xf32>
    %163 = math.exp %162 : vector<4x128xf32>
    %cst_55 = arith.constant 1.000000e+00 : f32
    %164 = vector.broadcast %cst_55 : f32 to vector<4x128xf32>
    %165 = arith.addf %164, %163 : vector<4x128xf32>
    %166 = arith.divf %164, %165 : vector<4x128xf32>
    %167 = vector.extract_strided_slice %154 {offsets = [0, 256], sizes = [4, 128], strides = [1, 1]} : vector<4x512xf32> to vector<4x128xf32>
    %168 = vector.extract_strided_slice %154 {offsets = [0, 384], sizes = [4, 128], strides = [1, 1]} : vector<4x512xf32> to vector<4x128xf32>
    %169 = arith.mulf %160, %168 : vector<4x128xf32>
    %170 = arith.addf %167, %169 : vector<4x128xf32>
    %171 = math.tanh %170 : vector<4x128xf32>
    %cst_56 = arith.constant 1.000000e+00 : f32
    %172 = vector.broadcast %cst_56 : f32 to vector<4x128xf32>
    %173 = arith.subf %172, %166 : vector<4x128xf32>
    %174 = arith.mulf %173, %171 : vector<4x128xf32>
    %175 = arith.mulf %166, %140 : vector<4x128xf32>
    %176 = arith.addf %174, %175 : vector<4x128xf32>
    %177 = arith.index_cast %c4_i32 : i32 to index
    %c0_57 = arith.constant 0 : index
    %c0_58 = arith.constant 0 : index
    %178 = vector.load %arg4[%177, %c0_57, %c0_58] : memref<11x4x128xf32, #tpu.memory_space<vmem>>, vector<1x4x128xf32>
    %179 = vector.shape_cast %178 : vector<1x4x128xf32> to vector<4x128xf32>
    %180 = vector.shape_cast %176 : vector<4x128xf32> to vector<1x4x128xf32>
    tpu.vector_store %arg4[%177, %c0_57, %c0_58], %180 {strides = array<i32>} : memref<11x4x128xf32, #tpu.memory_space<vmem>>, vector<1x4x128xf32>,
    %c5_i32 = arith.constant 5 : i32
    %181 = arith.truncf %176 : vector<4x128xf32> to vector<4x128xbf16>
    %182 = arith.index_cast %c5_i32 : i32 to index
    %c0_59 = arith.constant 0 : index
    %c0_60 = arith.constant 0 : index
    %183 = vector.load %arg1[%182, %c0_59, %c0_60] : memref<11x4x128xbf16, #tpu.memory_space<vmem>>, vector<1x4x128xbf16>
    %184 = vector.shape_cast %183 : vector<1x4x128xbf16> to vector<4x128xbf16>
    %185 = tpu.concatenate %181, %184 in 1 : vector<4x128xbf16>, vector<4x128xbf16> -> vector<4x256xbf16>
    %c0_61 = arith.constant 0 : index
    %c0_62 = arith.constant 0 : index
    %186 = vector.load %arg2[%c0_61, %c0_62] : memref<256x512xbf16, #tpu.memory_space<vmem>>, vector<256x512xbf16>
    %cst_63 = arith.constant dense<0.000000e+00> : vector<4x512xf32>
    %187 = tpu.matmul %185, %186, %cst_63 {dimension_numbers = #tpu.dot_dimension_numbers<[1], [0], [0], [1], [0, 0, 1, 1], [], []>} : vector<4x256xbf16>, vector<256x512xbf16>, vector<4x512xf32> -> vector<4x512xf32>
    %c0_64 = arith.constant 0 : index
    %c0_65 = arith.constant 0 : index
    %188 = vector.load %arg3[%c0_64, %c0_65] : memref<1x512xf32, #tpu.memory_space<vmem>>, vector<1x512xf32>
    %189 = vector.broadcast %188 : vector<1x512xf32> to vector<4x512xf32>
    %190 = arith.addf %187, %189 : vector<4x512xf32>
    %191 = vector.extract_strided_slice %190 {offsets = [0, 0], sizes = [4, 128], strides = [1, 1]} : vector<4x512xf32> to vector<4x128xf32>
    %192 = arith.negf %191 : vector<4x128xf32>
    %193 = math.exp %192 : vector<4x128xf32>
    %cst_66 = arith.constant 1.000000e+00 : f32
    %194 = vector.broadcast %cst_66 : f32 to vector<4x128xf32>
    %195 = arith.addf %194, %193 : vector<4x128xf32>
    %196 = arith.divf %194, %195 : vector<4x128xf32>
    %197 = vector.extract_strided_slice %190 {offsets = [0, 128], sizes = [4, 128], strides = [1, 1]} : vector<4x512xf32> to vector<4x128xf32>
    %198 = arith.negf %197 : vector<4x128xf32>
    %199 = math.exp %198 : vector<4x128xf32>
    %cst_67 = arith.constant 1.000000e+00 : f32
    %200 = vector.broadcast %cst_67 : f32 to vector<4x128xf32>
    %201 = arith.addf %200, %199 : vector<4x128xf32>
    %202 = arith.divf %200, %201 : vector<4x128xf32>
    %203 = vector.extract_strided_slice %190 {offsets = [0, 256], sizes = [4, 128], strides = [1, 1]} : vector<4x512xf32> to vector<4x128xf32>
    %204 = vector.extract_strided_slice %190 {offsets = [0, 384], sizes = [4, 128], strides = [1, 1]} : vector<4x512xf32> to vector<4x128xf32>
    %205 = arith.mulf %196, %204 : vector<4x128xf32>
    %206 = arith.addf %203, %205 : vector<4x128xf32>
    %207 = math.tanh %206 : vector<4x128xf32>
    %cst_68 = arith.constant 1.000000e+00 : f32
    %208 = vector.broadcast %cst_68 : f32 to vector<4x128xf32>
    %209 = arith.subf %208, %202 : vector<4x128xf32>
    %210 = arith.mulf %209, %207 : vector<4x128xf32>
    %211 = arith.mulf %202, %176 : vector<4x128xf32>
    %212 = arith.addf %210, %211 : vector<4x128xf32>
    %213 = arith.index_cast %c5_i32 : i32 to index
    %c0_69 = arith.constant 0 : index
    %c0_70 = arith.constant 0 : index
    %214 = vector.load %arg4[%213, %c0_69, %c0_70] : memref<11x4x128xf32, #tpu.memory_space<vmem>>, vector<1x4x128xf32>
    %215 = vector.shape_cast %214 : vector<1x4x128xf32> to vector<4x128xf32>
    %216 = vector.shape_cast %212 : vector<4x128xf32> to vector<1x4x128xf32>
    tpu.vector_store %arg4[%213, %c0_69, %c0_70], %216 {strides = array<i32>} : memref<11x4x128xf32, #tpu.memory_space<vmem>>, vector<1x4x128xf32>,
    %c6_i32 = arith.constant 6 : i32
    %217 = arith.truncf %212 : vector<4x128xf32> to vector<4x128xbf16>
    %218 = arith.index_cast %c6_i32 : i32 to index
    %c0_71 = arith.constant 0 : index
    %c0_72 = arith.constant 0 : index
    %219 = vector.load %arg1[%218, %c0_71, %c0_72] : memref<11x4x128xbf16, #tpu.memory_space<vmem>>, vector<1x4x128xbf16>
    %220 = vector.shape_cast %219 : vector<1x4x128xbf16> to vector<4x128xbf16>
    %221 = tpu.concatenate %217, %220 in 1 : vector<4x128xbf16>, vector<4x128xbf16> -> vector<4x256xbf16>
    %c0_73 = arith.constant 0 : index
    %c0_74 = arith.constant 0 : index
    %222 = vector.load %arg2[%c0_73, %c0_74] : memref<256x512xbf16, #tpu.memory_space<vmem>>, vector<256x512xbf16>
    %cst_75 = arith.constant dense<0.000000e+00> : vector<4x512xf32>
    %223 = tpu.matmul %221, %222, %cst_75 {dimension_numbers = #tpu.dot_dimension_numbers<[1], [0], [0], [1], [0, 0, 1, 1], [], []>} : vector<4x256xbf16>, vector<256x512xbf16>, vector<4x512xf32> -> vector<4x512xf32>
    %c0_76 = arith.constant 0 : index
    %c0_77 = arith.constant 0 : index
    %224 = vector.load %arg3[%c0_76, %c0_77] : memref<1x512xf32, #tpu.memory_space<vmem>>, vector<1x512xf32>
    %225 = vector.broadcast %224 : vector<1x512xf32> to vector<4x512xf32>
    %226 = arith.addf %223, %225 : vector<4x512xf32>
    %227 = vector.extract_strided_slice %226 {offsets = [0, 0], sizes = [4, 128], strides = [1, 1]} : vector<4x512xf32> to vector<4x128xf32>
    %228 = arith.negf %227 : vector<4x128xf32>
    %229 = math.exp %228 : vector<4x128xf32>
    %cst_78 = arith.constant 1.000000e+00 : f32
    %230 = vector.broadcast %cst_78 : f32 to vector<4x128xf32>
    %231 = arith.addf %230, %229 : vector<4x128xf32>
    %232 = arith.divf %230, %231 : vector<4x128xf32>
    %233 = vector.extract_strided_slice %226 {offsets = [0, 128], sizes = [4, 128], strides = [1, 1]} : vector<4x512xf32> to vector<4x128xf32>
    %234 = arith.negf %233 : vector<4x128xf32>
    %235 = math.exp %234 : vector<4x128xf32>
    %cst_79 = arith.constant 1.000000e+00 : f32
    %236 = vector.broadcast %cst_79 : f32 to vector<4x128xf32>
    %237 = arith.addf %236, %235 : vector<4x128xf32>
    %238 = arith.divf %236, %237 : vector<4x128xf32>
    %239 = vector.extract_strided_slice %226 {offsets = [0, 256], sizes = [4, 128], strides = [1, 1]} : vector<4x512xf32> to vector<4x128xf32>
    %240 = vector.extract_strided_slice %226 {offsets = [0, 384], sizes = [4, 128], strides = [1, 1]} : vector<4x512xf32> to vector<4x128xf32>
    %241 = arith.mulf %232, %240 : vector<4x128xf32>
    %242 = arith.addf %239, %241 : vector<4x128xf32>
    %243 = math.tanh %242 : vector<4x128xf32>
    %cst_80 = arith.constant 1.000000e+00 : f32
    %244 = vector.broadcast %cst_80 : f32 to vector<4x128xf32>
    %245 = arith.subf %244, %238 : vector<4x128xf32>
    %246 = arith.mulf %245, %243 : vector<4x128xf32>
    %247 = arith.mulf %238, %212 : vector<4x128xf32>
    %248 = arith.addf %246, %247 : vector<4x128xf32>
    %249 = arith.index_cast %c6_i32 : i32 to index
    %c0_81 = arith.constant 0 : index
    %c0_82 = arith.constant 0 : index
    %250 = vector.load %arg4[%249, %c0_81, %c0_82] : memref<11x4x128xf32, #tpu.memory_space<vmem>>, vector<1x4x128xf32>
    %251 = vector.shape_cast %250 : vector<1x4x128xf32> to vector<4x128xf32>
    %252 = vector.shape_cast %248 : vector<4x128xf32> to vector<1x4x128xf32>
    tpu.vector_store %arg4[%249, %c0_81, %c0_82], %252 {strides = array<i32>} : memref<11x4x128xf32, #tpu.memory_space<vmem>>, vector<1x4x128xf32>,
    %c7_i32 = arith.constant 7 : i32
    %253 = arith.truncf %248 : vector<4x128xf32> to vector<4x128xbf16>
    %254 = arith.index_cast %c7_i32 : i32 to index
    %c0_83 = arith.constant 0 : index
    %c0_84 = arith.constant 0 : index
    %255 = vector.load %arg1[%254, %c0_83, %c0_84] : memref<11x4x128xbf16, #tpu.memory_space<vmem>>, vector<1x4x128xbf16>
    %256 = vector.shape_cast %255 : vector<1x4x128xbf16> to vector<4x128xbf16>
    %257 = tpu.concatenate %253, %256 in 1 : vector<4x128xbf16>, vector<4x128xbf16> -> vector<4x256xbf16>
    %c0_85 = arith.constant 0 : index
    %c0_86 = arith.constant 0 : index
    %258 = vector.load %arg2[%c0_85, %c0_86] : memref<256x512xbf16, #tpu.memory_space<vmem>>, vector<256x512xbf16>
    %cst_87 = arith.constant dense<0.000000e+00> : vector<4x512xf32>
    %259 = tpu.matmul %257, %258, %cst_87 {dimension_numbers = #tpu.dot_dimension_numbers<[1], [0], [0], [1], [0, 0, 1, 1], [], []>} : vector<4x256xbf16>, vector<256x512xbf16>, vector<4x512xf32> -> vector<4x512xf32>
    %c0_88 = arith.constant 0 : index
    %c0_89 = arith.constant 0 : index
    %260 = vector.load %arg3[%c0_88, %c0_89] : memref<1x512xf32, #tpu.memory_space<vmem>>, vector<1x512xf32>
    %261 = vector.broadcast %260 : vector<1x512xf32> to vector<4x512xf32>
    %262 = arith.addf %259, %261 : vector<4x512xf32>
    %263 = vector.extract_strided_slice %262 {offsets = [0, 0], sizes = [4, 128], strides = [1, 1]} : vector<4x512xf32> to vector<4x128xf32>
    %264 = arith.negf %263 : vector<4x128xf32>
    %265 = math.exp %264 : vector<4x128xf32>
    %cst_90 = arith.constant 1.000000e+00 : f32
    %266 = vector.broadcast %cst_90 : f32 to vector<4x128xf32>
    %267 = arith.addf %266, %265 : vector<4x128xf32>
    %268 = arith.divf %266, %267 : vector<4x128xf32>
    %269 = vector.extract_strided_slice %262 {offsets = [0, 128], sizes = [4, 128], strides = [1, 1]} : vector<4x512xf32> to vector<4x128xf32>
    %270 = arith.negf %269 : vector<4x128xf32>
    %271 = math.exp %270 : vector<4x128xf32>
    %cst_91 = arith.constant 1.000000e+00 : f32
    %272 = vector.broadcast %cst_91 : f32 to vector<4x128xf32>
    %273 = arith.addf %272, %271 : vector<4x128xf32>
    %274 = arith.divf %272, %273 : vector<4x128xf32>
    %275 = vector.extract_strided_slice %262 {offsets = [0, 256], sizes = [4, 128], strides = [1, 1]} : vector<4x512xf32> to vector<4x128xf32>
    %276 = vector.extract_strided_slice %262 {offsets = [0, 384], sizes = [4, 128], strides = [1, 1]} : vector<4x512xf32> to vector<4x128xf32>
    %277 = arith.mulf %268, %276 : vector<4x128xf32>
    %278 = arith.addf %275, %277 : vector<4x128xf32>
    %279 = math.tanh %278 : vector<4x128xf32>
    %cst_92 = arith.constant 1.000000e+00 : f32
    %280 = vector.broadcast %cst_92 : f32 to vector<4x128xf32>
    %281 = arith.subf %280, %274 : vector<4x128xf32>
    %282 = arith.mulf %281, %279 : vector<4x128xf32>
    %283 = arith.mulf %274, %248 : vector<4x128xf32>
    %284 = arith.addf %282, %283 : vector<4x128xf32>
    %285 = arith.index_cast %c7_i32 : i32 to index
    %c0_93 = arith.constant 0 : index
    %c0_94 = arith.constant 0 : index
    %286 = vector.load %arg4[%285, %c0_93, %c0_94] : memref<11x4x128xf32, #tpu.memory_space<vmem>>, vector<1x4x128xf32>
    %287 = vector.shape_cast %286 : vector<1x4x128xf32> to vector<4x128xf32>
    %288 = vector.shape_cast %284 : vector<4x128xf32> to vector<1x4x128xf32>
    tpu.vector_store %arg4[%285, %c0_93, %c0_94], %288 {strides = array<i32>} : memref<11x4x128xf32, #tpu.memory_space<vmem>>, vector<1x4x128xf32>,
    %c8_i32 = arith.constant 8 : i32
    %289 = arith.truncf %284 : vector<4x128xf32> to vector<4x128xbf16>
    %290 = arith.index_cast %c8_i32 : i32 to index
    %c0_95 = arith.constant 0 : index
    %c0_96 = arith.constant 0 : index
    %291 = vector.load %arg1[%290, %c0_95, %c0_96] : memref<11x4x128xbf16, #tpu.memory_space<vmem>>, vector<1x4x128xbf16>
    %292 = vector.shape_cast %291 : vector<1x4x128xbf16> to vector<4x128xbf16>
    %293 = tpu.concatenate %289, %292 in 1 : vector<4x128xbf16>, vector<4x128xbf16> -> vector<4x256xbf16>
    %c0_97 = arith.constant 0 : index
    %c0_98 = arith.constant 0 : index
    %294 = vector.load %arg2[%c0_97, %c0_98] : memref<256x512xbf16, #tpu.memory_space<vmem>>, vector<256x512xbf16>
    %cst_99 = arith.constant dense<0.000000e+00> : vector<4x512xf32>
    %295 = tpu.matmul %293, %294, %cst_99 {dimension_numbers = #tpu.dot_dimension_numbers<[1], [0], [0], [1], [0, 0, 1, 1], [], []>} : vector<4x256xbf16>, vector<256x512xbf16>, vector<4x512xf32> -> vector<4x512xf32>
    %c0_100 = arith.constant 0 : index
    %c0_101 = arith.constant 0 : index
    %296 = vector.load %arg3[%c0_100, %c0_101] : memref<1x512xf32, #tpu.memory_space<vmem>>, vector<1x512xf32>
    %297 = vector.broadcast %296 : vector<1x512xf32> to vector<4x512xf32>
    %298 = arith.addf %295, %297 : vector<4x512xf32>
    %299 = vector.extract_strided_slice %298 {offsets = [0, 0], sizes = [4, 128], strides = [1, 1]} : vector<4x512xf32> to vector<4x128xf32>
    %300 = arith.negf %299 : vector<4x128xf32>
    %301 = math.exp %300 : vector<4x128xf32>
    %cst_102 = arith.constant 1.000000e+00 : f32
    %302 = vector.broadcast %cst_102 : f32 to vector<4x128xf32>
    %303 = arith.addf %302, %301 : vector<4x128xf32>
    %304 = arith.divf %302, %303 : vector<4x128xf32>
    %305 = vector.extract_strided_slice %298 {offsets = [0, 128], sizes = [4, 128], strides = [1, 1]} : vector<4x512xf32> to vector<4x128xf32>
    %306 = arith.negf %305 : vector<4x128xf32>
    %307 = math.exp %306 : vector<4x128xf32>
    %cst_103 = arith.constant 1.000000e+00 : f32
    %308 = vector.broadcast %cst_103 : f32 to vector<4x128xf32>
    %309 = arith.addf %308, %307 : vector<4x128xf32>
    %310 = arith.divf %308, %309 : vector<4x128xf32>
    %311 = vector.extract_strided_slice %298 {offsets = [0, 256], sizes = [4, 128], strides = [1, 1]} : vector<4x512xf32> to vector<4x128xf32>
    %312 = vector.extract_strided_slice %298 {offsets = [0, 384], sizes = [4, 128], strides = [1, 1]} : vector<4x512xf32> to vector<4x128xf32>
    %313 = arith.mulf %304, %312 : vector<4x128xf32>
    %314 = arith.addf %311, %313 : vector<4x128xf32>
    %315 = math.tanh %314 : vector<4x128xf32>
    %cst_104 = arith.constant 1.000000e+00 : f32
    %316 = vector.broadcast %cst_104 : f32 to vector<4x128xf32>
    %317 = arith.subf %316, %310 : vector<4x128xf32>
    %318 = arith.mulf %317, %315 : vector<4x128xf32>
    %319 = arith.mulf %310, %284 : vector<4x128xf32>
    %320 = arith.addf %318, %319 : vector<4x128xf32>
    %321 = arith.index_cast %c8_i32 : i32 to index
    %c0_105 = arith.constant 0 : index
    %c0_106 = arith.constant 0 : index
    %322 = vector.load %arg4[%321, %c0_105, %c0_106] : memref<11x4x128xf32, #tpu.memory_space<vmem>>, vector<1x4x128xf32>
    %323 = vector.shape_cast %322 : vector<1x4x128xf32> to vector<4x128xf32>
    %324 = vector.shape_cast %320 : vector<4x128xf32> to vector<1x4x128xf32>
    tpu.vector_store %arg4[%321, %c0_105, %c0_106], %324 {strides = array<i32>} : memref<11x4x128xf32, #tpu.memory_space<vmem>>, vector<1x4x128xf32>,
    %c9_i32 = arith.constant 9 : i32
    %325 = arith.truncf %320 : vector<4x128xf32> to vector<4x128xbf16>
    %326 = arith.index_cast %c9_i32 : i32 to index
    %c0_107 = arith.constant 0 : index
    %c0_108 = arith.constant 0 : index
    %327 = vector.load %arg1[%326, %c0_107, %c0_108] : memref<11x4x128xbf16, #tpu.memory_space<vmem>>, vector<1x4x128xbf16>
    %328 = vector.shape_cast %327 : vector<1x4x128xbf16> to vector<4x128xbf16>
    %329 = tpu.concatenate %325, %328 in 1 : vector<4x128xbf16>, vector<4x128xbf16> -> vector<4x256xbf16>
    %c0_109 = arith.constant 0 : index
    %c0_110 = arith.constant 0 : index
    %330 = vector.load %arg2[%c0_109, %c0_110] : memref<256x512xbf16, #tpu.memory_space<vmem>>, vector<256x512xbf16>
    %cst_111 = arith.constant dense<0.000000e+00> : vector<4x512xf32>
    %331 = tpu.matmul %329, %330, %cst_111 {dimension_numbers = #tpu.dot_dimension_numbers<[1], [0], [0], [1], [0, 0, 1, 1], [], []>} : vector<4x256xbf16>, vector<256x512xbf16>, vector<4x512xf32> -> vector<4x512xf32>
    %c0_112 = arith.constant 0 : index
    %c0_113 = arith.constant 0 : index
    %332 = vector.load %arg3[%c0_112, %c0_113] : memref<1x512xf32, #tpu.memory_space<vmem>>, vector<1x512xf32>
    %333 = vector.broadcast %332 : vector<1x512xf32> to vector<4x512xf32>
    %334 = arith.addf %331, %333 : vector<4x512xf32>
    %335 = vector.extract_strided_slice %334 {offsets = [0, 0], sizes = [4, 128], strides = [1, 1]} : vector<4x512xf32> to vector<4x128xf32>
    %336 = arith.negf %335 : vector<4x128xf32>
    %337 = math.exp %336 : vector<4x128xf32>
    %cst_114 = arith.constant 1.000000e+00 : f32
    %338 = vector.broadcast %cst_114 : f32 to vector<4x128xf32>
    %339 = arith.addf %338, %337 : vector<4x128xf32>
    %340 = arith.divf %338, %339 : vector<4x128xf32>
    %341 = vector.extract_strided_slice %334 {offsets = [0, 128], sizes = [4, 128], strides = [1, 1]} : vector<4x512xf32> to vector<4x128xf32>
    %342 = arith.negf %341 : vector<4x128xf32>
    %343 = math.exp %342 : vector<4x128xf32>
    %cst_115 = arith.constant 1.000000e+00 : f32
    %344 = vector.broadcast %cst_115 : f32 to vector<4x128xf32>
    %345 = arith.addf %344, %343 : vector<4x128xf32>
    %346 = arith.divf %344, %345 : vector<4x128xf32>
    %347 = vector.extract_strided_slice %334 {offsets = [0, 256], sizes = [4, 128], strides = [1, 1]} : vector<4x512xf32> to vector<4x128xf32>
    %348 = vector.extract_strided_slice %334 {offsets = [0, 384], sizes = [4, 128], strides = [1, 1]} : vector<4x512xf32> to vector<4x128xf32>
    %349 = arith.mulf %340, %348 : vector<4x128xf32>
    %350 = arith.addf %347, %349 : vector<4x128xf32>
    %351 = math.tanh %350 : vector<4x128xf32>
    %cst_116 = arith.constant 1.000000e+00 : f32
    %352 = vector.broadcast %cst_116 : f32 to vector<4x128xf32>
    %353 = arith.subf %352, %346 : vector<4x128xf32>
    %354 = arith.mulf %353, %351 : vector<4x128xf32>
    %355 = arith.mulf %346, %320 : vector<4x128xf32>
    %356 = arith.addf %354, %355 : vector<4x128xf32>
    %357 = arith.index_cast %c9_i32 : i32 to index
    %c0_117 = arith.constant 0 : index
    %c0_118 = arith.constant 0 : index
    %358 = vector.load %arg4[%357, %c0_117, %c0_118] : memref<11x4x128xf32, #tpu.memory_space<vmem>>, vector<1x4x128xf32>
    %359 = vector.shape_cast %358 : vector<1x4x128xf32> to vector<4x128xf32>
    %360 = vector.shape_cast %356 : vector<4x128xf32> to vector<1x4x128xf32>
    tpu.vector_store %arg4[%357, %c0_117, %c0_118], %360 {strides = array<i32>} : memref<11x4x128xf32, #tpu.memory_space<vmem>>, vector<1x4x128xf32>,
    %c10_i32 = arith.constant 10 : i32
    %361 = arith.truncf %356 : vector<4x128xf32> to vector<4x128xbf16>
    %362 = arith.index_cast %c10_i32 : i32 to index
    %c0_119 = arith.constant 0 : index
    %c0_120 = arith.constant 0 : index
    %363 = vector.load %arg1[%362, %c0_119, %c0_120] : memref<11x4x128xbf16, #tpu.memory_space<vmem>>, vector<1x4x128xbf16>
    %364 = vector.shape_cast %363 : vector<1x4x128xbf16> to vector<4x128xbf16>
    %365 = tpu.concatenate %361, %364 in 1 : vector<4x128xbf16>, vector<4x128xbf16> -> vector<4x256xbf16>
    %c0_121 = arith.constant 0 : index
    %c0_122 = arith.constant 0 : index
    %366 = vector.load %arg2[%c0_121, %c0_122] : memref<256x512xbf16, #tpu.memory_space<vmem>>, vector<256x512xbf16>
    %cst_123 = arith.constant dense<0.000000e+00> : vector<4x512xf32>
    %367 = tpu.matmul %365, %366, %cst_123 {dimension_numbers = #tpu.dot_dimension_numbers<[1], [0], [0], [1], [0, 0, 1, 1], [], []>} : vector<4x256xbf16>, vector<256x512xbf16>, vector<4x512xf32> -> vector<4x512xf32>
    %c0_124 = arith.constant 0 : index
    %c0_125 = arith.constant 0 : index
    %368 = vector.load %arg3[%c0_124, %c0_125] : memref<1x512xf32, #tpu.memory_space<vmem>>, vector<1x512xf32>
    %369 = vector.broadcast %368 : vector<1x512xf32> to vector<4x512xf32>
    %370 = arith.addf %367, %369 : vector<4x512xf32>
    %371 = vector.extract_strided_slice %370 {offsets = [0, 0], sizes = [4, 128], strides = [1, 1]} : vector<4x512xf32> to vector<4x128xf32>
    %372 = arith.negf %371 : vector<4x128xf32>
    %373 = math.exp %372 : vector<4x128xf32>
    %cst_126 = arith.constant 1.000000e+00 : f32
    %374 = vector.broadcast %cst_126 : f32 to vector<4x128xf32>
    %375 = arith.addf %374, %373 : vector<4x128xf32>
    %376 = arith.divf %374, %375 : vector<4x128xf32>
    %377 = vector.extract_strided_slice %370 {offsets = [0, 128], sizes = [4, 128], strides = [1, 1]} : vector<4x512xf32> to vector<4x128xf32>
    %378 = arith.negf %377 : vector<4x128xf32>
    %379 = math.exp %378 : vector<4x128xf32>
    %cst_127 = arith.constant 1.000000e+00 : f32
    %380 = vector.broadcast %cst_127 : f32 to vector<4x128xf32>
    %381 = arith.addf %380, %379 : vector<4x128xf32>
    %382 = arith.divf %380, %381 : vector<4x128xf32>
    %383 = vector.extract_strided_slice %370 {offsets = [0, 256], sizes = [4, 128], strides = [1, 1]} : vector<4x512xf32> to vector<4x128xf32>
    %384 = vector.extract_strided_slice %370 {offsets = [0, 384], sizes = [4, 128], strides = [1, 1]} : vector<4x512xf32> to vector<4x128xf32>
    %385 = arith.mulf %376, %384 : vector<4x128xf32>
    %386 = arith.addf %383, %385 : vector<4x128xf32>
    %387 = math.tanh %386 : vector<4x128xf32>
    %cst_128 = arith.constant 1.000000e+00 : f32
    %388 = vector.broadcast %cst_128 : f32 to vector<4x128xf32>
    %389 = arith.subf %388, %382 : vector<4x128xf32>
    %390 = arith.mulf %389, %387 : vector<4x128xf32>
    %391 = arith.mulf %382, %356 : vector<4x128xf32>
    %392 = arith.addf %390, %391 : vector<4x128xf32>
    %393 = arith.index_cast %c10_i32 : i32 to index
    %c0_129 = arith.constant 0 : index
    %c0_130 = arith.constant 0 : index
    %394 = vector.load %arg4[%393, %c0_129, %c0_130] : memref<11x4x128xf32, #tpu.memory_space<vmem>>, vector<1x4x128xf32>
    %395 = vector.shape_cast %394 : vector<1x4x128xf32> to vector<4x128xf32>
    %396 = vector.shape_cast %392 : vector<4x128xf32> to vector<1x4x128xf32>
    tpu.vector_store %arg4[%393, %c0_129, %c0_130], %396 {strides = array<i32>} : memref<11x4x128xf32, #tpu.memory_space<vmem>>, vector<1x4x128xf32>,
    %c11_i32 = arith.constant 11 : i32
    return
  }
  func.func @transform_0(%arg0: i32) -> (i32, i32, i32) {
    %c0_i32 = arith.constant 0 : i32
    %c0_i32_0 = arith.constant 0 : i32
    %c0_i32_1 = arith.constant 0 : i32
    %c0_i32_2 = arith.constant 0 : i32
    return %c0_i32, %c0_i32_0, %c0_i32_1 : i32, i32, i32
  }
  func.func @transform_1(%arg0: i32) -> (i32, i32) {
    %c0_i32 = arith.constant 0 : i32
    %c0_i32_0 = arith.constant 0 : i32
    %c0_i32_1 = arith.constant 0 : i32
    return %c0_i32, %c0_i32_0 : i32, i32
  }
  func.func @transform_2(%arg0: i32) -> (i32, i32) {
    %c0_i32 = arith.constant 0 : i32
    %c0_i32_0 = arith.constant 0 : i32
    %c0_i32_1 = arith.constant 0 : i32
    return %c0_i32, %c0_i32_0 : i32, i32
  }
  func.func @transform_3(%arg0: i32) -> (i32, i32, i32) {
    %c0_i32 = arith.constant 0 : i32
    %c0_i32_0 = arith.constant 0 : i32
    %c0_i32_1 = arith.constant 0 : i32
    %c0_i32_2 = arith.constant 0 : i32
    return %c0_i32, %c0_i32_0, %c0_i32_1 : i32, i32, i32
  }
}

</mosaic_0001>

<llo_original>
// kernel: tpu_custom_call.1
$region0: #{tpu_custom_call.1}
  #allocation0 [shape = 'u32[]', space=smem, size = 0x4, offset = 0x4, fixed_abs, tag = 'smem constant byte address 0x4 - core index']
  #allocation1 [shape = 'u32[144,128]{1,0:T(1,128)}', space=vmem, size = 0x12000, scoped, tag = 'internal scratch']
  %s0 = inlined_call_operand.hbm [shape: bf16[11,4,128], index: 0, kind: input, shape index: {}]
  %s1 = inlined_call_operand.hbm [shape: bf16[256,512], index: 1, kind: input, shape index: {}]
  %s2 = inlined_call_operand.hbm [shape: f32[1,512], index: 2, kind: input, shape index: {}]
  %s3 = inlined_call_operand.hbm [shape: f32[11,4,128], index: 3, kind: output, shape index: {}]
  %s4 = sld [smem:[#allocation0]]
  $region34: #{tpu_custom_call.1} parent=0
    _
  %s6 = ssub.s32 1, %s4
  %s7 = scalar_select 0, %s6, %s4
  $region1: #{tpu_custom_call.1} parent=0
    #allocation2 [shape = 'u8[11264]{0}', space=vmem, size = 0x2c00, scoped, tag = 'input window, operand 0, single buffered']
    #allocation3 [shape = 's32[1]{0}', space=sflag, size = 0x4, scoped, tag = 'scoped memory for tpu_custom_call.1']
    #allocation4 [shape = 's32[1]{0}', space=sflag, size = 0x4, scoped, tag = 'scoped memory for tpu_custom_call.1']
    #allocation5 [shape = 'u8[262144]{0}', space=vmem, size = 0x40000, scoped, tag = 'input window, operand 1, single buffered']
    #allocation6 [shape = 's32[1]{0}', space=sflag, size = 0x4, scoped, tag = 'scoped memory for tpu_custom_call.1']
    #allocation7 [shape = 'u8[2048]{0}', space=vmem, size = 0x800, scoped, tag = 'input window, operand 2, single buffered']
    #allocation8 [shape = 'u8[22528]{0}', space=vmem, size = 0x5800, scoped, tag = 'output window, operand 0, single buffered']
    %8 = vsyncpa [#allocation3], 0
    %9 = vsyncpa [#allocation6], 0
    %10 = vsyncpa [#allocation4], 0
    // Predicated region
    $region2: #{tpu_custom_call.1} parent=1 // pred_check
      _
    $region3: #{tpu_custom_call.1} parent=1 // pred_check_branch
      %12 = sbr.rel (0) target = $region5
    $region4: #{tpu_custom_call.1} parent=1 // pred_region
      %s14 = ssub.s32 352, 352
      %15 = vsyncadd [#allocation3], %s14
      %s16 = sshll.u32 [#allocation2], 4
      %s17 = int_to_ptr.vmem [resolvable:$true] %s16
      %22 = dma.hbm_to_vmem [thread:$0]  %s0, 352, %s17, [#allocation3], 32, 32, 2
    $region5: #{tpu_custom_call.1} parent=1 // pred_fallthru
      _
    // Predicated region
    $region6: #{tpu_custom_call.1} parent=1 // pred_check
      _
    $region7: #{tpu_custom_call.1} parent=1 // pred_check_branch
      %24 = sbr.rel (0) target = $region9
    $region8: #{tpu_custom_call.1} parent=1 // pred_region
      %s26 = ssub.s32 8192, 8192
      %27 = vsyncadd [#allocation6], %s26
      %s28 = sshll.u32 [#allocation5], 4
      %s29 = int_to_ptr.vmem [resolvable:$true] %s28
      %34 = dma.hbm_to_vmem [thread:$0]  %s1, 8192, %s29, [#allocation6], 256, 256, 16
    $region9: #{tpu_custom_call.1} parent=1 // pred_fallthru
      _
    // Predicated region
    $region10: #{tpu_custom_call.1} parent=1 // pred_check
      _
    $region11: #{tpu_custom_call.1} parent=1 // pred_check_branch
      %36 = sbr.rel (0) target = $region13
    $region12: #{tpu_custom_call.1} parent=1 // pred_region
      %s38 = ssub.s32 64, 64
      %39 = vsyncadd [#allocation6], %s38
      %s41 = sshll.u32 [#allocation7], 4
      %s42 = int_to_ptr.vmem [resolvable:$true] %s41
      %44 = dma.hbm_to_vmem [thread:$0]  %s2, 64, %s42, [#allocation6]
    $region13: #{tpu_custom_call.1} parent=1 // pred_fallthru
      _
    // Predicated region
    $region14: #{tpu_custom_call.1} parent=1 // pred_check
      _
    $region15: #{tpu_custom_call.1} parent=1 // pred_check_branch
      %46 = sbr.rel (0) target = $region17
    $region16: #{tpu_custom_call.1} parent=1 // pred_region
      %47 = dma.done [#allocation3], 352
    $region17: #{tpu_custom_call.1} parent=1 // pred_fallthru
      _
    // Predicated region
    $region18: #{tpu_custom_call.1} parent=1 // pred_check
      _
    $region19: #{tpu_custom_call.1} parent=1 // pred_check_branch
      %49 = sbr.rel (0) target = $region21
    $region20: #{tpu_custom_call.1} parent=1 // pred_region
      %50 = dma.done [#allocation6], 8192
    $region21: #{tpu_custom_call.1} parent=1 // pred_fallthru
      _
    // Predicated region
    $region22: #{tpu_custom_call.1} parent=1 // pred_check
      _
    $region23: #{tpu_custom_call.1} parent=1 // pred_check_branch
      %52 = sbr.rel (0) target = $region25
    $region24: #{tpu_custom_call.1} parent=1 // pred_region
      %53 = dma.done [#allocation6], 64
    $region25: #{tpu_custom_call.1} parent=1 // pred_fallthru
      _
    %v55 = vld [vmem:[#allocation2] sm:$0x3]
    %v56 = vld [vmem:[#allocation5] sm:$0xff]
    %v57 = vld [vmem:[#allocation5 + $0x8] sm:$0xff]
    %v58 = vld [vmem:[#allocation5 + $0x10] sm:$0xff]
    %v59 = vld [vmem:[#allocation5 + $0x18] sm:$0xff]
    %v60 = vld [vmem:[#allocation5 + $0x20] sm:$0xff]
    %v61 = vld [vmem:[#allocation5 + $0x28] sm:$0xff]
    %v62 = vld [vmem:[#allocation5 + $0x30] sm:$0xff]
    %v63 = vld [vmem:[#allocation5 + $0x38] sm:$0xff]
    %v64 = vld [vmem:[#allocation5 + $0x40] sm:$0xff]
    %v65 = vld [vmem:[#allocation5 + $0x48] sm:$0xff]
    %v66 = vld [vmem:[#allocation5 + $0x50] sm:$0xff]
    %v67 = vld [vmem:[#allocation5 + $0x58] sm:$0xff]
    %v68 = vld [vmem:[#allocation5 + $0x60] sm:$0xff]
    %v69 = vld [vmem:[#allocation5 + $0x68] sm:$0xff]
    %v70 = vld [vmem:[#allocation5 + $0x70] sm:$0xff]
    %v71 = vld [vmem:[#allocation5 + $0x78] sm:$0xff]
    %v72 = vld [vmem:[#allocation5 + $0x80] sm:$0xff]
    %v73 = vld [vmem:[#allocation5 + $0x88] sm:$0xff]
    %v74 = vld [vmem:[#allocation5 + $0x90] sm:$0xff]
    %v75 = vld [vmem:[#allocation5 + $0x98] sm:$0xff]
    %v76 = vld [vmem:[#allocation5 + $0xa0] sm:$0xff]
    %v77 = vld [vmem:[#allocation5 + $0xa8] sm:$0xff]
    %v78 = vld [vmem:[#allocation5 + $0xb0] sm:$0xff]
    %v79 = vld [vmem:[#allocation5 + $0xb8] sm:$0xff]
    %v80 = vld [vmem:[#allocation5 + $0xc0] sm:$0xff]
    %v81 = vld [vmem:[#allocation5 + $0xc8] sm:$0xff]
    %v82 = vld [vmem:[#allocation5 + $0xd0] sm:$0xff]
    %v83 = vld [vmem:[#allocation5 + $0xd8] sm:$0xff]
    %v84 = vld [vmem:[#allocation5 + $0xe0] sm:$0xff]
    %v85 = vld [vmem:[#allocation5 + $0xe8] sm:$0xff]
    %v86 = vld [vmem:[#allocation5 + $0xf0] sm:$0xff]
    %v87 = vld [vmem:[#allocation5 + $0xf8] sm:$0xff]
    %v88 = vld [vmem:[#allocation5 + $0x100] sm:$0xff]
    %v89 = vld [vmem:[#allocation5 + $0x108] sm:$0xff]
    %v90 = vld [vmem:[#allocation5 + $0x110] sm:$0xff]
    %v91 = vld [vmem:[#allocation5 + $0x118] sm:$0xff]
    %v92 = vld [vmem:[#allocation5 + $0x120] sm:$0xff]
    %v93 = vld [vmem:[#allocation5 + $0x128] sm:$0xff]
    %v94 = vld [vmem:[#allocation5 + $0x130] sm:$0xff]
    %v95 = vld [vmem:[#allocation5 + $0x138] sm:$0xff]
    %v96 = vld [vmem:[#allocation5 + $0x140] sm:$0xff]
    %v97 = vld [vmem:[#allocation5 + $0x148] sm:$0xff]
    %v98 = vld [vmem:[#allocation5 + $0x150] sm:$0xff]
    %v99 = vld [vmem:[#allocation5 + $0x158] sm:$0xff]
    %v100 = vld [vmem:[#allocation5 + $0x160] sm:$0xff]
    %v101 = vld [vmem:[#allocation5 + $0x168] sm:$0xff]
    %v102 = vld [vmem:[#allocation5 + $0x170] sm:$0xff]
    %v103 = vld [vmem:[#allocation5 + $0x178] sm:$0xff]
    %v104 = vld [vmem:[#allocation5 + $0x180] sm:$0xff]
    %v105 = vld [vmem:[#allocation5 + $0x188] sm:$0xff]
    %v106 = vld [vmem:[#allocation5 + $0x190] sm:$0xff]
    %v107 = vld [vmem:[#allocation5 + $0x198] sm:$0xff]
    %v108 = vld [vmem:[#allocation5 + $0x1a0] sm:$0xff]
    %v109 = vld [vmem:[#allocation5 + $0x1a8] sm:$0xff]
    %v110 = vld [vmem:[#allocation5 + $0x1b0] sm:$0xff]
    %v111 = vld [vmem:[#allocation5 + $0x1b8] sm:$0xff]
    %v112 = vld [vmem:[#allocation5 + $0x1c0] sm:$0xff]
    %v113 = vld [vmem:[#allocation5 + $0x1c8] sm:$0xff]
    %v114 = vld [vmem:[#allocation5 + $0x1d0] sm:$0xff]
    %v115 = vld [vmem:[#allocation5 + $0x1d8] sm:$0xff]
    %v116 = vld [vmem:[#allocation5 + $0x1e0] sm:$0xff]
    %v117 = vld [vmem:[#allocation5 + $0x1e8] sm:$0xff]
    %v118 = vld [vmem:[#allocation5 + $0x1f0] sm:$0xff]
    %v119 = vld [vmem:[#allocation5 + $0x1f8] sm:$0xff]
    %v120 = vld [vmem:[#allocation7] sm:$0xf]
    %v122 = vlaneseq
    %v123 = vshrl.u32 %v122, 7
    %v124 = vsub.s32 0, %v123
    %v125 = vrot.slane %v120, %v124
    %v126 = vlaneseq
    %v127 = vshrl.u32 %v126, 7
    %v128 = vsub.s32 1, %v127
    %v129 = vrot.slane %v120, %v128
    %v130 = vlaneseq
    %v131 = vshrl.u32 %v130, 7
    %v132 = vsub.s32 2, %v131
    %v133 = vrot.slane %v120, %v132
    %v134 = vlaneseq
    %v135 = vshrl.u32 %v134, 7
    %v136 = vsub.s32 3, %v135
    %v137 = vrot.slane %v120, %v136
    %v206 = vunpack.c.l.b16 %v56
    %v207 = vunpack.c.h.b16 %v56
    %v208 = vunpack.c.l.b16 %v57
    %v209 = vunpack.c.h.b16 %v57
    %v210 = vunpack.c.l.b16 %v58
    %v211 = vunpack.c.h.b16 %v58
    %v212 = vunpack.c.l.b16 %v59
    %v213 = vunpack.c.h.b16 %v59
    %v214 = vunpack.c.l.b16 %v60
    %v215 = vunpack.c.h.b16 %v60
    %v216 = vunpack.c.l.b16 %v61
    %v217 = vunpack.c.h.b16 %v61
    %v218 = vunpack.c.l.b16 %v62
    %v219 = vunpack.c.h.b16 %v62
    %v220 = vunpack.c.l.b16 %v63
    %v221 = vunpack.c.h.b16 %v63
    %v222 = vunpack.c.l.b16 %v64
    %v223 = vunpack.c.h.b16 %v64
    %v224 = vunpack.c.l.b16 %v65
    %v225 = vunpack.c.h.b16 %v65
    %v226 = vunpack.c.l.b16 %v66
    %v227 = vunpack.c.h.b16 %v66
    %v228 = vunpack.c.l.b16 %v67
    %v229 = vunpack.c.h.b16 %v67
    %v230 = vunpack.c.l.b16 %v68
    %v231 = vunpack.c.h.b16 %v68
    %v232 = vunpack.c.l.b16 %v69
    %v233 = vunpack.c.h.b16 %v69
    %v234 = vunpack.c.l.b16 %v70
    %v235 = vunpack.c.h.b16 %v70
    %v236 = vunpack.c.l.b16 %v71
    %v237 = vunpack.c.h.b16 %v71
    %v238 = vunpack.c.l.b16 %v72
    %v239 = vunpack.c.h.b16 %v72
    %v240 = vunpack.c.l.b16 %v73
    %v241 = vunpack.c.h.b16 %v73
    %v242 = vunpack.c.l.b16 %v74
    %v243 = vunpack.c.h.b16 %v74
    %v244 = vunpack.c.l.b16 %v75
    %v245 = vunpack.c.h.b16 %v75
    %v246 = vunpack.c.l.b16 %v76
    %v247 = vunpack.c.h.b16 %v76
    %v248 = vunpack.c.l.b16 %v77
    %v249 = vunpack.c.h.b16 %v77
    %v250 = vunpack.c.l.b16 %v78
    %v251 = vunpack.c.h.b16 %v78
    %v252 = vunpack.c.l.b16 %v79
    %v253 = vunpack.c.h.b16 %v79
    %v254 = vunpack.c.l.b16 %v80
    %v255 = vunpack.c.h.b16 %v80
    %v256 = vunpack.c.l.b16 %v81
    %v257 = vunpack.c.h.b16 %v81
    %v258 = vunpack.c.l.b16 %v82
    %v259 = vunpack.c.h.b16 %v82
    %v260 = vunpack.c.l.b16 %v83
    %v261 = vunpack.c.h.b16 %v83
    %v262 = vunpack.c.l.b16 %v84
    %v263 = vunpack.c.h.b16 %v84
    %v264 = vunpack.c.l.b16 %v85
    %v265 = vunpack.c.h.b16 %v85
    %v266 = vunpack.c.l.b16 %v86
    %v267 = vunpack.c.h.b16 %v86
    %v268 = vunpack.c.l.b16 %v87
    %v269 = vunpack.c.h.b16 %v87
    %v270 = vunpack.c.l.b16 %v88
    %v271 = vunpack.c.h.b16 %v88
    %v272 = vunpack.c.l.b16 %v89
    %v273 = vunpack.c.h.b16 %v89
    %v274 = vunpack.c.l.b16 %v90
    %v275 = vunpack.c.h.b16 %v90
    %v276 = vunpack.c.l.b16 %v91
    %v277 = vunpack.c.h.b16 %v91
    %v278 = vunpack.c.l.b16 %v92
    %v279 = vunpack.c.h.b16 %v92
    %v280 = vunpack.c.l.b16 %v93
    %v281 = vunpack.c.h.b16 %v93
    %v282 = vunpack.c.l.b16 %v94
    %v283 = vunpack.c.h.b16 %v94
    %v284 = vunpack.c.l.b16 %v95
    %v285 = vunpack.c.h.b16 %v95
    %v286 = vunpack.c.l.b16 %v96
    %v287 = vunpack.c.h.b16 %v96
    %v288 = vunpack.c.l.b16 %v97
    %v289 = vunpack.c.h.b16 %v97
    %v290 = vunpack.c.l.b16 %v98
    %v291 = vunpack.c.h.b16 %v98
    %v292 = vunpack.c.l.b16 %v99
    %v293 = vunpack.c.h.b16 %v99
    %v294 = vunpack.c.l.b16 %v100
    %v295 = vunpack.c.h.b16 %v100
    %v296 = vunpack.c.l.b16 %v101
    %v297 = vunpack.c.h.b16 %v101
    %v298 = vunpack.c.l.b16 %v102
    %v299 = vunpack.c.h.b16 %v102
    %v300 = vunpack.c.l.b16 %v103
    %v301 = vunpack.c.h.b16 %v103
    %v302 = vunpack.c.l.b16 %v104
    %v303 = vunpack.c.h.b16 %v104
    %v304 = vunpack.c.l.b16 %v105
    %v305 = vunpack.c.h.b16 %v105
    %v306 = vunpack.c.l.b16 %v106
    %v307 = vunpack.c.h.b16 %v106
    %v308 = vunpack.c.l.b16 %v107
    %v309 = vunpack.c.h.b16 %v107
    %v310 = vunpack.c.l.b16 %v108
    %v311 = vunpack.c.h.b16 %v108
    %v312 = vunpack.c.l.b16 %v109
    %v313 = vunpack.c.h.b16 %v109
    %v314 = vunpack.c.l.b16 %v110
    %v315 = vunpack.c.h.b16 %v110
    %v316 = vunpack.c.l.b16 %v111
    %v317 = vunpack.c.h.b16 %v111
    %v318 = vunpack.c.l.b16 %v112
    %v319 = vunpack.c.h.b16 %v112
    %v320 = vunpack.c.l.b16 %v113
    %v321 = vunpack.c.h.b16 %v113
    %v322 = vunpack.c.l.b16 %v114
    %v323 = vunpack.c.h.b16 %v114
    %v324 = vunpack.c.l.b16 %v115
    %v325 = vunpack.c.h.b16 %v115
    %v326 = vunpack.c.l.b16 %v116
    %v327 = vunpack.c.h.b16 %v116
    %v328 = vunpack.c.l.b16 %v117
    %v329 = vunpack.c.h.b16 %v117
    %v330 = vunpack.c.l.b16 %v118
    %v331 = vunpack.c.h.b16 %v118
    %v332 = vunpack.c.l.b16 %v119
    %v333 = vunpack.c.h.b16 %v119
    %v334 = vpack.c.b16 %v210, %v206
    %v335 = vpack.c.b16 %v211, %v207
    %v336 = vpack.c.b16 %v212, %v208
    %v337 = vpack.c.b16 %v213, %v209
    %v338 = vpack.c.b16 %v218, %v214
    %v339 = vpack.c.b16 %v219, %v215
    %v340 = vpack.c.b16 %v220, %v216
    %v341 = vpack.c.b16 %v221, %v217
    %v342 = vpack.c.b16 %v226, %v222
    %v343 = vpack.c.b16 %v227, %v223
    %v344 = vpack.c.b16 %v228, %v224
    %v345 = vpack.c.b16 %v229, %v225
    %v346 = vpack.c.b16 %v234, %v230
    %v347 = vpack.c.b16 %v235, %v231
    %v348 = vpack.c.b16 %v236, %v232
    %v349 = vpack.c.b16 %v237, %v233
    %v350 = vpack.c.b16 %v242, %v238
    %v351 = vpack.c.b16 %v243, %v239
    %v352 = vpack.c.b16 %v244, %v240
    %v353 = vpack.c.b16 %v245, %v241
    %v354 = vpack.c.b16 %v250, %v246
    %v355 = vpack.c.b16 %v251, %v247
    %v356 = vpack.c.b16 %v252, %v248
    %v357 = vpack.c.b16 %v253, %v249
    %v358 = vpack.c.b16 %v258, %v254
    %v359 = vpack.c.b16 %v259, %v255
    %v360 = vpack.c.b16 %v260, %v256
    %v361 = vpack.c.b16 %v261, %v257
    %v362 = vpack.c.b16 %v266, %v262
    %v363 = vpack.c.b16 %v267, %v263
    %v364 = vpack.c.b16 %v268, %v264
    %v365 = vpack.c.b16 %v269, %v265
    %v366 = vpack.c.b16 %v274, %v270
    %v367 = vpack.c.b16 %v275, %v271
    %v368 = vpack.c.b16 %v276, %v272
    %v369 = vpack.c.b16 %v277, %v273
    %v370 = vpack.c.b16 %v282, %v278
    %v371 = vpack.c.b16 %v283, %v279
    %v372 = vpack.c.b16 %v284, %v280
    %v373 = vpack.c.b16 %v285, %v281
    %v374 = vpack.c.b16 %v290, %v286
    %v375 = vpack.c.b16 %v291, %v287
    %v376 = vpack.c.b16 %v292, %v288
    %v377 = vpack.c.b16 %v293, %v289
    %v378 = vpack.c.b16 %v298, %v294
    %v379 = vpack.c.b16 %v299, %v295
    %v380 = vpack.c.b16 %v300, %v296
    %v381 = vpack.c.b16 %v301, %v297
    %v382 = vpack.c.b16 %v306, %v302
    %v383 = vpack.c.b16 %v307, %v303
    %v384 = vpack.c.b16 %v308, %v304
    %v385 = vpack.c.b16 %v309, %v305
    %v386 = vpack.c.b16 %v314, %v310
    %v387 = vpack.c.b16 %v315, %v311
    %v388 = vpack.c.b16 %v316, %v312
    %v389 = vpack.c.b16 %v317, %v313
    %v390 = vpack.c.b16 %v322, %v318
    %v391 = vpack.c.b16 %v323, %v319
    %v392 = vpack.c.b16 %v324, %v320
    %v393 = vpack.c.b16 %v325, %v321
    %v394 = vpack.c.b16 %v330, %v326
    %v395 = vpack.c.b16 %v331, %v327
    %v396 = vpack.c.b16 %v332, %v328
    %v397 = vpack.c.b16 %v333, %v329
    %462 = vmatprep.subr.bf16.mxu0 %v363
    %463 = vmatpush1.bf16.msra.mxu0 %v362
    %464 = vmatprep.subr.bf16.mxu0 %v359
    %465 = vmatpush1.bf16.msra.mxu0 %v358
    %466 = vmatprep.subr.bf16.mxu0 %v355
    %467 = vmatpush1.bf16.msra.mxu0 %v354
    %468 = vmatprep.subr.bf16.mxu0 %v351
    %469 = vmatpush1.bf16.msra.mxu0 %v350
    %470 = vmatprep.subr.bf16.mxu0 %v347
    %471 = vmatpush1.bf16.msra.mxu0 %v346
    %472 = vmatprep.subr.bf16.mxu0 %v343
    %473 = vmatpush1.bf16.msra.mxu0 %v342
    %474 = vmatprep.subr.bf16.mxu0 %v339
    %475 = vmatpush1.bf16.msra.mxu0 %v338
    %476 = vmatprep.subr.bf16.mxu0 %v335
    %477 = vmatpush1.bf16.msra.mxu0 %v334
    %478 = vmatprep.subr.bf16.mxu0 %v395
    %479 = vmatpush2.bf16.msra.mxu0 %v394
    %480 = vmatprep.subr.bf16.mxu0 %v391
    %481 = vmatpush2.bf16.msra.mxu0 %v390
    %482 = vmatprep.subr.bf16.mxu0 %v387
    %483 = vmatpush2.bf16.msra.mxu0 %v386
    %484 = vmatprep.subr.bf16.mxu0 %v383
    %485 = vmatpush2.bf16.msra.mxu0 %v382
    %486 = vmatprep.subr.bf16.mxu0 %v379
    %487 = vmatpush2.bf16.msra.mxu0 %v378
    %488 = vmatprep.subr.bf16.mxu0 %v375
    %489 = vmatpush2.bf16.msra.mxu0 %v374
    %490 = vmatprep.subr.bf16.mxu0 %v371
    %491 = vmatpush2.bf16.msra.mxu0 %v370
    %492 = vmatprep.subr.bf16.mxu0 %v367
    %493 = vmatpush2.bf16.msra.mxu0 %v366
    %494 = vmatprep.mubr.bf16.mxu0 %v55
    %495 = vmatmul.mubr.bf16.gmra.mxu0 0
    %v496 = vpop.f32.mrf.mxu0
    %v497 = vadd.f32 %v125, %v496
    %v498 = vpop.f32.mrf.mxu0
    %v499 = vadd.f32 %v129, %v498
    %v500 = vpop.f32.mrf.mxu0
    %v501 = vpop.f32.mrf.mxu0
    %502 = vdwg.mxu0
    %503 = vmatprep.subr.bf16.mxu0 %v365
    %504 = vmatpush1.bf16.msra.mxu0 %v364
    %505 = vmatprep.subr.bf16.mxu0 %v361
    %506 = vmatpush1.bf16.msra.mxu0 %v360
    %507 = vmatprep.subr.bf16.mxu0 %v357
    %508 = vmatpush1.bf16.msra.mxu0 %v356
    %509 = vmatprep.subr.bf16.mxu0 %v353
    %510 = vmatpush1.bf16.msra.mxu0 %v352
    %511 = vmatprep.subr.bf16.mxu0 %v349
    %512 = vmatpush1.bf16.msra.mxu0 %v348
    %513 = vmatprep.subr.bf16.mxu0 %v345
    %514 = vmatpush1.bf16.msra.mxu0 %v344
    %515 = vmatprep.subr.bf16.mxu0 %v341
    %516 = vmatpush1.bf16.msra.mxu0 %v340
    %517 = vmatprep.subr.bf16.mxu0 %v337
    %518 = vmatpush1.bf16.msra.mxu0 %v336
    %519 = vmatprep.subr.bf16.mxu0 %v397
    %520 = vmatpush2.bf16.msra.mxu0 %v396
    %521 = vmatprep.subr.bf16.mxu0 %v393
    %522 = vmatpush2.bf16.msra.mxu0 %v392
    %523 = vmatprep.subr.bf16.mxu0 %v389
    %524 = vmatpush2.bf16.msra.mxu0 %v388
    %525 = vmatprep.subr.bf16.mxu0 %v385
    %526 = vmatpush2.bf16.msra.mxu0 %v384
    %527 = vmatprep.subr.bf16.mxu0 %v381
    %528 = vmatpush2.bf16.msra.mxu0 %v380
    %529 = vmatprep.subr.bf16.mxu0 %v377
    %530 = vmatpush2.bf16.msra.mxu0 %v376
    %531 = vmatprep.subr.bf16.mxu0 %v373
    %532 = vmatpush2.bf16.msra.mxu0 %v372
    %533 = vmatprep.subr.bf16.mxu0 %v369
    %534 = vmatpush2.bf16.msra.mxu0 %v368
    %535 = vmatprep.mubr.bf16.mxu0 %v55
    %536 = vmatmul.mubr.bf16.gmra.mxu0 0
    %v537 = vpop.f32.mrf.mxu0
    %v538 = vadd.f32 %v133, %v537
    %v539 = vpop.f32.mrf.mxu0
    %v540 = vadd.f32 %v137, %v539
    %v541 = vpop.f32.mrf.mxu0
    %v542 = vpop.f32.mrf.mxu0
    %543 = vdwg.mxu0
    %v544 = vxor.u32 %v497, 2147483648
    %v545 = vmul.f32 %v544, 1.442695
    %v546 = vpow.pop %v545
    %v547 = vadd.f32 %v546, 1.0
    %v548 = vrcp.pop %v547
    %v549 = vmul.f32 1.0, %v548
    %v550 = vxor.u32 %v499, 2147483648
    %v551 = vmul.f32 %v550, 1.442695
    %v552 = vpow.pop %v551
    %v553 = vadd.f32 %v552, 1.0
    %v554 = vrcp.pop %v553
    %v555 = vmul.f32 1.0, %v554
    %v556 = vmul.f32 %v549, %v540
    %v557 = vadd.f32 %v538, %v556
    %v558 = vtanh.pop %v557
    %v559 = vsub.f32 1.0, %v555
    %v560 = vmul.f32 %v559, %v558
    %v561 = vmul.f32 %v555, 0.0
    %v562 = vadd.f32 %v560, %v561
    %563 = vst [vmem:[#allocation8] sm:$0xf] %v562
    %v564 = vpack.c.bf16 %v562, %v562
    %s565 = scalar_lea.vmem [#allocation2], 2
    %v566 = vld [vmem:[%s565] sm:$0x3]
    %v567 = vld [vmem:[#allocation5] sm:$0xff]
    %v568 = vld [vmem:[#allocation5 + $0x8] sm:$0xff]
    %v569 = vld [vmem:[#allocation5 + $0x10] sm:$0xff]
    %v570 = vld [vmem:[#allocation5 + $0x18] sm:$0xff]
    %v571 = vld [vmem:[#allocation5 + $0x20] sm:$0xff]
    %v572 = vld [vmem:[#allocation5 + $0x28] sm:$0xff]
    %v573 = vld [vmem:[#allocation5 + $0x30] sm:$0xff]
    %v574 = vld [vmem:[#allocation5 + $0x38] sm:$0xff]
    %v575 = vld [vmem:[#allocation5 + $0x40] sm:$0xff]
    %v576 = vld [vmem:[#allocation5 + $0x48] sm:$0xff]
    %v577 = vld [vmem:[#allocation5 + $0x50] sm:$0xff]
    %v578 = vld [vmem:[#allocation5 + $0x58] sm:$0xff]
    %v579 = vld [vmem:[#allocation5 + $0x60] sm:$0xff]
    %v580 = vld [vmem:[#allocation5 + $0x68] sm:$0xff]
    %v581 = vld [vmem:[#allocation5 + $0x70] sm:$0xff]
    %v582 = vld [vmem:[#allocation5 + $0x78] sm:$0xff]
    %v583 = vld [vmem:[#allocation5 + $0x80] sm:$0xff]
    %v584 = vld [vmem:[#allocation5 + $0x88] sm:$0xff]
    %v585 = vld [vmem:[#allocation5 + $0x90] sm:$0xff]
    %v586 = vld [vmem:[#allocation5 + $0x98] sm:$0xff]
    %v587 = vld [vmem:[#allocation5 + $0xa0] sm:$0xff]
    %v588 = vld [vmem:[#allocation5 + $0xa8] sm:$0xff]
    %v589 = vld [vmem:[#allocation5 + $0xb0] sm:$0xff]
    %v590 = vld [vmem:[#allocation5 + $0xb8] sm:$0xff]
    %v591 = vld [vmem:[#allocation5 + $0xc0] sm:$0xff]
    %v592 = vld [vmem:[#allocation5 + $0xc8] sm:$0xff]
    %v593 = vld [vmem:[#allocation5 + $0xd0] sm:$0xff]
    %v594 = vld [vmem:[#allocation5 + $0xd8] sm:$0xff]
    %v595 = vld [vmem:[#allocation5 + $0xe0] sm:$0xff]
    %v596 = vld [vmem:[#allocation5 + $0xe8] sm:$0xff]
    %v597 = vld [vmem:[#allocation5 + $0xf0] sm:$0xff]
    %v598 = vld [vmem:[#allocation5 + $0xf8] sm:$0xff]
    %v599 = vld [vmem:[#allocation5 + $0x100] sm:$0xff]
    %v600 = vld [vmem:[#allocation5 + $0x108] sm:$0xff]
    %v601 = vld [vmem:[#allocation5 + $0x110] sm:$0xff]
    %v602 = vld [vmem:[#allocation5 + $0x118] sm:$0xff]
    %v603 = vld [vmem:[#allocation5 + $0x120] sm:$0xff]
    %v604 = vld [vmem:[#allocation5 + $0x128] sm:$0xff]
    %v605 = vld [vmem:[#allocation5 + $0x130] sm:$0xff]
    %v606 = vld [vmem:[#allocation5 + $0x138] sm:$0xff]
    %v607 = vld [vmem:[#allocation5 + $0x140] sm:$0xff]
    %v608 = vld [vmem:[#allocation5 + $0x148] sm:$0xff]
    %v609 = vld [vmem:[#allocation5 + $0x150] sm:$0xff]
    %v610 = vld [vmem:[#allocation5 + $0x158] sm:$0xff]
    %v611 = vld [vmem:[#allocation5 + $0x160] sm:$0xff]
    %v612 = vld [vmem:[#allocation5 + $0x168] sm:$0xff]
    %v613 = vld [vmem:[#allocation5 + $0x170] sm:$0xff]
    %v614 = vld [vmem:[#allocation5 + $0x178] sm:$0xff]
    %v615 = vld [vmem:[#allocation5 + $0x180] sm:$0xff]
    %v616 = vld [vmem:[#allocation5 + $0x188] sm:$0xff]
    %v617 = vld [vmem:[#allocation5 + $0x190] sm:$0xff]
    %v618 = vld [vmem:[#allocation5 + $0x198] sm:$0xff]
    %v619 = vld [vmem:[#allocation5 + $0x1a0] sm:$0xff]
    %v620 = vld [vmem:[#allocation5 + $0x1a8] sm:$0xff]
    %v621 = vld [vmem:[#allocation5 + $0x1b0] sm:$0xff]
    %v622 = vld [vmem:[#allocation5 + $0x1b8] sm:$0xff]
    %v623 = vld [vmem:[#allocation5 + $0x1c0] sm:$0xff]
    %v624 = vld [vmem:[#allocation5 + $0x1c8] sm:$0xff]
    %v625 = vld [vmem:[#allocation5 + $0x1d0] sm:$0xff]
    %v626 = vld [vmem:[#allocation5 + $0x1d8] sm:$0xff]
    %v627 = vld [vmem:[#allocation5 + $0x1e0] sm:$0xff]
    %v628 = vld [vmem:[#allocation5 + $0x1e8] sm:$0xff]
    %v629 = vld [vmem:[#allocation5 + $0x1f0] sm:$0xff]
    %v630 = vld [vmem:[#allocation5 + $0x1f8] sm:$0xff]
    %v631 = vld [vmem:[#allocation7] sm:$0xf]
    %v633 = vlaneseq
    %v634 = vshrl.u32 %v633, 7
    %v635 = vsub.s32 0, %v634
    %v636 = vrot.slane %v631, %v635
    %v637 = vlaneseq
    %v638 = vshrl.u32 %v637, 7
    %v639 = vsub.s32 1, %v638
    %v640 = vrot.slane %v631, %v639
    %v641 = vlaneseq
    %v642 = vshrl.u32 %v641, 7
    %v643 = vsub.s32 2, %v642
    %v644 = vrot.slane %v631, %v643
    %v645 = vlaneseq
    %v646 = vshrl.u32 %v645, 7
    %v647 = vsub.s32 3, %v646
    %v648 = vrot.slane %v631, %v647
    %v717 = vunpack.c.l.b16 %v567
    %v718 = vunpack.c.h.b16 %v567
    %v719 = vunpack.c.l.b16 %v568
    %v720 = vunpack.c.h.b16 %v568
    %v721 = vunpack.c.l.b16 %v569
    %v722 = vunpack.c.h.b16 %v569
    %v723 = vunpack.c.l.b16 %v570
    %v724 = vunpack.c.h.b16 %v570
    %v725 = vunpack.c.l.b16 %v571
    %v726 = vunpack.c.h.b16 %v571
    %v727 = vunpack.c.l.b16 %v572
    %v728 = vunpack.c.h.b16 %v572
    %v729 = vunpack.c.l.b16 %v573
    %v730 = vunpack.c.h.b16 %v573
    %v731 = vunpack.c.l.b16 %v574
    %v732 = vunpack.c.h.b16 %v574
    %v733 = vunpack.c.l.b16 %v575
    %v734 = vunpack.c.h.b16 %v575
    %v735 = vunpack.c.l.b16 %v576
    %v736 = vunpack.c.h.b16 %v576
    %v737 = vunpack.c.l.b16 %v577
    %v738 = vunpack.c.h.b16 %v577
    %v739 = vunpack.c.l.b16 %v578
    %v740 = vunpack.c.h.b16 %v578
    %v741 = vunpack.c.l.b16 %v579
    %v742 = vunpack.c.h.b16 %v579
    %v743 = vunpack.c.l.b16 %v580
    %v744 = vunpack.c.h.b16 %v580
    %v745 = vunpack.c.l.b16 %v581
    %v746 = vunpack.c.h.b16 %v581
    %v747 = vunpack.c.l.b16 %v582
    %v748 = vunpack.c.h.b16 %v582
    %v749 = vunpack.c.l.b16 %v583
    %v750 = vunpack.c.h.b16 %v583
    %v751 = vunpack.c.l.b16 %v584
    %v752 = vunpack.c.h.b16 %v584
    %v753 = vunpack.c.l.b16 %v585
    %v754 = vunpack.c.h.b16 %v585
    %v755 = vunpack.c.l.b16 %v586
    %v756 = vunpack.c.h.b16 %v586
    %v757 = vunpack.c.l.b16 %v587
    %v758 = vunpack.c.h.b16 %v587
    %v759 = vunpack.c.l.b16 %v588
    %v760 = vunpack.c.h.b16 %v588
    %v761 = vunpack.c.l.b16 %v589
    %v762 = vunpack.c.h.b16 %v589
    %v763 = vunpack.c.l.b16 %v590
    %v764 = vunpack.c.h.b16 %v590
    %v765 = vunpack.c.l.b16 %v591
    %v766 = vunpack.c.h.b16 %v591
    %v767 = vunpack.c.l.b16 %v592
    %v768 = vunpack.c.h.b16 %v592
    %v769 = vunpack.c.l.b16 %v593
    %v770 = vunpack.c.h.b16 %v593
    %v771 = vunpack.c.l.b16 %v594
    %v772 = vunpack.c.h.b16 %v594
    %v773 = vunpack.c.l.b16 %v595
    %v774 = vunpack.c.h.b16 %v595
    %v775 = vunpack.c.l.b16 %v596
    %v776 = vunpack.c.h.b16 %v596
    %v777 = vunpack.c.l.b16 %v597
    %v778 = vunpack.c.h.b16 %v597
    %v779 = vunpack.c.l.b16 %v598
    %v780 = vunpack.c.h.b16 %v598
    %v781 = vunpack.c.l.b16 %v599
    %v782 = vunpack.c.h.b16 %v599
    %v783 = vunpack.c.l.b16 %v600
    %v784 = vunpack.c.h.b16 %v600
    %v785 = vunpack.c.l.b16 %v601
    %v786 = vunpack.c.h.b16 %v601
    %v787 = vunpack.c.l.b16 %v602
    %v788 = vunpack.c.h.b16 %v602
    %v789 = vunpack.c.l.b16 %v603
    %v790 = vunpack.c.h.b16 %v603
    %v791 = vunpack.c.l.b16 %v604
    %v792 = vunpack.c.h.b16 %v604
    %v793 = vunpack.c.l.b16 %v605
    %v794 = vunpack.c.h.b16 %v605
    %v795 = vunpack.c.l.b16 %v606
    %v796 = vunpack.c.h.b16 %v606
    %v797 = vunpack.c.l.b16 %v607
    %v798 = vunpack.c.h.b16 %v607
    %v799 = vunpack.c.l.b16 %v608
    %v800 = vunpack.c.h.b16 %v608
    %v801 = vunpack.c.l.b16 %v609
    %v802 = vunpack.c.h.b16 %v609
    %v803 = vunpack.c.l.b16 %v610
    %v804 = vunpack.c.h.b16 %v610
    %v805 = vunpack.c.l.b16 %v611
    %v806 = vunpack.c.h.b16 %v611
    %v807 = vunpack.c.l.b16 %v612
    %v808 = vunpack.c.h.b16 %v612
    %v809 = vunpack.c.l.b16 %v613
    %v810 = vunpack.c.h.b16 %v613
    %v811 = vunpack.c.l.b16 %v614
    %v812 = vunpack.c.h.b16 %v614
    %v813 = vunpack.c.l.b16 %v615
    %v814 = vunpack.c.h.b16 %v615
    %v815 = vunpack.c.l.b16 %v616
    %v816 = vunpack.c.h.b16 %v616
    %v817 = vunpack.c.l.b16 %v617
    %v818 = vunpack.c.h.b16 %v617
    %v819 = vunpack.c.l.b16 %v618
    %v820 = vunpack.c.h.b16 %v618
    %v821 = vunpack.c.l.b16 %v619
    %v822 = vunpack.c.h.b16 %v619
    %v823 = vunpack.c.l.b16 %v620
    %v824 = vunpack.c.h.b16 %v620
    %v825 = vunpack.c.l.b16 %v621
    %v826 = vunpack.c.h.b16 %v621
    %v827 = vunpack.c.l.b16 %v622
    %v828 = vunpack.c.h.b16 %v622
    %v829 = vunpack.c.l.b16 %v623
    %v830 = vunpack.c.h.b16 %v623
    %v831 = vunpack.c.l.b16 %v624
    %v832 = vunpack.c.h.b16 %v624
    %v833 = vunpack.c.l.b16 %v625
    %v834 = vunpack.c.h.b16 %v625
    %v835 = vunpack.c.l.b16 %v626
    %v836 = vunpack.c.h.b16 %v626
    %v837 = vunpack.c.l.b16 %v627
    %v838 = vunpack.c.h.b16 %v627
    %v839 = vunpack.c.l.b16 %v628
    %v840 = vunpack.c.h.b16 %v628
    %v841 = vunpack.c.l.b16 %v629
    %v842 = vunpack.c.h.b16 %v629
    %v843 = vunpack.c.l.b16 %v630
    %v844 = vunpack.c.h.b16 %v630
    %v845 = vpack.c.b16 %v721, %v717
    %v846 = vpack.c.b16 %v722, %v718
    %v847 = vpack.c.b16 %v723, %v719
    %v848 = vpack.c.b16 %v724, %v720
    %v849 = vpack.c.b16 %v729, %v725
    %v850 = vpack.c.b16 %v730, %v726
    %v851 = vpack.c.b16 %v731, %v727
    %v852 = vpack.c.b16 %v732, %v728
    %v853 = vpack.c.b16 %v737, %v733
    %v854 = vpack.c.b16 %v738, %v734
    %v855 = vpack.c.b16 %v739, %v735
    %v856 = vpack.c.b16 %v740, %v736
    %v857 = vpack.c.b16 %v745, %v741
    %v858 = vpack.c.b16 %v746, %v742
    %v859 = vpack.c.b16 %v747, %v743
    %v860 = vpack.c.b16 %v748, %v744
    %v861 = vpack.c.b16 %v753, %v749
    %v862 = vpack.c.b16 %v754, %v750
    %v863 = vpack.c.b16 %v755, %v751
    %v864 = vpack.c.b16 %v756, %v752
    %v865 = vpack.c.b16 %v761, %v757
    %v866 = vpack.c.b16 %v762, %v758
    %v867 = vpack.c.b16 %v763, %v759
    %v868 = vpack.c.b16 %v764, %v760
    %v869 = vpack.c.b16 %v769, %v765
    %v870 = vpack.c.b16 %v770, %v766
    %v871 = vpack.c.b16 %v771, %v767
    %v872 = vpack.c.b16 %v772, %v768
    %v873 = vpack.c.b16 %v777, %v773
    %v874 = vpack.c.b16 %v778, %v774
    %v875 = vpack.c.b16 %v779, %v775
    %v876 = vpack.c.b16 %v780, %v776
    %v877 = vpack.c.b16 %v785, %v781
    %v878 = vpack.c.b16 %v786, %v782
    %v879 = vpack.c.b16 %v787, %v783
    %v880 = vpack.c.b16 %v788, %v784
    %v881 = vpack.c.b16 %v793, %v789
    %v882 = vpack.c.b16 %v794, %v790
    %v883 = vpack.c.b16 %v795, %v791
    %v884 = vpack.c.b16 %v796, %v792
    %v885 = vpack.c.b16 %v801, %v797
    %v886 = vpack.c.b16 %v802, %v798
    %v887 = vpack.c.b16 %v803, %v799
    %v888 = vpack.c.b16 %v804, %v800
    %v889 = vpack.c.b16 %v809, %v805
    %v890 = vpack.c.b16 %v810, %v806
    %v891 = vpack.c.b16 %v811, %v807
    %v892 = vpack.c.b16 %v812, %v808
    %v893 = vpack.c.b16 %v817, %v813
    %v894 = vpack.c.b16 %v818, %v814
    %v895 = vpack.c.b16 %v819, %v815
    %v896 = vpack.c.b16 %v820, %v816
    %v897 = vpack.c.b16 %v825, %v821
    %v898 = vpack.c.b16 %v826, %v822
    %v899 = vpack.c.b16 %v827, %v823
    %v900 = vpack.c.b16 %v828, %v824
    %v901 = vpack.c.b16 %v833, %v829
    %v902 = vpack.c.b16 %v834, %v830
    %v903 = vpack.c.b16 %v835, %v831
    %v904 = vpack.c.b16 %v836, %v832
    %v905 = vpack.c.b16 %v841, %v837
    %v906 = vpack.c.b16 %v842, %v838
    %v907 = vpack.c.b16 %v843, %v839
    %v908 = vpack.c.b16 %v844, %v840
    %973 = vmatprep.subr.bf16.mxu0 %v874
    %974 = vmatpush1.bf16.msra.mxu0 %v873
    %975 = vmatprep.subr.bf16.mxu0 %v870
    %976 = vmatpush1.bf16.msra.mxu0 %v869
    %977 = vmatprep.subr.bf16.mxu0 %v866
    %978 = vmatpush1.bf16.msra.mxu0 %v865
    %979 = vmatprep.subr.bf16.mxu0 %v862
    %980 = vmatpush1.bf16.msra.mxu0 %v861
    %981 = vmatprep.subr.bf16.mxu0 %v858
    %982 = vmatpush1.bf16.msra.mxu0 %v857
    %983 = vmatprep.subr.bf16.mxu0 %v854
    %984 = vmatpush1.bf16.msra.mxu0 %v853
    %985 = vmatprep.subr.bf16.mxu0 %v850
    %986 = vmatpush1.bf16.msra.mxu0 %v849
    %987 = vmatprep.subr.bf16.mxu0 %v846
    %988 = vmatpush1.bf16.msra.mxu0 %v845
    %989 = vmatprep.subr.bf16.mxu0 %v906
    %990 = vmatpush2.bf16.msra.mxu0 %v905
    %991 = vmatprep.subr.bf16.mxu0 %v902
    %992 = vmatpush2.bf16.msra.mxu0 %v901
    %993 = vmatprep.subr.bf16.mxu0 %v898
    %994 = vmatpush2.bf16.msra.mxu0 %v897
    %995 = vmatprep.subr.bf16.mxu0 %v894
    %996 = vmatpush2.bf16.msra.mxu0 %v893
    %997 = vmatprep.subr.bf16.mxu0 %v890
    %998 = vmatpush2.bf16.msra.mxu0 %v889
    %999 = vmatprep.subr.bf16.mxu0 %v886
    %1000 = vmatpush2.bf16.msra.mxu0 %v885
    %1001 = vmatprep.subr.bf16.mxu0 %v882
    %1002 = vmatpush2.bf16.msra.mxu0 %v881
    %1003 = vmatprep.subr.bf16.mxu0 %v878
    %1004 = vmatpush2.bf16.msra.mxu0 %v877
    %1005 = vmatprep.mubr.bf16.mxu0 %v566
    %1006 = vmatmul.mubr.bf16.gmra.mxu0 %v564
    %v1007 = vpop.f32.mrf.mxu0
    %v1008 = vadd.f32 %v636, %v1007
    %v1009 = vpop.f32.mrf.mxu0
    %v1010 = vadd.f32 %v640, %v1009
    %v1011 = vpop.f32.mrf.mxu0
    %v1012 = vpop.f32.mrf.mxu0
    %1013 = vdwg.mxu0
    %1014 = vmatprep.subr.bf16.mxu0 %v876
    %1015 = vmatpush1.bf16.msra.mxu0 %v875
    %1016 = vmatprep.subr.bf16.mxu0 %v872
    %1017 = vmatpush1.bf16.msra.mxu0 %v871
    %1018 = vmatprep.subr.bf16.mxu0 %v868
    %1019 = vmatpush1.bf16.msra.mxu0 %v867
    %1020 = vmatprep.subr.bf16.mxu0 %v864
    %1021 = vmatpush1.bf16.msra.mxu0 %v863
    %1022 = vmatprep.subr.bf16.mxu0 %v860
    %1023 = vmatpush1.bf16.msra.mxu0 %v859
    %1024 = vmatprep.subr.bf16.mxu0 %v856
    %1025 = vmatpush1.bf16.msra.mxu0 %v855
    %1026 = vmatprep.subr.bf16.mxu0 %v852
    %1027 = vmatpush1.bf16.msra.mxu0 %v851
    %1028 = vmatprep.subr.bf16.mxu0 %v848
    %1029 = vmatpush1.bf16.msra.mxu0 %v847
    %1030 = vmatprep.subr.bf16.mxu0 %v908
    %1031 = vmatpush2.bf16.msra.mxu0 %v907
    %1032 = vmatprep.subr.bf16.mxu0 %v904
    %1033 = vmatpush2.bf16.msra.mxu0 %v903
    %1034 = vmatprep.subr.bf16.mxu0 %v900
    %1035 = vmatpush2.bf16.msra.mxu0 %v899
    %1036 = vmatprep.subr.bf16.mxu0 %v896
    %1037 = vmatpush2.bf16.msra.mxu0 %v895
    %1038 = vmatprep.subr.bf16.mxu0 %v892
    %1039 = vmatpush2.bf16.msra.mxu0 %v891
    %1040 = vmatprep.subr.bf16.mxu0 %v888
    %1041 = vmatpush2.bf16.msra.mxu0 %v887
    %1042 = vmatprep.subr.bf16.mxu0 %v884
    %1043 = vmatpush2.bf16.msra.mxu0 %v883
    %1044 = vmatprep.subr.bf16.mxu0 %v880
    %1045 = vmatpush2.bf16.msra.mxu0 %v879
    %1046 = vmatprep.mubr.bf16.mxu0 %v566
    %1047 = vmatmul.mubr.bf16.gmra.mxu0 %v564
    %v1048 = vpop.f32.mrf.mxu0
    %v1049 = vadd.f32 %v644, %v1048
    %v1050 = vpop.f32.mrf.mxu0
    %v1051 = vadd.f32 %v648, %v1050
    %v1052 = vpop.f32.mrf.mxu0
    %v1053 = vpop.f32.mrf.mxu0
    %1054 = vdwg.mxu0
    %v1055 = vxor.u32 %v1008, 2147483648
    %v1056 = vmul.f32 %v1055, 1.442695
    %v1057 = vpow.pop %v1056
    %v1058 = vadd.f32 %v1057, 1.0
    %v1059 = vrcp.pop %v1058
    %v1060 = vmul.f32 1.0, %v1059
    %v1061 = vxor.u32 %v1010, 2147483648
    %v1062 = vmul.f32 %v1061, 1.442695
    %v1063 = vpow.pop %v1062
    %v1064 = vadd.f32 %v1063, 1.0
    %v1065 = vrcp.pop %v1064
    %v1066 = vmul.f32 1.0, %v1065
    %v1067 = vmul.f32 %v1060, %v1051
    %v1068 = vadd.f32 %v1049, %v1067
    %v1069 = vtanh.pop %v1068
    %v1070 = vsub.f32 1.0, %v1066
    %v1071 = vmul.f32 %v1070, %v1069
    %v1072 = vmul.f32 %v1066, %v562
    %v1073 = vadd.f32 %v1071, %v1072
    %s1074 = scalar_lea.vmem [#allocation8], 4
    %1075 = vst [vmem:[%s1074] sm:$0xf] %v1073
    %v1076 = vpack.c.bf16 %v1073, %v1073
    %s1077 = scalar_lea.vmem [#allocation2], 4
    %v1078 = vld [vmem:[%s1077] sm:$0x3]
    %v1079 = vld [vmem:[#allocation5] sm:$0xff]
    %v1080 = vld [vmem:[#allocation5 + $0x8] sm:$0xff]
    %v1081 = vld [vmem:[#allocation5 + $0x10] sm:$0xff]
    %v1082 = vld [vmem:[#allocation5 + $0x18] sm:$0xff]
    %v1083 = vld [vmem:[#allocation5 + $0x20] sm:$0xff]
    %v1084 = vld [vmem:[#allocation5 + $0x28] sm:$0xff]
    %v1085 = vld [vmem:[#allocation5 + $0x30] sm:$0xff]
    %v1086 = vld [vmem:[#allocation5 + $0x38] sm:$0xff]
    %v1087 = vld [vmem:[#allocation5 + $0x40] sm:$0xff]
    %v1088 = vld [vmem:[#allocation5 + $0x48] sm:$0xff]
    %v1089 = vld [vmem:[#allocation5 + $0x50] sm:$0xff]
    %v1090 = vld [vmem:[#allocation5 + $0x58] sm:$0xff]
    %v1091 = vld [vmem:[#allocation5 + $0x60] sm:$0xff]
    %v1092 = vld [vmem:[#allocation5 + $0x68] sm:$0xff]
    %v1093 = vld [vmem:[#allocation5 + $0x70] sm:$0xff]
    %v1094 = vld [vmem:[#allocation5 + $0x78] sm:$0xff]
    %v1095 = vld [vmem:[#allocation5 + $0x80] sm:$0xff]
    %v1096 = vld [vmem:[#allocation5 + $0x88] sm:$0xff]
    %v1097 = vld [vmem:[#allocation5 + $0x90] sm:$0xff]
    %v1098 = vld [vmem:[#allocation5 + $0x98] sm:$0xff]
    %v1099 = vld [vmem:[#allocation5 + $0xa0] sm:$0xff]
    %v1100 = vld [vmem:[#allocation5 + $0xa8] sm:$0xff]
    %v1101 = vld [vmem:[#allocation5 + $0xb0] sm:$0xff]
    %v1102 = vld [vmem:[#allocation5 + $0xb8] sm:$0xff]
    %v1103 = vld [vmem:[#allocation5 + $0xc0] sm:$0xff]
    %v1104 = vld [vmem:[#allocation5 + $0xc8] sm:$0xff]
    %v1105 = vld [vmem:[#allocation5 + $0xd0] sm:$0xff]
    %v1106 = vld [vmem:[#allocation5 + $0xd8] sm:$0xff]
    %v1107 = vld [vmem:[#allocation5 + $0xe0] sm:$0xff]
    %v1108 = vld [vmem:[#allocation5 + $0xe8] sm:$0xff]
    %v1109 = vld [vmem:[#allocation5 + $0xf0] sm:$0xff]
    %v1110 = vld [vmem:[#allocation5 + $0xf8] sm:$0xff]
    %v1111 = vld [vmem:[#allocation5 + $0x100] sm:$0xff]
    %v1112 = vld [vmem:[#allocation5 + $0x108] sm:$0xff]
    %v1113 = vld [vmem:[#allocation5 + $0x110] sm:$0xff]
    %v1114 = vld [vmem:[#allocation5 + $0x118] sm:$0xff]
    %v1115 = vld [vmem:[#allocation5 + $0x120] sm:$0xff]
    %v1116 = vld [vmem:[#allocation5 + $0x128] sm:$0xff]
    %v1117 = vld [vmem:[#allocation5 + $0x130] sm:$0xff]
    %v1118 = vld [vmem:[#allocation5 + $0x138] sm:$0xff]
    %v1119 = vld [vmem:[#allocation5 + $0x140] sm:$0xff]
    %v1120 = vld [vmem:[#allocation5 + $0x148] sm:$0xff]
    %v1121 = vld [vmem:[#allocation5 + $0x150] sm:$0xff]
    %v1122 = vld [vmem:[#allocation5 + $0x158] sm:$0xff]
    %v1123 = vld [vmem:[#allocation5 + $0x160] sm:$0xff]
    %v1124 = vld [vmem:[#allocation5 + $0x168] sm:$0xff]
    %v1125 = vld [vmem:[#allocation5 + $0x170] sm:$0xff]
    %v1126 = vld [vmem:[#allocation5 + $0x178] sm:$0xff]
    %v1127 = vld [vmem:[#allocation5 + $0x180] sm:$0xff]
    %v1128 = vld [vmem:[#allocation5 + $0x188] sm:$0xff]
    %v1129 = vld [vmem:[#allocation5 + $0x190] sm:$0xff]
    %v1130 = vld [vmem:[#allocation5 + $0x198] sm:$0xff]
    %v1131 = vld [vmem:[#allocation5 + $0x1a0] sm:$0xff]
    %v1132 = vld [vmem:[#allocation5 + $0x1a8] sm:$0xff]
    %v1133 = vld [vmem:[#allocation5 + $0x1b0] sm:$0xff]
    %v1134 = vld [vmem:[#allocation5 + $0x1b8] sm:$0xff]
    %v1135 = vld [vmem:[#allocation5 + $0x1c0] sm:$0xff]
    %v1136 = vld [vmem:[#allocation5 + $0x1c8] sm:$0xff]
    %v1137 = vld [vmem:[#allocation5 + $0x1d0] sm:$0xff]
    %v1138 = vld [vmem:[#allocation5 + $0x1d8] sm:$0xff]
    %v1139 = vld [vmem:[#allocation5 + $0x1e0] sm:$0xff]
    %v1140 = vld [vmem:[#allocation5 + $0x1e8] sm:$0xff]
    %v1141 = vld [vmem:[#allocation5 + $0x1f0] sm:$0xff]
    %v1142 = vld [vmem:[#allocation5 + $0x1f8] sm:$0xff]
    %v1143 = vld [vmem:[#allocation7] sm:$0xf]
    %v1145 = vlaneseq
    %v1146 = vshrl.u32 %v1145, 7
    %v1147 = vsub.s32 0, %v1146
    %v1148 = vrot.slane %v1143, %v1147
    %v1149 = vlaneseq
    %v1150 = vshrl.u32 %v1149, 7
    %v1151 = vsub.s32 1, %v1150
    %v1152 = vrot.slane %v1143, %v1151
    %v1153 = vlaneseq
    %v1154 = vshrl.u32 %v1153, 7
    %v1155 = vsub.s32 2, %v1154
    %v1156 = vrot.slane %v1143, %v1155
    %v1157 = vlaneseq
    %v1158 = vshrl.u32 %v1157, 7
    %v1159 = vsub.s32 3, %v1158
    %v1160 = vrot.slane %v1143, %v1159
    %v1229 = vunpack.c.l.b16 %v1079
    %v1230 = vunpack.c.h.b16 %v1079
    %v1231 = vunpack.c.l.b16 %v1080
    %v1232 = vunpack.c.h.b16 %v1080
    %v1233 = vunpack.c.l.b16 %v1081
    %v1234 = vunpack.c.h.b16 %v1081
    %v1235 = vunpack.c.l.b16 %v1082
    %v1236 = vunpack.c.h.b16 %v1082
    %v1237 = vunpack.c.l.b16 %v1083
    %v1238 = vunpack.c.h.b16 %v1083
    %v1239 = vunpack.c.l.b16 %v1084
    %v1240 = vunpack.c.h.b16 %v1084
    %v1241 = vunpack.c.l.b16 %v1085
    %v1242 = vunpack.c.h.b16 %v1085
    %v1243 = vunpack.c.l.b16 %v1086
    %v1244 = vunpack.c.h.b16 %v1086
    %v1245 = vunpack.c.l.b16 %v1087
    %v1246 = vunpack.c.h.b16 %v1087
    %v1247 = vunpack.c.l.b16 %v1088
    %v1248 = vunpack.c.h.b16 %v1088
    %v1249 = vunpack.c.l.b16 %v1089
    %v1250 = vunpack.c.h.b16 %v1089
    %v1251 = vunpack.c.l.b16 %v1090
    %v1252 = vunpack.c.h.b16 %v1090
    %v1253 = vunpack.c.l.b16 %v1091
    %v1254 = vunpack.c.h.b16 %v1091
    %v1255 = vunpack.c.l.b16 %v1092
    %v1256 = vunpack.c.h.b16 %v1092
    %v1257 = vunpack.c.l.b16 %v1093
    %v1258 = vunpack.c.h.b16 %v1093
    %v1259 = vunpack.c.l.b16 %v1094
    %v1260 = vunpack.c.h.b16 %v1094
    %v1261 = vunpack.c.l.b16 %v1095
    %v1262 = vunpack.c.h.b16 %v1095
    %v1263 = vunpack.c.l.b16 %v1096
    %v1264 = vunpack.c.h.b16 %v1096
    %v1265 = vunpack.c.l.b16 %v1097
    %v1266 = vunpack.c.h.b16 %v1097
    %v1267 = vunpack.c.l.b16 %v1098
    %v1268 = vunpack.c.h.b16 %v1098
    %v1269 = vunpack.c.l.b16 %v1099
    %v1270 = vunpack.c.h.b16 %v1099
    %v1271 = vunpack.c.l.b16 %v1100
    %v1272 = vunpack.c.h.b16 %v1100
    %v1273 = vunpack.c.l.b16 %v1101
    %v1274 = vunpack.c.h.b16 %v1101
    %v1275 = vunpack.c.l.b16 %v1102
    %v1276 = vunpack.c.h.b16 %v1102
    %v1277 = vunpack.c.l.b16 %v1103
    %v1278 = vunpack.c.h.b16 %v1103
    %v1279 = vunpack.c.l.b16 %v1104
    %v1280 = vunpack.c.h.b16 %v1104
    %v1281 = vunpack.c.l.b16 %v1105
    %v1282 = vunpack.c.h.b16 %v1105
    %v1283 = vunpack.c.l.b16 %v1106
    %v1284 = vunpack.c.h.b16 %v1106
    %v1285 = vunpack.c.l.b16 %v1107
    %v1286 = vunpack.c.h.b16 %v1107
    %v1287 = vunpack.c.l.b16 %v1108
    %v1288 = vunpack.c.h.b16 %v1108
    %v1289 = vunpack.c.l.b16 %v1109
    %v1290 = vunpack.c.h.b16 %v1109
    %v1291 = vunpack.c.l.b16 %v1110
    %v1292 = vunpack.c.h.b16 %v1110
    %v1293 = vunpack.c.l.b16 %v1111
    %v1294 = vunpack.c.h.b16 %v1111
    %v1295 = vunpack.c.l.b16 %v1112
    %v1296 = vunpack.c.h.b16 %v1112
    %v1297 = vunpack.c.l.b16 %v1113
    %v1298 = vunpack.c.h.b16 %v1113
    %v1299 = vunpack.c.l.b16 %v1114
    %v1300 = vunpack.c.h.b16 %v1114
    %v1301 = vunpack.c.l.b16 %v1115
    %v1302 = vunpack.c.h.b16 %v1115
    %v1303 = vunpack.c.l.b16 %v1116
    %v1304 = vunpack.c.h.b16 %v1116
    %v1305 = vunpack.c.l.b16 %v1117
    %v1306 = vunpack.c.h.b16 %v1117
    %v1307 = vunpack.c.l.b16 %v1118
    %v1308 = vunpack.c.h.b16 %v1118
    %v1309 = vunpack.c.l.b16 %v1119
    %v1310 = vunpack.c.h.b16 %v1119
    %v1311 = vunpack.c.l.b16 %v1120
    %v1312 = vunpack.c.h.b16 %v1120
    %v1313 = vunpack.c.l.b16 %v1121
    %v1314 = vunpack.c.h.b16 %v1121
    %v1315 = vunpack.c.l.b16 %v1122
    %v1316 = vunpack.c.h.b16 %v1122
    %v1317 = vunpack.c.l.b16 %v1123
    %v1318 = vunpack.c.h.b16 %v1123
    %v1319 = vunpack.c.l.b16 %v1124
    %v1320 = vunpack.c.h.b16 %v1124
    %v1321 = vunpack.c.l.b16 %v1125
    %v1322 = vunpack.c.h.b16 %v1125
    %v1323 = vunpack.c.l.b16 %v1126
    %v1324 = vunpack.c.h.b16 %v1126
    %v1325 = vunpack.c.l.b16 %v1127
    %v1326 = vunpack.c.h.b16 %v1127
    %v1327 = vunpack.c.l.b16 %v1128
    %v1328 = vunpack.c.h.b16 %v1128
    %v1329 = vunpack.c.l.b16 %v1129
    %v1330 = vunpack.c.h.b16 %v1129
    %v1331 = vunpack.c.l.b16 %v1130
    %v1332 = vunpack.c.h.b16 %v1130
    %v1333 = vunpack.c.l.b16 %v1131
    %v1334 = vunpack.c.h.b16 %v1131
    %v1335 = vunpack.c.l.b16 %v1132
    %v1336 = vunpack.c.h.b16 %v1132
    %v1337 = vunpack.c.l.b16 %v1133
    %v1338 = vunpack.c.h.b16 %v1133
    %v1339 = vunpack.c.l.b16 %v1134
    %v1340 = vunpack.c.h.b16 %v1134
    %v1341 = vunpack.c.l.b16 %v1135
    %v1342 = vunpack.c.h.b16 %v1135
    %v1343 = vunpack.c.l.b16 %v1136
    %v1344 = vunpack.c.h.b16 %v1136
    %v1345 = vunpack.c.l.b16 %v1137
    %v1346 = vunpack.c.h.b16 %v1137
    %v1347 = vunpack.c.l.b16 %v1138
    %v1348 = vunpack.c.h.b16 %v1138
    %v1349 = vunpack.c.l.b16 %v1139
    %v1350 = vunpack.c.h.b16 %v1139
    %v1351 = vunpack.c.l.b16 %v1140
    %v1352 = vunpack.c.h.b16 %v1140
    %v1353 = vunpack.c.l.b16 %v1141
    %v1354 = vunpack.c.h.b16 %v1141
    %v1355 = vunpack.c.l.b16 %v1142
    %v1356 = vunpack.c.h.b16 %v1142
    %v1357 = vpack.c.b16 %v1233, %v1229
    %v1358 = vpack.c.b16 %v1234, %v1230
    %v1359 = vpack.c.b16 %v1235, %v1231
    %v1360 = vpack.c.b16 %v1236, %v1232
    %v1361 = vpack.c.b16 %v1241, %v1237
    %v1362 = vpack.c.b16 %v1242, %v1238
    %v1363 = vpack.c.b16 %v1243, %v1239
    %v1364 = vpack.c.b16 %v1244, %v1240
    %v1365 = vpack.c.b16 %v1249, %v1245
    %v1366 = vpack.c.b16 %v1250, %v1246
    %v1367 = vpack.c.b16 %v1251, %v1247
    %v1368 = vpack.c.b16 %v1252, %v1248
    %v1369 = vpack.c.b16 %v1257, %v1253
    %v1370 = vpack.c.b16 %v1258, %v1254
    %v1371 = vpack.c.b16 %v1259, %v1255
    %v1372 = vpack.c.b16 %v1260, %v1256
    %v1373 = vpack.c.b16 %v1265, %v1261
    %v1374 = vpack.c.b16 %v1266, %v1262
    %v1375 = vpack.c.b16 %v1267, %v1263
    %v1376 = vpack.c.b16 %v1268, %v1264
    %v1377 = vpack.c.b16 %v1273, %v1269
    %v1378 = vpack.c.b16 %v1274, %v1270
    %v1379 = vpack.c.b16 %v1275, %v1271
    %v1380 = vpack.c.b16 %v1276, %v1272
    %v1381 = vpack.c.b16 %v1281, %v1277
    %v1382 = vpack.c.b16 %v1282, %v1278
    %v1383 = vpack.c.b16 %v1283, %v1279
    %v1384 = vpack.c.b16 %v1284, %v1280
    %v1385 = vpack.c.b16 %v1289, %v1285
    %v1386 = vpack.c.b16 %v1290, %v1286
    %v1387 = vpack.c.b16 %v1291, %v1287
    %v1388 = vpack.c.b16 %v1292, %v1288
    %v1389 = vpack.c.b16 %v1297, %v1293
    %v1390 = vpack.c.b16 %v1298, %v1294
    %v1391 = vpack.c.b16 %v1299, %v1295
    %v1392 = vpack.c.b16 %v1300, %v1296
    %v1393 = vpack.c.b16 %v1305, %v1301
    %v1394 = vpack.c.b16 %v1306, %v1302
    %v1395 = vpack.c.b16 %v1307, %v1303
    %v1396 = vpack.c.b16 %v1308, %v1304
    %v1397 = vpack.c.b16 %v1313, %v1309
    %v1398 = vpack.c.b16 %v1314, %v1310
    %v1399 = vpack.c.b16 %v1315, %v1311
    %v1400 = vpack.c.b16 %v1316, %v1312
    %v1401 = vpack.c.b16 %v1321, %v1317
    %v1402 = vpack.c.b16 %v1322, %v1318
    %v1403 = vpack.c.b16 %v1323, %v1319
    %v1404 = vpack.c.b16 %v1324, %v1320
    %v1405 = vpack.c.b16 %v1329, %v1325
    %v1406 = vpack.c.b16 %v1330, %v1326
    %v1407 = vpack.c.b16 %v1331, %v1327
    %v1408 = vpack.c.b16 %v1332, %v1328
    %v1409 = vpack.c.b16 %v1337, %v1333
    %v1410 = vpack.c.b16 %v1338, %v1334
    %v1411 = vpack.c.b16 %v1339, %v1335
    %v1412 = vpack.c.b16 %v1340, %v1336
    %v1413 = vpack.c.b16 %v1345, %v1341
    %v1414 = vpack.c.b16 %v1346, %v1342
    %v1415 = vpack.c.b16 %v1347, %v1343
    %v1416 = vpack.c.b16 %v1348, %v1344
    %v1417 = vpack.c.b16 %v1353, %v1349
    %v1418 = vpack.c.b16 %v1354, %v1350
    %v1419 = vpack.c.b16 %v1355, %v1351
    %v1420 = vpack.c.b16 %v1356, %v1352
    %1485 = vmatprep.subr.bf16.mxu0 %v1386
    %1486 = vmatpush1.bf16.msra.mxu0 %v1385
    %1487 = vmatprep.subr.bf16.mxu0 %v1382
    %1488 = vmatpush1.bf16.msra.mxu0 %v1381
    %1489 = vmatprep.subr.bf16.mxu0 %v1378
    %1490 = vmatpush1.bf16.msra.mxu0 %v1377
    %1491 = vmatprep.subr.bf16.mxu0 %v1374
    %1492 = vmatpush1.bf16.msra.mxu0 %v1373
    %1493 = vmatprep.subr.bf16.mxu0 %v1370
    %1494 = vmatpush1.bf16.msra.mxu0 %v1369
    %1495 = vmatprep.subr.bf16.mxu0 %v1366
    %1496 = vmatpush1.bf16.msra.mxu0 %v1365
    %1497 = vmatprep.subr.bf16.mxu0 %v1362
    %1498 = vmatpush1.bf16.msra.mxu0 %v1361
    %1499 = vmatprep.subr.bf16.mxu0 %v1358
    %1500 = vmatpush1.bf16.msra.mxu0 %v1357
    %1501 = vmatprep.subr.bf16.mxu0 %v1418
    %1502 = vmatpush2.bf16.msra.mxu0 %v1417
    %1503 = vmatprep.subr.bf16.mxu0 %v1414
    %1504 = vmatpush2.bf16.msra.mxu0 %v1413
    %1505 = vmatprep.subr.bf16.mxu0 %v1410
    %1506 = vmatpush2.bf16.msra.mxu0 %v1409
    %1507 = vmatprep.subr.bf16.mxu0 %v1406
    %1508 = vmatpush2.bf16.msra.mxu0 %v1405
    %1509 = vmatprep.subr.bf16.mxu0 %v1402
    %1510 = vmatpush2.bf16.msra.mxu0 %v1401
    %1511 = vmatprep.subr.bf16.mxu0 %v1398
    %1512 = vmatpush2.bf16.msra.mxu0 %v1397
    %1513 = vmatprep.subr.bf16.mxu0 %v1394
    %1514 = vmatpush2.bf16.msra.mxu0 %v1393
    %1515 = vmatprep.subr.bf16.mxu0 %v1390
    %1516 = vmatpush2.bf16.msra.mxu0 %v1389
    %1517 = vmatprep.mubr.bf16.mxu0 %v1078
    %1518 = vmatmul.mubr.bf16.gmra.mxu0 %v1076
    %v1519 = vpop.f32.mrf.mxu0
    %v1520 = vadd.f32 %v1148, %v1519
    %v1521 = vpop.f32.mrf.mxu0
    %v1522 = vadd.f32 %v1152, %v1521
    %v1523 = vpop.f32.mrf.mxu0
    %v1524 = vpop.f32.mrf.mxu0
    %1525 = vdwg.mxu0
    %1526 = vmatprep.subr.bf16.mxu0 %v1388
    %1527 = vmatpush1.bf16.msra.mxu0 %v1387
    %1528 = vmatprep.subr.bf16.mxu0 %v1384
    %1529 = vmatpush1.bf16.msra.mxu0 %v1383
    %1530 = vmatprep.subr.bf16.mxu0 %v1380
    %1531 = vmatpush1.bf16.msra.mxu0 %v1379
    %1532 = vmatprep.subr.bf16.mxu0 %v1376
    %1533 = vmatpush1.bf16.msra.mxu0 %v1375
    %1534 = vmatprep.subr.bf16.mxu0 %v1372
    %1535 = vmatpush1.bf16.msra.mxu0 %v1371
    %1536 = vmatprep.subr.bf16.mxu0 %v1368
    %1537 = vmatpush1.bf16.msra.mxu0 %v1367
    %1538 = vmatprep.subr.bf16.mxu0 %v1364
    %1539 = vmatpush1.bf16.msra.mxu0 %v1363
    %1540 = vmatprep.subr.bf16.mxu0 %v1360
    %1541 = vmatpush1.bf16.msra.mxu0 %v1359
    %1542 = vmatprep.subr.bf16.mxu0 %v1420
    %1543 = vmatpush2.bf16.msra.mxu0 %v1419
    %1544 = vmatprep.subr.bf16.mxu0 %v1416
    %1545 = vmatpush2.bf16.msra.mxu0 %v1415
    %1546 = vmatprep.subr.bf16.mxu0 %v1412
    %1547 = vmatpush2.bf16.msra.mxu0 %v1411
    %1548 = vmatprep.subr.bf16.mxu0 %v1408
    %1549 = vmatpush2.bf16.msra.mxu0 %v1407
    %1550 = vmatprep.subr.bf16.mxu0 %v1404
    %1551 = vmatpush2.bf16.msra.mxu0 %v1403
    %1552 = vmatprep.subr.bf16.mxu0 %v1400
    %1553 = vmatpush2.bf16.msra.mxu0 %v1399
    %1554 = vmatprep.subr.bf16.mxu0 %v1396
    %1555 = vmatpush2.bf16.msra.mxu0 %v1395
    %1556 = vmatprep.subr.bf16.mxu0 %v1392
    %1557 = vmatpush2.bf16.msra.mxu0 %v1391
    %1558 = vmatprep.mubr.bf16.mxu0 %v1078
    %1559 = vmatmul.mubr.bf16.gmra.mxu0 %v1076
    %v1560 = vpop.f32.mrf.mxu0
    %v1561 = vadd.f32 %v1156, %v1560
    %v1562 = vpop.f32.mrf.mxu0
    %v1563 = vadd.f32 %v1160, %v1562
    %v1564 = vpop.f32.mrf.mxu0
    %v1565 = vpop.f32.mrf.mxu0
    %1566 = vdwg.mxu0
    %v1567 = vxor.u32 %v1520, 2147483648
    %v1568 = vmul.f32 %v1567, 1.442695
    %v1569 = vpow.pop %v1568
    %v1570 = vadd.f32 %v1569, 1.0
    %v1571 = vrcp.pop %v1570
    %v1572 = vmul.f32 1.0, %v1571
    %v1573 = vxor.u32 %v1522, 2147483648
    %v1574 = vmul.f32 %v1573, 1.442695
    %v1575 = vpow.pop %v1574
    %v1576 = vadd.f32 %v1575, 1.0
    %v1577 = vrcp.pop %v1576
    %v1578 = vmul.f32 1.0, %v1577
    %v1579 = vmul.f32 %v1572, %v1563
    %v1580 = vadd.f32 %v1561, %v1579
    %v1581 = vtanh.pop %v1580
    %v1582 = vsub.f32 1.0, %v1578
    %v1583 = vmul.f32 %v1582, %v1581
    %v1584 = vmul.f32 %v1578, %v1073
    %v1585 = vadd.f32 %v1583, %v1584
    %s1586 = scalar_lea.vmem [#allocation8], 8
    %1587 = vst [vmem:[%s1586] sm:$0xf] %v1585
    %v1588 = vpack.c.bf16 %v1585, %v1585
    %s1589 = scalar_lea.vmem [#allocation2], 6
    %v1590 = vld [vmem:[%s1589] sm:$0x3]
    %v1591 = vld [vmem:[#allocation5] sm:$0xff]
    %v1592 = vld [vmem:[#allocation5 + $0x8] sm:$0xff]
    %v1593 = vld [vmem:[#allocation5 + $0x10] sm:$0xff]
    %v1594 = vld [vmem:[#allocation5 + $0x18] sm:$0xff]
    %v1595 = vld [vmem:[#allocation5 + $0x20] sm:$0xff]
    %v1596 = vld [vmem:[#allocation5 + $0x28] sm:$0xff]
    %v1597 = vld [vmem:[#allocation5 + $0x30] sm:$0xff]
    %v1598 = vld [vmem:[#allocation5 + $0x38] sm:$0xff]
    %v1599 = vld [vmem:[#allocation5 + $0x40] sm:$0xff]
    %v1600 = vld [vmem:[#allocation5 + $0x48] sm:$0xff]
    %v1601 = vld [vmem:[#allocation5 + $0x50] sm:$0xff]
    %v1602 = vld [vmem:[#allocation5 + $0x58] sm:$0xff]
    %v1603 = vld [vmem:[#allocation5 + $0x60] sm:$0xff]
    %v1604 = vld [vmem:[#allocation5 + $0x68] sm:$0xff]
    %v1605 = vld [vmem:[#allocation5 + $0x70] sm:$0xff]
    %v1606 = vld [vmem:[#allocation5 + $0x78] sm:$0xff]
    %v1607 = vld [vmem:[#allocation5 + $0x80] sm:$0xff]
    %v1608 = vld [vmem:[#allocation5 + $0x88] sm:$0xff]
    %v1609 = vld [vmem:[#allocation5 + $0x90] sm:$0xff]
    %v1610 = vld [vmem:[#allocation5 + $0x98] sm:$0xff]
    %v1611 = vld [vmem:[#allocation5 + $0xa0] sm:$0xff]
    %v1612 = vld [vmem:[#allocation5 + $0xa8] sm:$0xff]
    %v1613 = vld [vmem:[#allocation5 + $0xb0] sm:$0xff]
    %v1614 = vld [vmem:[#allocation5 + $0xb8] sm:$0xff]
    %v1615 = vld [vmem:[#allocation5 + $0xc0] sm:$0xff]
    %v1616 = vld [vmem:[#allocation5 + $0xc8] sm:$0xff]
    %v1617 = vld [vmem:[#allocation5 + $0xd0] sm:$0xff]
    %v1618 = vld [vmem:[#allocation5 + $0xd8] sm:$0xff]
    %v1619 = vld [vmem:[#allocation5 + $0xe0] sm:$0xff]
    %v1620 = vld [vmem:[#allocation5 + $0xe8] sm:$0xff]
    %v1621 = vld [vmem:[#allocation5 + $0xf0] sm:$0xff]
    %v1622 = vld [vmem:[#allocation5 + $0xf8] sm:$0xff]
    %v1623 = vld [vmem:[#allocation5 + $0x100] sm:$0xff]
    %v1624 = vld [vmem:[#allocation5 + $0x108] sm:$0xff]
    %v1625 = vld [vmem:[#allocation5 + $0x110] sm:$0xff]
    %v1626 = vld [vmem:[#allocation5 + $0x118] sm:$0xff]
    %v1627 = vld [vmem:[#allocation5 + $0x120] sm:$0xff]
    %v1628 = vld [vmem:[#allocation5 + $0x128] sm:$0xff]
    %v1629 = vld [vmem:[#allocation5 + $0x130] sm:$0xff]
    %v1630 = vld [vmem:[#allocation5 + $0x138] sm:$0xff]
    %v1631 = vld [vmem:[#allocation5 + $0x140] sm:$0xff]
    %v1632 = vld [vmem:[#allocation5 + $0x148] sm:$0xff]
    %v1633 = vld [vmem:[#allocation5 + $0x150] sm:$0xff]
    %v1634 = vld [vmem:[#allocation5 + $0x158] sm:$0xff]
    %v1635 = vld [vmem:[#allocation5 + $0x160] sm:$0xff]
    %v1636 = vld [vmem:[#allocation5 + $0x168] sm:$0xff]
    %v1637 = vld [vmem:[#allocation5 + $0x170] sm:$0xff]
    %v1638 = vld [vmem:[#allocation5 + $0x178] sm:$0xff]
    %v1639 = vld [vmem:[#allocation5 + $0x180] sm:$0xff]
    %v1640 = vld [vmem:[#allocation5 + $0x188] sm:$0xff]
    %v1641 = vld [vmem:[#allocation5 + $0x190] sm:$0xff]
    %v1642 = vld [vmem:[#allocation5 + $0x198] sm:$0xff]
    %v1643 = vld [vmem:[#allocation5 + $0x1a0] sm:$0xff]
    %v1644 = vld [vmem:[#allocation5 + $0x1a8] sm:$0xff]
    %v1645 = vld [vmem:[#allocation5 + $0x1b0] sm:$0xff]
    %v1646 = vld [vmem:[#allocation5 + $0x1b8] sm:$0xff]
    %v1647 = vld [vmem:[#allocation5 + $0x1c0] sm:$0xff]
    %v1648 = vld [vmem:[#allocation5 + $0x1c8] sm:$0xff]
    %v1649 = vld [vmem:[#allocation5 + $0x1d0] sm:$0xff]
    %v1650 = vld [vmem:[#allocation5 + $0x1d8] sm:$0xff]
    %v1651 = vld [vmem:[#allocation5 + $0x1e0] sm:$0xff]
    %v1652 = vld [vmem:[#allocation5 + $0x1e8] sm:$0xff]
    %v1653 = vld [vmem:[#allocation5 + $0x1f0] sm:$0xff]
    %v1654 = vld [vmem:[#allocation5 + $0x1f8] sm:$0xff]
    %v1655 = vld [vmem:[#allocation7] sm:$0xf]
    %v1657 = vlaneseq
    %v1658 = vshrl.u32 %v1657, 7
    %v1659 = vsub.s32 0, %v1658
    %v1660 = vrot.slane %v1655, %v1659
    %v1661 = vlaneseq
    %v1662 = vshrl.u32 %v1661, 7
    %v1663 = vsub.s32 1, %v1662
    %v1664 = vrot.slane %v1655, %v1663
    %v1665 = vlaneseq
    %v1666 = vshrl.u32 %v1665, 7
    %v1667 = vsub.s32 2, %v1666
    %v1668 = vrot.slane %v1655, %v1667
    %v1669 = vlaneseq
    %v1670 = vshrl.u32 %v1669, 7
    %v1671 = vsub.s32 3, %v1670
    %v1672 = vrot.slane %v1655, %v1671
    %v1741 = vunpack.c.l.b16 %v1591
    %v1742 = vunpack.c.h.b16 %v1591
    %v1743 = vunpack.c.l.b16 %v1592
    %v1744 = vunpack.c.h.b16 %v1592
    %v1745 = vunpack.c.l.b16 %v1593
    %v1746 = vunpack.c.h.b16 %v1593
    %v1747 = vunpack.c.l.b16 %v1594
    %v1748 = vunpack.c.h.b16 %v1594
    %v1749 = vunpack.c.l.b16 %v1595
    %v1750 = vunpack.c.h.b16 %v1595
    %v1751 = vunpack.c.l.b16 %v1596
    %v1752 = vunpack.c.h.b16 %v1596
    %v1753 = vunpack.c.l.b16 %v1597
    %v1754 = vunpack.c.h.b16 %v1597
    %v1755 = vunpack.c.l.b16 %v1598
    %v1756 = vunpack.c.h.b16 %v1598
    %v1757 = vunpack.c.l.b16 %v1599
    %v1758 = vunpack.c.h.b16 %v1599
    %v1759 = vunpack.c.l.b16 %v1600
    %v1760 = vunpack.c.h.b16 %v1600
    %v1761 = vunpack.c.l.b16 %v1601
    %v1762 = vunpack.c.h.b16 %v1601
    %v1763 = vunpack.c.l.b16 %v1602
    %v1764 = vunpack.c.h.b16 %v1602
    %v1765 = vunpack.c.l.b16 %v1603
    %v1766 = vunpack.c.h.b16 %v1603
    %v1767 = vunpack.c.l.b16 %v1604
    %v1768 = vunpack.c.h.b16 %v1604
    %v1769 = vunpack.c.l.b16 %v1605
    %v1770 = vunpack.c.h.b16 %v1605
    %v1771 = vunpack.c.l.b16 %v1606
    %v1772 = vunpack.c.h.b16 %v1606
    %v1773 = vunpack.c.l.b16 %v1607
    %v1774 = vunpack.c.h.b16 %v1607
    %v1775 = vunpack.c.l.b16 %v1608
    %v1776 = vunpack.c.h.b16 %v1608
    %v1777 = vunpack.c.l.b16 %v1609
    %v1778 = vunpack.c.h.b16 %v1609
    %v1779 = vunpack.c.l.b16 %v1610
    %v1780 = vunpack.c.h.b16 %v1610
    %v1781 = vunpack.c.l.b16 %v1611
    %v1782 = vunpack.c.h.b16 %v1611
    %v1783 = vunpack.c.l.b16 %v1612
    %v1784 = vunpack.c.h.b16 %v1612
    %v1785 = vunpack.c.l.b16 %v1613
    %v1786 = vunpack.c.h.b16 %v1613
    %v1787 = vunpack.c.l.b16 %v1614
    %v1788 = vunpack.c.h.b16 %v1614
    %v1789 = vunpack.c.l.b16 %v1615
    %v1790 = vunpack.c.h.b16 %v1615
    %v1791 = vunpack.c.l.b16 %v1616
    %v1792 = vunpack.c.h.b16 %v1616
    %v1793 = vunpack.c.l.b16 %v1617
    %v1794 = vunpack.c.h.b16 %v1617
    %v1795 = vunpack.c.l.b16 %v1618
    %v1796 = vunpack.c.h.b16 %v1618
    %v1797 = vunpack.c.l.b16 %v1619
    %v1798 = vunpack.c.h.b16 %v1619
    %v1799 = vunpack.c.l.b16 %v1620
    %v1800 = vunpack.c.h.b16 %v1620
    %v1801 = vunpack.c.l.b16 %v1621
    %v1802 = vunpack.c.h.b16 %v1621
    %v1803 = vunpack.c.l.b16 %v1622
    %v1804 = vunpack.c.h.b16 %v1622
    %v1805 = vunpack.c.l.b16 %v1623
    %v1806 = vunpack.c.h.b16 %v1623
    %v1807 = vunpack.c.l.b16 %v1624
    %v1808 = vunpack.c.h.b16 %v1624
    %v1809 = vunpack.c.l.b16 %v1625
    %v1810 = vunpack.c.h.b16 %v1625
    %v1811 = vunpack.c.l.b16 %v1626
    %v1812 = vunpack.c.h.b16 %v1626
    %v1813 = vunpack.c.l.b16 %v1627
    %v1814 = vunpack.c.h.b16 %v1627
    %v1815 = vunpack.c.l.b16 %v1628
    %v1816 = vunpack.c.h.b16 %v1628
    %v1817 = vunpack.c.l.b16 %v1629
    %v1818 = vunpack.c.h.b16 %v1629
    %v1819 = vunpack.c.l.b16 %v1630
    %v1820 = vunpack.c.h.b16 %v1630
    %v1821 = vunpack.c.l.b16 %v1631
    %v1822 = vunpack.c.h.b16 %v1631
    %v1823 = vunpack.c.l.b16 %v1632
    %v1824 = vunpack.c.h.b16 %v1632
    %v1825 = vunpack.c.l.b16 %v1633
    %v1826 = vunpack.c.h.b16 %v1633
    %v1827 = vunpack.c.l.b16 %v1634
    %v1828 = vunpack.c.h.b16 %v1634
    %v1829 = vunpack.c.l.b16 %v1635
    %v1830 = vunpack.c.h.b16 %v1635
    %v1831 = vunpack.c.l.b16 %v1636
    %v1832 = vunpack.c.h.b16 %v1636
    %v1833 = vunpack.c.l.b16 %v1637
    %v1834 = vunpack.c.h.b16 %v1637
    %v1835 = vunpack.c.l.b16 %v1638
    %v1836 = vunpack.c.h.b16 %v1638
    %v1837 = vunpack.c.l.b16 %v1639
    %v1838 = vunpack.c.h.b16 %v1639
    %v1839 = vunpack.c.l.b16 %v1640
    %v1840 = vunpack.c.h.b16 %v1640
    %v1841 = vunpack.c.l.b16 %v1641
    %v1842 = vunpack.c.h.b16 %v1641
    %v1843 = vunpack.c.l.b16 %v1642
    %v1844 = vunpack.c.h.b16 %v1642
    %v1845 = vunpack.c.l.b16 %v1643
    %v1846 = vunpack.c.h.b16 %v1643
    %v1847 = vunpack.c.l.b16 %v1644
    %v1848 = vunpack.c.h.b16 %v1644
    %v1849 = vunpack.c.l.b16 %v1645
    %v1850 = vunpack.c.h.b16 %v1645
    %v1851 = vunpack.c.l.b16 %v1646
    %v1852 = vunpack.c.h.b16 %v1646
    %v1853 = vunpack.c.l.b16 %v1647
    %v1854 = vunpack.c.h.b16 %v1647
    %v1855 = vunpack.c.l.b16 %v1648
    %v1856 = vunpack.c.h.b16 %v1648
    %v1857 = vunpack.c.l.b16 %v1649
    %v1858 = vunpack.c.h.b16 %v1649
    %v1859 = vunpack.c.l.b16 %v1650
    %v1860 = vunpack.c.h.b16 %v1650
    %v1861 = vunpack.c.l.b16 %v1651
    %v1862 = vunpack.c.h.b16 %v1651
    %v1863 = vunpack.c.l.b16 %v1652
    %v1864 = vunpack.c.h.b16 %v1652
    %v1865 = vunpack.c.l.b16 %v1653
    %v1866 = vunpack.c.h.b16 %v1653
    %v1867 = vunpack.c.l.b16 %v1654
    %v1868 = vunpack.c.h.b16 %v1654
    %v1869 = vpack.c.b16 %v1745, %v1741
    %v1870 = vpack.c.b16 %v1746, %v1742
    %v1871 = vpack.c.b16 %v1747, %v1743
    %v1872 = vpack.c.b16 %v1748, %v1744
    %v1873 = vpack.c.b16 %v1753, %v1749
    %v1874 = vpack.c.b16 %v1754, %v1750
    %v1875 = vpack.c.b16 %v1755, %v1751
    %v1876 = vpack.c.b16 %v1756, %v1752
    %v1877 = vpack.c.b16 %v1761, %v1757
    %v1878 = vpack.c.b16 %v1762, %v1758
    %v1879 = vpack.c.b16 %v1763, %v1759
    %v1880 = vpack.c.b16 %v1764, %v1760
    %v1881 = vpack.c.b16 %v1769, %v1765
    %v1882 = vpack.c.b16 %v1770, %v1766
    %v1883 = vpack.c.b16 %v1771, %v1767
    %v1884 = vpack.c.b16 %v1772, %v1768
    %v1885 = vpack.c.b16 %v1777, %v1773
    %v1886 = vpack.c.b16 %v1778, %v1774
    %v1887 = vpack.c.b16 %v1779, %v1775
    %v1888 = vpack.c.b16 %v1780, %v1776
    %v1889 = vpack.c.b16 %v1785, %v1781
    %v1890 = vpack.c.b16 %v1786, %v1782
    %v1891 = vpack.c.b16 %v1787, %v1783
    %v1892 = vpack.c.b16 %v1788, %v1784
    %v1893 = vpack.c.b16 %v1793, %v1789
    %v1894 = vpack.c.b16 %v1794, %v1790
    %v1895 = vpack.c.b16 %v1795, %v1791
    %v1896 = vpack.c.b16 %v1796, %v1792
    %v1897 = vpack.c.b16 %v1801, %v1797
    %v1898 = vpack.c.b16 %v1802, %v1798
    %v1899 = vpack.c.b16 %v1803, %v1799
    %v1900 = vpack.c.b16 %v1804, %v1800
    %v1901 = vpack.c.b16 %v1809, %v1805
    %v1902 = vpack.c.b16 %v1810, %v1806
    %v1903 = vpack.c.b16 %v1811, %v1807
    %v1904 = vpack.c.b16 %v1812, %v1808
    %v1905 = vpack.c.b16 %v1817, %v1813
    %v1906 = vpack.c.b16 %v1818, %v1814
    %v1907 = vpack.c.b16 %v1819, %v1815
    %v1908 = vpack.c.b16 %v1820, %v1816
    %v1909 = vpack.c.b16 %v1825, %v1821
    %v1910 = vpack.c.b16 %v1826, %v1822
    %v1911 = vpack.c.b16 %v1827, %v1823
    %v1912 = vpack.c.b16 %v1828, %v1824
    %v1913 = vpack.c.b16 %v1833, %v1829
    %v1914 = vpack.c.b16 %v1834, %v1830
    %v1915 = vpack.c.b16 %v1835, %v1831
    %v1916 = vpack.c.b16 %v1836, %v1832
    %v1917 = vpack.c.b16 %v1841, %v1837
    %v1918 = vpack.c.b16 %v1842, %v1838
    %v1919 = vpack.c.b16 %v1843, %v1839
    %v1920 = vpack.c.b16 %v1844, %v1840
    %v1921 = vpack.c.b16 %v1849, %v1845
    %v1922 = vpack.c.b16 %v1850, %v1846
    %v1923 = vpack.c.b16 %v1851, %v1847
    %v1924 = vpack.c.b16 %v1852, %v1848
    %v1925 = vpack.c.b16 %v1857, %v1853
    %v1926 = vpack.c.b16 %v1858, %v1854
    %v1927 = vpack.c.b16 %v1859, %v1855
    %v1928 = vpack.c.b16 %v1860, %v1856
    %v1929 = vpack.c.b16 %v1865, %v1861
    %v1930 = vpack.c.b16 %v1866, %v1862
    %v1931 = vpack.c.b16 %v1867, %v1863
    %v1932 = vpack.c.b16 %v1868, %v1864
    %1997 = vmatprep.subr.bf16.mxu0 %v1898
    %1998 = vmatpush1.bf16.msra.mxu0 %v1897
    %1999 = vmatprep.subr.bf16.mxu0 %v1894
    %2000 = vmatpush1.bf16.msra.mxu0 %v1893
    %2001 = vmatprep.subr.bf16.mxu0 %v1890
    %2002 = vmatpush1.bf16.msra.mxu0 %v1889
    %2003 = vmatprep.subr.bf16.mxu0 %v1886
    %2004 = vmatpush1.bf16.msra.mxu0 %v1885
    %2005 = vmatprep.subr.bf16.mxu0 %v1882
    %2006 = vmatpush1.bf16.msra.mxu0 %v1881
    %2007 = vmatprep.subr.bf16.mxu0 %v1878
    %2008 = vmatpush1.bf16.msra.mxu0 %v1877
    %2009 = vmatprep.subr.bf16.mxu0 %v1874
    %2010 = vmatpush1.bf16.msra.mxu0 %v1873
    %2011 = vmatprep.subr.bf16.mxu0 %v1870
    %2012 = vmatpush1.bf16.msra.mxu0 %v1869
    %2013 = vmatprep.subr.bf16.mxu0 %v1930
    %2014 = vmatpush2.bf16.msra.mxu0 %v1929
    %2015 = vmatprep.subr.bf16.mxu0 %v1926
    %2016 = vmatpush2.bf16.msra.mxu0 %v1925
    %2017 = vmatprep.subr.bf16.mxu0 %v1922
    %2018 = vmatpush2.bf16.msra.mxu0 %v1921
    %2019 = vmatprep.subr.bf16.mxu0 %v1918
    %2020 = vmatpush2.bf16.msra.mxu0 %v1917
    %2021 = vmatprep.subr.bf16.mxu0 %v1914
    %2022 = vmatpush2.bf16.msra.mxu0 %v1913
    %2023 = vmatprep.subr.bf16.mxu0 %v1910
    %2024 = vmatpush2.bf16.msra.mxu0 %v1909
    %2025 = vmatprep.subr.bf16.mxu0 %v1906
    %2026 = vmatpush2.bf16.msra.mxu0 %v1905
    %2027 = vmatprep.subr.bf16.mxu0 %v1902
    %2028 = vmatpush2.bf16.msra.mxu0 %v1901
    %2029 = vmatprep.mubr.bf16.mxu0 %v1590
    %2030 = vmatmul.mubr.bf16.gmra.mxu0 %v1588
    %v2031 = vpop.f32.mrf.mxu0
    %v2032 = vadd.f32 %v1660, %v2031
    %v2033 = vpop.f32.mrf.mxu0
    %v2034 = vadd.f32 %v1664, %v2033
    %v2035 = vpop.f32.mrf.mxu0
    %v2036 = vpop.f32.mrf.mxu0
    %2037 = vdwg.mxu0
    %2038 = vmatprep.subr.bf16.mxu0 %v1900
    %2039 = vmatpush1.bf16.msra.mxu0 %v1899
    %2040 = vmatprep.subr.bf16.mxu0 %v1896
    %2041 = vmatpush1.bf16.msra.mxu0 %v1895
    %2042 = vmatprep.subr.bf16.mxu0 %v1892
    %2043 = vmatpush1.bf16.msra.mxu0 %v1891
    %2044 = vmatprep.subr.bf16.mxu0 %v1888
    %2045 = vmatpush1.bf16.msra.mxu0 %v1887
    %2046 = vmatprep.subr.bf16.mxu0 %v1884
    %2047 = vmatpush1.bf16.msra.mxu0 %v1883
    %2048 = vmatprep.subr.bf16.mxu0 %v1880
    %2049 = vmatpush1.bf16.msra.mxu0 %v1879
    %2050 = vmatprep.subr.bf16.mxu0 %v1876
    %2051 = vmatpush1.bf16.msra.mxu0 %v1875
    %2052 = vmatprep.subr.bf16.mxu0 %v1872
    %2053 = vmatpush1.bf16.msra.mxu0 %v1871
    %2054 = vmatprep.subr.bf16.mxu0 %v1932
    %2055 = vmatpush2.bf16.msra.mxu0 %v1931
    %2056 = vmatprep.subr.bf16.mxu0 %v1928
    %2057 = vmatpush2.bf16.msra.mxu0 %v1927
    %2058 = vmatprep.subr.bf16.mxu0 %v1924
    %2059 = vmatpush2.bf16.msra.mxu0 %v1923
    %2060 = vmatprep.subr.bf16.mxu0 %v1920
    %2061 = vmatpush2.bf16.msra.mxu0 %v1919
    %2062 = vmatprep.subr.bf16.mxu0 %v1916
    %2063 = vmatpush2.bf16.msra.mxu0 %v1915
    %2064 = vmatprep.subr.bf16.mxu0 %v1912
    %2065 = vmatpush2.bf16.msra.mxu0 %v1911
    %2066 = vmatprep.subr.bf16.mxu0 %v1908
    %2067 = vmatpush2.bf16.msra.mxu0 %v1907
    %2068 = vmatprep.subr.bf16.mxu0 %v1904
    %2069 = vmatpush2.bf16.msra.mxu0 %v1903
    %2070 = vmatprep.mubr.bf16.mxu0 %v1590
    %2071 = vmatmul.mubr.bf16.gmra.mxu0 %v1588
    %v2072 = vpop.f32.mrf.mxu0
    %v2073 = vadd.f32 %v1668, %v2072
    %v2074 = vpop.f32.mrf.mxu0
    %v2075 = vadd.f32 %v1672, %v2074
    %v2076 = vpop.f32.mrf.mxu0
    %v2077 = vpop.f32.mrf.mxu0
    %2078 = vdwg.mxu0
    %v2079 = vxor.u32 %v2032, 2147483648
    %v2080 = vmul.f32 %v2079, 1.442695
    %v2081 = vpow.pop %v2080
    %v2082 = vadd.f32 %v2081, 1.0
    %v2083 = vrcp.pop %v2082
    %v2084 = vmul.f32 1.0, %v2083
    %v2085 = vxor.u32 %v2034, 2147483648
    %v2086 = vmul.f32 %v2085, 1.442695
    %v2087 = vpow.pop %v2086
    %v2088 = vadd.f32 %v2087, 1.0
    %v2089 = vrcp.pop %v2088
    %v2090 = vmul.f32 1.0, %v2089
    %v2091 = vmul.f32 %v2084, %v2075
    %v2092 = vadd.f32 %v2073, %v2091
    %v2093 = vtanh.pop %v2092
    %v2094 = vsub.f32 1.0, %v2090
    %v2095 = vmul.f32 %v2094, %v2093
    %v2096 = vmul.f32 %v2090, %v1585
    %v2097 = vadd.f32 %v2095, %v2096
    %s2098 = scalar_lea.vmem [#allocation8], 12
    %2099 = vst [vmem:[%s2098] sm:$0xf] %v2097
    %v2100 = vpack.c.bf16 %v2097, %v2097
    %s2101 = scalar_lea.vmem [#allocation2], 8
    %v2102 = vld [vmem:[%s2101] sm:$0x3]
    %v2103 = vld [vmem:[#allocation5] sm:$0xff]
    %v2104 = vld [vmem:[#allocation5 + $0x8] sm:$0xff]
    %v2105 = vld [vmem:[#allocation5 + $0x10] sm:$0xff]
    %v2106 = vld [vmem:[#allocation5 + $0x18] sm:$0xff]
    %v2107 = vld [vmem:[#allocation5 + $0x20] sm:$0xff]
    %v2108 = vld [vmem:[#allocation5 + $0x28] sm:$0xff]
    %v2109 = vld [vmem:[#allocation5 + $0x30] sm:$0xff]
    %v2110 = vld [vmem:[#allocation5 + $0x38] sm:$0xff]
    %v2111 = vld [vmem:[#allocation5 + $0x40] sm:$0xff]
    %v2112 = vld [vmem:[#allocation5 + $0x48] sm:$0xff]
    %v2113 = vld [vmem:[#allocation5 + $0x50] sm:$0xff]
    %v2114 = vld [vmem:[#allocation5 + $0x58] sm:$0xff]
    %v2115 = vld [vmem:[#allocation5 + $0x60] sm:$0xff]
    %v2116 = vld [vmem:[#allocation5 + $0x68] sm:$0xff]
    %v2117 = vld [vmem:[#allocation5 + $0x70] sm:$0xff]
    %v2118 = vld [vmem:[#allocation5 + $0x78] sm:$0xff]
    %v2119 = vld [vmem:[#allocation5 + $0x80] sm:$0xff]
    %v2120 = vld [vmem:[#allocation5 + $0x88] sm:$0xff]
    %v2121 = vld [vmem:[#allocation5 + $0x90] sm:$0xff]
    %v2122 = vld [vmem:[#allocation5 + $0x98] sm:$0xff]
    %v2123 = vld [vmem:[#allocation5 + $0xa0] sm:$0xff]
    %v2124 = vld [vmem:[#allocation5 + $0xa8] sm:$0xff]
    %v2125 = vld [vmem:[#allocation5 + $0xb0] sm:$0xff]
    %v2126 = vld [vmem:[#allocation5 + $0xb8] sm:$0xff]
    %v2127 = vld [vmem:[#allocation5 + $0xc0] sm:$0xff]
    %v2128 = vld [vmem:[#allocation5 + $0xc8] sm:$0xff]
    %v2129 = vld [vmem:[#allocation5 + $0xd0] sm:$0xff]
    %v2130 = vld [vmem:[#allocation5 + $0xd8] sm:$0xff]
    %v2131 = vld [vmem:[#allocation5 + $0xe0] sm:$0xff]
    %v2132 = vld [vmem:[#allocation5 + $0xe8] sm:$0xff]
    %v2133 = vld [vmem:[#allocation5 + $0xf0] sm:$0xff]
    %v2134 = vld [vmem:[#allocation5 + $0xf8] sm:$0xff]
    %v2135 = vld [vmem:[#allocation5 + $0x100] sm:$0xff]
    %v2136 = vld [vmem:[#allocation5 + $0x108] sm:$0xff]
    %v2137 = vld [vmem:[#allocation5 + $0x110] sm:$0xff]
    %v2138 = vld [vmem:[#allocation5 + $0x118] sm:$0xff]
    %v2139 = vld [vmem:[#allocation5 + $0x120] sm:$0xff]
    %v2140 = vld [vmem:[#allocation5 + $0x128] sm:$0xff]
    %v2141 = vld [vmem:[#allocation5 + $0x130] sm:$0xff]
    %v2142 = vld [vmem:[#allocation5 + $0x138] sm:$0xff]
    %v2143 = vld [vmem:[#allocation5 + $0x140] sm:$0xff]
    %v2144 = vld [vmem:[#allocation5 + $0x148] sm:$0xff]
    %v2145 = vld [vmem:[#allocation5 + $0x150] sm:$0xff]
    %v2146 = vld [vmem:[#allocation5 + $0x158] sm:$0xff]
    %v2147 = vld [vmem:[#allocation5 + $0x160] sm:$0xff]
    %v2148 = vld [vmem:[#allocation5 + $0x168] sm:$0xff]
    %v2149 = vld [vmem:[#allocation5 + $0x170] sm:$0xff]
    %v2150 = vld [vmem:[#allocation5 + $0x178] sm:$0xff]
    %v2151 = vld [vmem:[#allocation5 + $0x180] sm:$0xff]
    %v2152 = vld [vmem:[#allocation5 + $0x188] sm:$0xff]
    %v2153 = vld [vmem:[#allocation5 + $0x190] sm:$0xff]
    %v2154 = vld [vmem:[#allocation5 + $0x198] sm:$0xff]
    %v2155 = vld [vmem:[#allocation5 + $0x1a0] sm:$0xff]
    %v2156 = vld [vmem:[#allocation5 + $0x1a8] sm:$0xff]
    %v2157 = vld [vmem:[#allocation5 + $0x1b0] sm:$0xff]
    %v2158 = vld [vmem:[#allocation5 + $0x1b8] sm:$0xff]
    %v2159 = vld [vmem:[#allocation5 + $0x1c0] sm:$0xff]
    %v2160 = vld [vmem:[#allocation5 + $0x1c8] sm:$0xff]
    %v2161 = vld [vmem:[#allocation5 + $0x1d0] sm:$0xff]
    %v2162 = vld [vmem:[#allocation5 + $0x1d8] sm:$0xff]
    %v2163 = vld [vmem:[#allocation5 + $0x1e0] sm:$0xff]
    %v2164 = vld [vmem:[#allocation5 + $0x1e8] sm:$0xff]
    %v2165 = vld [vmem:[#allocation5 + $0x1f0] sm:$0xff]
    %v2166 = vld [vmem:[#allocation5 + $0x1f8] sm:$0xff]
    %v2167 = vld [vmem:[#allocation7] sm:$0xf]
    %v2169 = vlaneseq
    %v2170 = vshrl.u32 %v2169, 7
    %v2171 = vsub.s32 0, %v2170
    %v2172 = vrot.slane %v2167, %v2171
    %v2173 = vlaneseq
    %v2174 = vshrl.u32 %v2173, 7
    %v2175 = vsub.s32 1, %v2174
    %v2176 = vrot.slane %v2167, %v2175
    %v2177 = vlaneseq
    %v2178 = vshrl.u32 %v2177, 7
    %v2179 = vsub.s32 2, %v2178
    %v2180 = vrot.slane %v2167, %v2179
    %v2181 = vlaneseq
    %v2182 = vshrl.u32 %v2181, 7
    %v2183 = vsub.s32 3, %v2182
    %v2184 = vrot.slane %v2167, %v2183
    %v2253 = vunpack.c.l.b16 %v2103
    %v2254 = vunpack.c.h.b16 %v2103
    %v2255 = vunpack.c.l.b16 %v2104
    %v2256 = vunpack.c.h.b16 %v2104
    %v2257 = vunpack.c.l.b16 %v2105
    %v2258 = vunpack.c.h.b16 %v2105
    %v2259 = vunpack.c.l.b16 %v2106
    %v2260 = vunpack.c.h.b16 %v2106
    %v2261 = vunpack.c.l.b16 %v2107
    %v2262 = vunpack.c.h.b16 %v2107
    %v2263 = vunpack.c.l.b16 %v2108
    %v2264 = vunpack.c.h.b16 %v2108
    %v2265 = vunpack.c.l.b16 %v2109
    %v2266 = vunpack.c.h.b16 %v2109
    %v2267 = vunpack.c.l.b16 %v2110
    %v2268 = vunpack.c.h.b16 %v2110
    %v2269 = vunpack.c.l.b16 %v2111
    %v2270 = vunpack.c.h.b16 %v2111
    %v2271 = vunpack.c.l.b16 %v2112
    %v2272 = vunpack.c.h.b16 %v2112
    %v2273 = vunpack.c.l.b16 %v2113
    %v2274 = vunpack.c.h.b16 %v2113
    %v2275 = vunpack.c.l.b16 %v2114
    %v2276 = vunpack.c.h.b16 %v2114
    %v2277 = vunpack.c.l.b16 %v2115
    %v2278 = vunpack.c.h.b16 %v2115
    %v2279 = vunpack.c.l.b16 %v2116
    %v2280 = vunpack.c.h.b16 %v2116
    %v2281 = vunpack.c.l.b16 %v2117
    %v2282 = vunpack.c.h.b16 %v2117
    %v2283 = vunpack.c.l.b16 %v2118
    %v2284 = vunpack.c.h.b16 %v2118
    %v2285 = vunpack.c.l.b16 %v2119
    %v2286 = vunpack.c.h.b16 %v2119
    %v2287 = vunpack.c.l.b16 %v2120
    %v2288 = vunpack.c.h.b16 %v2120
    %v2289 = vunpack.c.l.b16 %v2121
    %v2290 = vunpack.c.h.b16 %v2121
    %v2291 = vunpack.c.l.b16 %v2122
    %v2292 = vunpack.c.h.b16 %v2122
    %v2293 = vunpack.c.l.b16 %v2123
    %v2294 = vunpack.c.h.b16 %v2123
    %v2295 = vunpack.c.l.b16 %v2124
    %v2296 = vunpack.c.h.b16 %v2124
    %v2297 = vunpack.c.l.b16 %v2125
    %v2298 = vunpack.c.h.b16 %v2125
    %v2299 = vunpack.c.l.b16 %v2126
    %v2300 = vunpack.c.h.b16 %v2126
    %v2301 = vunpack.c.l.b16 %v2127
    %v2302 = vunpack.c.h.b16 %v2127
    %v2303 = vunpack.c.l.b16 %v2128
    %v2304 = vunpack.c.h.b16 %v2128
    %v2305 = vunpack.c.l.b16 %v2129
    %v2306 = vunpack.c.h.b16 %v2129
    %v2307 = vunpack.c.l.b16 %v2130
    %v2308 = vunpack.c.h.b16 %v2130
    %v2309 = vunpack.c.l.b16 %v2131
    %v2310 = vunpack.c.h.b16 %v2131
    %v2311 = vunpack.c.l.b16 %v2132
    %v2312 = vunpack.c.h.b16 %v2132
    %v2313 = vunpack.c.l.b16 %v2133
    %v2314 = vunpack.c.h.b16 %v2133
    %v2315 = vunpack.c.l.b16 %v2134
    %v2316 = vunpack.c.h.b16 %v2134
    %v2317 = vunpack.c.l.b16 %v2135
    %v2318 = vunpack.c.h.b16 %v2135
    %v2319 = vunpack.c.l.b16 %v2136
    %v2320 = vunpack.c.h.b16 %v2136
    %v2321 = vunpack.c.l.b16 %v2137
    %v2322 = vunpack.c.h.b16 %v2137
    %v2323 = vunpack.c.l.b16 %v2138
    %v2324 = vunpack.c.h.b16 %v2138
    %v2325 = vunpack.c.l.b16 %v2139
    %v2326 = vunpack.c.h.b16 %v2139
    %v2327 = vunpack.c.l.b16 %v2140
    %v2328 = vunpack.c.h.b16 %v2140
    %v2329 = vunpack.c.l.b16 %v2141
    %v2330 = vunpack.c.h.b16 %v2141
    %v2331 = vunpack.c.l.b16 %v2142
    %v2332 = vunpack.c.h.b16 %v2142
    %v2333 = vunpack.c.l.b16 %v2143
    %v2334 = vunpack.c.h.b16 %v2143
    %v2335 = vunpack.c.l.b16 %v2144
    %v2336 = vunpack.c.h.b16 %v2144
    %v2337 = vunpack.c.l.b16 %v2145
    %v2338 = vunpack.c.h.b16 %v2145
    %v2339 = vunpack.c.l.b16 %v2146
    %v2340 = vunpack.c.h.b16 %v2146
    %v2341 = vunpack.c.l.b16 %v2147
    %v2342 = vunpack.c.h.b16 %v2147
    %v2343 = vunpack.c.l.b16 %v2148
    %v2344 = vunpack.c.h.b16 %v2148
    %v2345 = vunpack.c.l.b16 %v2149
    %v2346 = vunpack.c.h.b16 %v2149
    %v2347 = vunpack.c.l.b16 %v2150
    %v2348 = vunpack.c.h.b16 %v2150
    %v2349 = vunpack.c.l.b16 %v2151
    %v2350 = vunpack.c.h.b16 %v2151
    %v2351 = vunpack.c.l.b16 %v2152
    %v2352 = vunpack.c.h.b16 %v2152
    %v2353 = vunpack.c.l.b16 %v2153
    %v2354 = vunpack.c.h.b16 %v2153
    %v2355 = vunpack.c.l.b16 %v2154
    %v2356 = vunpack.c.h.b16 %v2154
    %v2357 = vunpack.c.l.b16 %v2155
    %v2358 = vunpack.c.h.b16 %v2155
    %v2359 = vunpack.c.l.b16 %v2156
    %v2360 = vunpack.c.h.b16 %v2156
    %v2361 = vunpack.c.l.b16 %v2157
    %v2362 = vunpack.c.h.b16 %v2157
    %v2363 = vunpack.c.l.b16 %v2158
    %v2364 = vunpack.c.h.b16 %v2158
    %v2365 = vunpack.c.l.b16 %v2159
    %v2366 = vunpack.c.h.b16 %v2159
    %v2367 = vunpack.c.l.b16 %v2160
    %v2368 = vunpack.c.h.b16 %v2160
    %v2369 = vunpack.c.l.b16 %v2161
    %v2370 = vunpack.c.h.b16 %v2161
    %v2371 = vunpack.c.l.b16 %v2162
    %v2372 = vunpack.c.h.b16 %v2162
    %v2373 = vunpack.c.l.b16 %v2163
    %v2374 = vunpack.c.h.b16 %v2163
    %v2375 = vunpack.c.l.b16 %v2164
    %v2376 = vunpack.c.h.b16 %v2164
    %v2377 = vunpack.c.l.b16 %v2165
    %v2378 = vunpack.c.h.b16 %v2165
    %v2379 = vunpack.c.l.b16 %v2166
    %v2380 = vunpack.c.h.b16 %v2166
    %v2381 = vpack.c.b16 %v2257, %v2253
    %v2382 = vpack.c.b16 %v2258, %v2254
    %v2383 = vpack.c.b16 %v2259, %v2255
    %v2384 = vpack.c.b16 %v2260, %v2256
    %v2385 = vpack.c.b16 %v2265, %v2261
    %v2386 = vpack.c.b16 %v2266, %v2262
    %v2387 = vpack.c.b16 %v2267, %v2263
    %v2388 = vpack.c.b16 %v2268, %v2264
    %v2389 = vpack.c.b16 %v2273, %v2269
    %v2390 = vpack.c.b16 %v2274, %v2270
    %v2391 = vpack.c.b16 %v2275, %v2271
    %v2392 = vpack.c.b16 %v2276, %v2272
    %v2393 = vpack.c.b16 %v2281, %v2277
    %v2394 = vpack.c.b16 %v2282, %v2278
    %v2395 = vpack.c.b16 %v2283, %v2279
    %v2396 = vpack.c.b16 %v2284, %v2280
    %v2397 = vpack.c.b16 %v2289, %v2285
    %v2398 = vpack.c.b16 %v2290, %v2286
    %v2399 = vpack.c.b16 %v2291, %v2287
    %v2400 = vpack.c.b16 %v2292, %v2288
    %v2401 = vpack.c.b16 %v2297, %v2293
    %v2402 = vpack.c.b16 %v2298, %v2294
    %v2403 = vpack.c.b16 %v2299, %v2295
    %v2404 = vpack.c.b16 %v2300, %v2296
    %v2405 = vpack.c.b16 %v2305, %v2301
    %v2406 = vpack.c.b16 %v2306, %v2302
    %v2407 = vpack.c.b16 %v2307, %v2303
    %v2408 = vpack.c.b16 %v2308, %v2304
    %v2409 = vpack.c.b16 %v2313, %v2309
    %v2410 = vpack.c.b16 %v2314, %v2310
    %v2411 = vpack.c.b16 %v2315, %v2311
    %v2412 = vpack.c.b16 %v2316, %v2312
    %v2413 = vpack.c.b16 %v2321, %v2317
    %v2414 = vpack.c.b16 %v2322, %v2318
    %v2415 = vpack.c.b16 %v2323, %v2319
    %v2416 = vpack.c.b16 %v2324, %v2320
    %v2417 = vpack.c.b16 %v2329, %v2325
    %v2418 = vpack.c.b16 %v2330, %v2326
    %v2419 = vpack.c.b16 %v2331, %v2327
    %v2420 = vpack.c.b16 %v2332, %v2328
    %v2421 = vpack.c.b16 %v2337, %v2333
    %v2422 = vpack.c.b16 %v2338, %v2334
    %v2423 = vpack.c.b16 %v2339, %v2335
    %v2424 = vpack.c.b16 %v2340, %v2336
    %v2425 = vpack.c.b16 %v2345, %v2341
    %v2426 = vpack.c.b16 %v2346, %v2342
    %v2427 = vpack.c.b16 %v2347, %v2343
    %v2428 = vpack.c.b16 %v2348, %v2344
    %v2429 = vpack.c.b16 %v2353, %v2349
    %v2430 = vpack.c.b16 %v2354, %v2350
    %v2431 = vpack.c.b16 %v2355, %v2351
    %v2432 = vpack.c.b16 %v2356, %v2352
    %v2433 = vpack.c.b16 %v2361, %v2357
    %v2434 = vpack.c.b16 %v2362, %v2358
    %v2435 = vpack.c.b16 %v2363, %v2359
    %v2436 = vpack.c.b16 %v2364, %v2360
    %v2437 = vpack.c.b16 %v2369, %v2365
    %v2438 = vpack.c.b16 %v2370, %v2366
    %v2439 = vpack.c.b16 %v2371, %v2367
    %v2440 = vpack.c.b16 %v2372, %v2368
    %v2441 = vpack.c.b16 %v2377, %v2373
    %v2442 = vpack.c.b16 %v2378, %v2374
    %v2443 = vpack.c.b16 %v2379, %v2375
    %v2444 = vpack.c.b16 %v2380, %v2376
    %2509 = vmatprep.subr.bf16.mxu0 %v2410
    %2510 = vmatpush1.bf16.msra.mxu0 %v2409
    %2511 = vmatprep.subr.bf16.mxu0 %v2406
    %2512 = vmatpush1.bf16.msra.mxu0 %v2405
    %2513 = vmatprep.subr.bf16.mxu0 %v2402
    %2514 = vmatpush1.bf16.msra.mxu0 %v2401
    %2515 = vmatprep.subr.bf16.mxu0 %v2398
    %2516 = vmatpush1.bf16.msra.mxu0 %v2397
    %2517 = vmatprep.subr.bf16.mxu0 %v2394
    %2518 = vmatpush1.bf16.msra.mxu0 %v2393
    %2519 = vmatprep.subr.bf16.mxu0 %v2390
    %2520 = vmatpush1.bf16.msra.mxu0 %v2389
    %2521 = vmatprep.subr.bf16.mxu0 %v2386
    %2522 = vmatpush1.bf16.msra.mxu0 %v2385
    %2523 = vmatprep.subr.bf16.mxu0 %v2382
    %2524 = vmatpush1.bf16.msra.mxu0 %v2381
    %2525 = vmatprep.subr.bf16.mxu0 %v2442
    %2526 = vmatpush2.bf16.msra.mxu0 %v2441
    %2527 = vmatprep.subr.bf16.mxu0 %v2438
    %2528 = vmatpush2.bf16.msra.mxu0 %v2437
    %2529 = vmatprep.subr.bf16.mxu0 %v2434
    %2530 = vmatpush2.bf16.msra.mxu0 %v2433
    %2531 = vmatprep.subr.bf16.mxu0 %v2430
    %2532 = vmatpush2.bf16.msra.mxu0 %v2429
    %2533 = vmatprep.subr.bf16.mxu0 %v2426
    %2534 = vmatpush2.bf16.msra.mxu0 %v2425
    %2535 = vmatprep.subr.bf16.mxu0 %v2422
    %2536 = vmatpush2.bf16.msra.mxu0 %v2421
    %2537 = vmatprep.subr.bf16.mxu0 %v2418
    %2538 = vmatpush2.bf16.msra.mxu0 %v2417
    %2539 = vmatprep.subr.bf16.mxu0 %v2414
    %2540 = vmatpush2.bf16.msra.mxu0 %v2413
    %2541 = vmatprep.mubr.bf16.mxu0 %v2102
    %2542 = vmatmul.mubr.bf16.gmra.mxu0 %v2100
    %v2543 = vpop.f32.mrf.mxu0
    %v2544 = vadd.f32 %v2172, %v2543
    %v2545 = vpop.f32.mrf.mxu0
    %v2546 = vadd.f32 %v2176, %v2545
    %v2547 = vpop.f32.mrf.mxu0
    %v2548 = vpop.f32.mrf.mxu0
    %2549 = vdwg.mxu0
    %2550 = vmatprep.subr.bf16.mxu0 %v2412
    %2551 = vmatpush1.bf16.msra.mxu0 %v2411
    %2552 = vmatprep.subr.bf16.mxu0 %v2408
    %2553 = vmatpush1.bf16.msra.mxu0 %v2407
    %2554 = vmatprep.subr.bf16.mxu0 %v2404
    %2555 = vmatpush1.bf16.msra.mxu0 %v2403
    %2556 = vmatprep.subr.bf16.mxu0 %v2400
    %2557 = vmatpush1.bf16.msra.mxu0 %v2399
    %2558 = vmatprep.subr.bf16.mxu0 %v2396
    %2559 = vmatpush1.bf16.msra.mxu0 %v2395
    %2560 = vmatprep.subr.bf16.mxu0 %v2392
    %2561 = vmatpush1.bf16.msra.mxu0 %v2391
    %2562 = vmatprep.subr.bf16.mxu0 %v2388
    %2563 = vmatpush1.bf16.msra.mxu0 %v2387
    %2564 = vmatprep.subr.bf16.mxu0 %v2384
    %2565 = vmatpush1.bf16.msra.mxu0 %v2383
    %2566 = vmatprep.subr.bf16.mxu0 %v2444
    %2567 = vmatpush2.bf16.msra.mxu0 %v2443
    %2568 = vmatprep.subr.bf16.mxu0 %v2440
    %2569 = vmatpush2.bf16.msra.mxu0 %v2439
    %2570 = vmatprep.subr.bf16.mxu0 %v2436
    %2571 = vmatpush2.bf16.msra.mxu0 %v2435
    %2572 = vmatprep.subr.bf16.mxu0 %v2432
    %2573 = vmatpush2.bf16.msra.mxu0 %v2431
    %2574 = vmatprep.subr.bf16.mxu0 %v2428
    %2575 = vmatpush2.bf16.msra.mxu0 %v2427
    %2576 = vmatprep.subr.bf16.mxu0 %v2424
    %2577 = vmatpush2.bf16.msra.mxu0 %v2423
    %2578 = vmatprep.subr.bf16.mxu0 %v2420
    %2579 = vmatpush2.bf16.msra.mxu0 %v2419
    %2580 = vmatprep.subr.bf16.mxu0 %v2416
    %2581 = vmatpush2.bf16.msra.mxu0 %v2415
    %2582 = vmatprep.mubr.bf16.mxu0 %v2102
    %2583 = vmatmul.mubr.bf16.gmra.mxu0 %v2100
    %v2584 = vpop.f32.mrf.mxu0
    %v2585 = vadd.f32 %v2180, %v2584
    %v2586 = vpop.f32.mrf.mxu0
    %v2587 = vadd.f32 %v2184, %v2586
    %v2588 = vpop.f32.mrf.mxu0
    %v2589 = vpop.f32.mrf.mxu0
    %2590 = vdwg.mxu0
    %v2591 = vxor.u32 %v2544, 2147483648
    %v2592 = vmul.f32 %v2591, 1.442695
    %v2593 = vpow.pop %v2592
    %v2594 = vadd.f32 %v2593, 1.0
    %v2595 = vrcp.pop %v2594
    %v2596 = vmul.f32 1.0, %v2595
    %v2597 = vxor.u32 %v2546, 2147483648
    %v2598 = vmul.f32 %v2597, 1.442695
    %v2599 = vpow.pop %v2598
    %v2600 = vadd.f32 %v2599, 1.0
    %v2601 = vrcp.pop %v2600
    %v2602 = vmul.f32 1.0, %v2601
    %v2603 = vmul.f32 %v2596, %v2587
    %v2604 = vadd.f32 %v2585, %v2603
    %v2605 = vtanh.pop %v2604
    %v2606 = vsub.f32 1.0, %v2602
    %v2607 = vmul.f32 %v2606, %v2605
    %v2608 = vmul.f32 %v2602, %v2097
    %v2609 = vadd.f32 %v2607, %v2608
    %s2610 = scalar_lea.vmem [#allocation8], 16
    %2611 = vst [vmem:[%s2610] sm:$0xf] %v2609
    %v2612 = vpack.c.bf16 %v2609, %v2609
    %s2613 = scalar_lea.vmem [#allocation2], 10
    %v2614 = vld [vmem:[%s2613] sm:$0x3]
    %v2615 = vld [vmem:[#allocation5] sm:$0xff]
    %v2616 = vld [vmem:[#allocation5 + $0x8] sm:$0xff]
    %v2617 = vld [vmem:[#allocation5 + $0x10] sm:$0xff]
    %v2618 = vld [vmem:[#allocation5 + $0x18] sm:$0xff]
    %v2619 = vld [vmem:[#allocation5 + $0x20] sm:$0xff]
    %v2620 = vld [vmem:[#allocation5 + $0x28] sm:$0xff]
    %v2621 = vld [vmem:[#allocation5 + $0x30] sm:$0xff]
    %v2622 = vld [vmem:[#allocation5 + $0x38] sm:$0xff]
    %v2623 = vld [vmem:[#allocation5 + $0x40] sm:$0xff]
    %v2624 = vld [vmem:[#allocation5 + $0x48] sm:$0xff]
    %v2625 = vld [vmem:[#allocation5 + $0x50] sm:$0xff]
    %v2626 = vld [vmem:[#allocation5 + $0x58] sm:$0xff]
    %v2627 = vld [vmem:[#allocation5 + $0x60] sm:$0xff]
    %v2628 = vld [vmem:[#allocation5 + $0x68] sm:$0xff]
    %v2629 = vld [vmem:[#allocation5 + $0x70] sm:$0xff]
    %v2630 = vld [vmem:[#allocation5 + $0x78] sm:$0xff]
    %v2631 = vld [vmem:[#allocation5 + $0x80] sm:$0xff]
    %v2632 = vld [vmem:[#allocation5 + $0x88] sm:$0xff]
    %v2633 = vld [vmem:[#allocation5 + $0x90] sm:$0xff]
    %v2634 = vld [vmem:[#allocation5 + $0x98] sm:$0xff]
    %v2635 = vld [vmem:[#allocation5 + $0xa0] sm:$0xff]
    %v2636 = vld [vmem:[#allocation5 + $0xa8] sm:$0xff]
    %v2637 = vld [vmem:[#allocation5 + $0xb0] sm:$0xff]
    %v2638 = vld [vmem:[#allocation5 + $0xb8] sm:$0xff]
    %v2639 = vld [vmem:[#allocation5 + $0xc0] sm:$0xff]
    %v2640 = vld [vmem:[#allocation5 + $0xc8] sm:$0xff]
    %v2641 = vld [vmem:[#allocation5 + $0xd0] sm:$0xff]
    %v2642 = vld [vmem:[#allocation5 + $0xd8] sm:$0xff]
    %v2643 = vld [vmem:[#allocation5 + $0xe0] sm:$0xff]
    %v2644 = vld [vmem:[#allocation5 + $0xe8] sm:$0xff]
    %v2645 = vld [vmem:[#allocation5 + $0xf0] sm:$0xff]
    %v2646 = vld [vmem:[#allocation5 + $0xf8] sm:$0xff]
    %v2647 = vld [vmem:[#allocation5 + $0x100] sm:$0xff]
    %v2648 = vld [vmem:[#allocation5 + $0x108] sm:$0xff]
    %v2649 = vld [vmem:[#allocation5 + $0x110] sm:$0xff]
    %v2650 = vld [vmem:[#allocation5 + $0x118] sm:$0xff]
    %v2651 = vld [vmem:[#allocation5 + $0x120] sm:$0xff]
    %v2652 = vld [vmem:[#allocation5 + $0x128] sm:$0xff]
    %v2653 = vld [vmem:[#allocation5 + $0x130] sm:$0xff]
    %v2654 = vld [vmem:[#allocation5 + $0x138] sm:$0xff]
    %v2655 = vld [vmem:[#allocation5 + $0x140] sm:$0xff]
    %v2656 = vld [vmem:[#allocation5 + $0x148] sm:$0xff]
    %v2657 = vld [vmem:[#allocation5 + $0x150] sm:$0xff]
    %v2658 = vld [vmem:[#allocation5 + $0x158] sm:$0xff]
    %v2659 = vld [vmem:[#allocation5 + $0x160] sm:$0xff]
    %v2660 = vld [vmem:[#allocation5 + $0x168] sm:$0xff]
    %v2661 = vld [vmem:[#allocation5 + $0x170] sm:$0xff]
    %v2662 = vld [vmem:[#allocation5 + $0x178] sm:$0xff]
    %v2663 = vld [vmem:[#allocation5 + $0x180] sm:$0xff]
    %v2664 = vld [vmem:[#allocation5 + $0x188] sm:$0xff]
    %v2665 = vld [vmem:[#allocation5 + $0x190] sm:$0xff]
    %v2666 = vld [vmem:[#allocation5 + $0x198] sm:$0xff]
    %v2667 = vld [vmem:[#allocation5 + $0x1a0] sm:$0xff]
    %v2668 = vld [vmem:[#allocation5 + $0x1a8] sm:$0xff]
    %v2669 = vld [vmem:[#allocation5 + $0x1b0] sm:$0xff]
    %v2670 = vld [vmem:[#allocation5 + $0x1b8] sm:$0xff]
    %v2671 = vld [vmem:[#allocation5 + $0x1c0] sm:$0xff]
    %v2672 = vld [vmem:[#allocation5 + $0x1c8] sm:$0xff]
    %v2673 = vld [vmem:[#allocation5 + $0x1d0] sm:$0xff]
    %v2674 = vld [vmem:[#allocation5 + $0x1d8] sm:$0xff]
    %v2675 = vld [vmem:[#allocation5 + $0x1e0] sm:$0xff]
    %v2676 = vld [vmem:[#allocation5 + $0x1e8] sm:$0xff]
    %v2677 = vld [vmem:[#allocation5 + $0x1f0] sm:$0xff]
    %v2678 = vld [vmem:[#allocation5 + $0x1f8] sm:$0xff]
    %v2679 = vld [vmem:[#allocation7] sm:$0xf]
    %v2681 = vlaneseq
    %v2682 = vshrl.u32 %v2681, 7
    %v2683 = vsub.s32 0, %v2682
    %v2684 = vrot.slane %v2679, %v2683
    %v2685 = vlaneseq
    %v2686 = vshrl.u32 %v2685, 7
    %v2687 = vsub.s32 1, %v2686
    %v2688 = vrot.slane %v2679, %v2687
    %v2689 = vlaneseq
    %v2690 = vshrl.u32 %v2689, 7
    %v2691 = vsub.s32 2, %v2690
    %v2692 = vrot.slane %v2679, %v2691
    %v2693 = vlaneseq
    %v2694 = vshrl.u32 %v2693, 7
    %v2695 = vsub.s32 3, %v2694
    %v2696 = vrot.slane %v2679, %v2695
    %v2765 = vunpack.c.l.b16 %v2615
    %v2766 = vunpack.c.h.b16 %v2615
    %v2767 = vunpack.c.l.b16 %v2616
    %v2768 = vunpack.c.h.b16 %v2616
    %v2769 = vunpack.c.l.b16 %v2617
    %v2770 = vunpack.c.h.b16 %v2617
    %v2771 = vunpack.c.l.b16 %v2618
    %v2772 = vunpack.c.h.b16 %v2618
    %v2773 = vunpack.c.l.b16 %v2619
    %v2774 = vunpack.c.h.b16 %v2619
    %v2775 = vunpack.c.l.b16 %v2620
    %v2776 = vunpack.c.h.b16 %v2620
    %v2777 = vunpack.c.l.b16 %v2621
    %v2778 = vunpack.c.h.b16 %v2621
    %v2779 = vunpack.c.l.b16 %v2622
    %v2780 = vunpack.c.h.b16 %v2622
    %v2781 = vunpack.c.l.b16 %v2623
    %v2782 = vunpack.c.h.b16 %v2623
    %v2783 = vunpack.c.l.b16 %v2624
    %v2784 = vunpack.c.h.b16 %v2624
    %v2785 = vunpack.c.l.b16 %v2625
    %v2786 = vunpack.c.h.b16 %v2625
    %v2787 = vunpack.c.l.b16 %v2626
    %v2788 = vunpack.c.h.b16 %v2626
    %v2789 = vunpack.c.l.b16 %v2627
    %v2790 = vunpack.c.h.b16 %v2627
    %v2791 = vunpack.c.l.b16 %v2628
    %v2792 = vunpack.c.h.b16 %v2628
    %v2793 = vunpack.c.l.b16 %v2629
    %v2794 = vunpack.c.h.b16 %v2629
    %v2795 = vunpack.c.l.b16 %v2630
    %v2796 = vunpack.c.h.b16 %v2630
    %v2797 = vunpack.c.l.b16 %v2631
    %v2798 = vunpack.c.h.b16 %v2631
    %v2799 = vunpack.c.l.b16 %v2632
    %v2800 = vunpack.c.h.b16 %v2632
    %v2801 = vunpack.c.l.b16 %v2633
    %v2802 = vunpack.c.h.b16 %v2633
    %v2803 = vunpack.c.l.b16 %v2634
    %v2804 = vunpack.c.h.b16 %v2634
    %v2805 = vunpack.c.l.b16 %v2635
    %v2806 = vunpack.c.h.b16 %v2635
    %v2807 = vunpack.c.l.b16 %v2636
    %v2808 = vunpack.c.h.b16 %v2636
    %v2809 = vunpack.c.l.b16 %v2637
    %v2810 = vunpack.c.h.b16 %v2637
    %v2811 = vunpack.c.l.b16 %v2638
    %v2812 = vunpack.c.h.b16 %v2638
    %v2813 = vunpack.c.l.b16 %v2639
    %v2814 = vunpack.c.h.b16 %v2639
    %v2815 = vunpack.c.l.b16 %v2640
    %v2816 = vunpack.c.h.b16 %v2640
    %v2817 = vunpack.c.l.b16 %v2641
    %v2818 = vunpack.c.h.b16 %v2641
    %v2819 = vunpack.c.l.b16 %v2642
    %v2820 = vunpack.c.h.b16 %v2642
    %v2821 = vunpack.c.l.b16 %v2643
    %v2822 = vunpack.c.h.b16 %v2643
    %v2823 = vunpack.c.l.b16 %v2644
    %v2824 = vunpack.c.h.b16 %v2644
    %v2825 = vunpack.c.l.b16 %v2645
    %v2826 = vunpack.c.h.b16 %v2645
    %v2827 = vunpack.c.l.b16 %v2646
    %v2828 = vunpack.c.h.b16 %v2646
    %v2829 = vunpack.c.l.b16 %v2647
    %v2830 = vunpack.c.h.b16 %v2647
    %v2831 = vunpack.c.l.b16 %v2648
    %v2832 = vunpack.c.h.b16 %v2648
    %v2833 = vunpack.c.l.b16 %v2649
    %v2834 = vunpack.c.h.b16 %v2649
    %v2835 = vunpack.c.l.b16 %v2650
    %v2836 = vunpack.c.h.b16 %v2650
    %v2837 = vunpack.c.l.b16 %v2651
    %v2838 = vunpack.c.h.b16 %v2651
    %v2839 = vunpack.c.l.b16 %v2652
    %v2840 = vunpack.c.h.b16 %v2652
    %v2841 = vunpack.c.l.b16 %v2653
    %v2842 = vunpack.c.h.b16 %v2653
    %v2843 = vunpack.c.l.b16 %v2654
    %v2844 = vunpack.c.h.b16 %v2654
    %v2845 = vunpack.c.l.b16 %v2655
    %v2846 = vunpack.c.h.b16 %v2655
    %v2847 = vunpack.c.l.b16 %v2656
    %v2848 = vunpack.c.h.b16 %v2656
    %v2849 = vunpack.c.l.b16 %v2657
    %v2850 = vunpack.c.h.b16 %v2657
    %v2851 = vunpack.c.l.b16 %v2658
    %v2852 = vunpack.c.h.b16 %v2658
    %v2853 = vunpack.c.l.b16 %v2659
    %v2854 = vunpack.c.h.b16 %v2659
    %v2855 = vunpack.c.l.b16 %v2660
    %v2856 = vunpack.c.h.b16 %v2660
    %v2857 = vunpack.c.l.b16 %v2661
    %v2858 = vunpack.c.h.b16 %v2661
    %v2859 = vunpack.c.l.b16 %v2662
    %v2860 = vunpack.c.h.b16 %v2662
    %v2861 = vunpack.c.l.b16 %v2663
    %v2862 = vunpack.c.h.b16 %v2663
    %v2863 = vunpack.c.l.b16 %v2664
    %v2864 = vunpack.c.h.b16 %v2664
    %v2865 = vunpack.c.l.b16 %v2665
    %v2866 = vunpack.c.h.b16 %v2665
    %v2867 = vunpack.c.l.b16 %v2666
    %v2868 = vunpack.c.h.b16 %v2666
    %v2869 = vunpack.c.l.b16 %v2667
    %v2870 = vunpack.c.h.b16 %v2667
    %v2871 = vunpack.c.l.b16 %v2668
    %v2872 = vunpack.c.h.b16 %v2668
    %v2873 = vunpack.c.l.b16 %v2669
    %v2874 = vunpack.c.h.b16 %v2669
    %v2875 = vunpack.c.l.b16 %v2670
    %v2876 = vunpack.c.h.b16 %v2670
    %v2877 = vunpack.c.l.b16 %v2671
    %v2878 = vunpack.c.h.b16 %v2671
    %v2879 = vunpack.c.l.b16 %v2672
    %v2880 = vunpack.c.h.b16 %v2672
    %v2881 = vunpack.c.l.b16 %v2673
    %v2882 = vunpack.c.h.b16 %v2673
    %v2883 = vunpack.c.l.b16 %v2674
    %v2884 = vunpack.c.h.b16 %v2674
    %v2885 = vunpack.c.l.b16 %v2675
    %v2886 = vunpack.c.h.b16 %v2675
    %v2887 = vunpack.c.l.b16 %v2676
    %v2888 = vunpack.c.h.b16 %v2676
    %v2889 = vunpack.c.l.b16 %v2677
    %v2890 = vunpack.c.h.b16 %v2677
    %v2891 = vunpack.c.l.b16 %v2678
    %v2892 = vunpack.c.h.b16 %v2678
    %v2893 = vpack.c.b16 %v2769, %v2765
    %v2894 = vpack.c.b16 %v2770, %v2766
    %v2895 = vpack.c.b16 %v2771, %v2767
    %v2896 = vpack.c.b16 %v2772, %v2768
    %v2897 = vpack.c.b16 %v2777, %v2773
    %v2898 = vpack.c.b16 %v2778, %v2774
    %v2899 = vpack.c.b16 %v2779, %v2775
    %v2900 = vpack.c.b16 %v2780, %v2776
    %v2901 = vpack.c.b16 %v2785, %v2781
    %v2902 = vpack.c.b16 %v2786, %v2782
    %v2903 = vpack.c.b16 %v2787, %v2783
    %v2904 = vpack.c.b16 %v2788, %v2784
    %v2905 = vpack.c.b16 %v2793, %v2789
    %v2906 = vpack.c.b16 %v2794, %v2790
    %v2907 = vpack.c.b16 %v2795, %v2791
    %v2908 = vpack.c.b16 %v2796, %v2792
    %v2909 = vpack.c.b16 %v2801, %v2797
    %v2910 = vpack.c.b16 %v2802, %v2798
    %v2911 = vpack.c.b16 %v2803, %v2799
    %v2912 = vpack.c.b16 %v2804, %v2800
    %v2913 = vpack.c.b16 %v2809, %v2805
    %v2914 = vpack.c.b16 %v2810, %v2806
    %v2915 = vpack.c.b16 %v2811, %v2807
    %v2916 = vpack.c.b16 %v2812, %v2808
    %v2917 = vpack.c.b16 %v2817, %v2813
    %v2918 = vpack.c.b16 %v2818, %v2814
    %v2919 = vpack.c.b16 %v2819, %v2815
    %v2920 = vpack.c.b16 %v2820, %v2816
    %v2921 = vpack.c.b16 %v2825, %v2821
    %v2922 = vpack.c.b16 %v2826, %v2822
    %v2923 = vpack.c.b16 %v2827, %v2823
    %v2924 = vpack.c.b16 %v2828, %v2824
    %v2925 = vpack.c.b16 %v2833, %v2829
    %v2926 = vpack.c.b16 %v2834, %v2830
    %v2927 = vpack.c.b16 %v2835, %v2831
    %v2928 = vpack.c.b16 %v2836, %v2832
    %v2929 = vpack.c.b16 %v2841, %v2837
    %v2930 = vpack.c.b16 %v2842, %v2838
    %v2931 = vpack.c.b16 %v2843, %v2839
    %v2932 = vpack.c.b16 %v2844, %v2840
    %v2933 = vpack.c.b16 %v2849, %v2845
    %v2934 = vpack.c.b16 %v2850, %v2846
    %v2935 = vpack.c.b16 %v2851, %v2847
    %v2936 = vpack.c.b16 %v2852, %v2848
    %v2937 = vpack.c.b16 %v2857, %v2853
    %v2938 = vpack.c.b16 %v2858, %v2854
    %v2939 = vpack.c.b16 %v2859, %v2855
    %v2940 = vpack.c.b16 %v2860, %v2856
    %v2941 = vpack.c.b16 %v2865, %v2861
    %v2942 = vpack.c.b16 %v2866, %v2862
    %v2943 = vpack.c.b16 %v2867, %v2863
    %v2944 = vpack.c.b16 %v2868, %v2864
    %v2945 = vpack.c.b16 %v2873, %v2869
    %v2946 = vpack.c.b16 %v2874, %v2870
    %v2947 = vpack.c.b16 %v2875, %v2871
    %v2948 = vpack.c.b16 %v2876, %v2872
    %v2949 = vpack.c.b16 %v2881, %v2877
    %v2950 = vpack.c.b16 %v2882, %v2878
    %v2951 = vpack.c.b16 %v2883, %v2879
    %v2952 = vpack.c.b16 %v2884, %v2880
    %v2953 = vpack.c.b16 %v2889, %v2885
    %v2954 = vpack.c.b16 %v2890, %v2886
    %v2955 = vpack.c.b16 %v2891, %v2887
    %v2956 = vpack.c.b16 %v2892, %v2888
    %3021 = vmatprep.subr.bf16.mxu0 %v2922
    %3022 = vmatpush1.bf16.msra.mxu0 %v2921
    %3023 = vmatprep.subr.bf16.mxu0 %v2918
    %3024 = vmatpush1.bf16.msra.mxu0 %v2917
    %3025 = vmatprep.subr.bf16.mxu0 %v2914
    %3026 = vmatpush1.bf16.msra.mxu0 %v2913
    %3027 = vmatprep.subr.bf16.mxu0 %v2910
    %3028 = vmatpush1.bf16.msra.mxu0 %v2909
    %3029 = vmatprep.subr.bf16.mxu0 %v2906
    %3030 = vmatpush1.bf16.msra.mxu0 %v2905
    %3031 = vmatprep.subr.bf16.mxu0 %v2902
    %3032 = vmatpush1.bf16.msra.mxu0 %v2901
    %3033 = vmatprep.subr.bf16.mxu0 %v2898
    %3034 = vmatpush1.bf16.msra.mxu0 %v2897
    %3035 = vmatprep.subr.bf16.mxu0 %v2894
    %3036 = vmatpush1.bf16.msra.mxu0 %v2893
    %3037 = vmatprep.subr.bf16.mxu0 %v2954
    %3038 = vmatpush2.bf16.msra.mxu0 %v2953
    %3039 = vmatprep.subr.bf16.mxu0 %v2950
    %3040 = vmatpush2.bf16.msra.mxu0 %v2949
    %3041 = vmatprep.subr.bf16.mxu0 %v2946
    %3042 = vmatpush2.bf16.msra.mxu0 %v2945
    %3043 = vmatprep.subr.bf16.mxu0 %v2942
    %3044 = vmatpush2.bf16.msra.mxu0 %v2941
    %3045 = vmatprep.subr.bf16.mxu0 %v2938
    %3046 = vmatpush2.bf16.msra.mxu0 %v2937
    %3047 = vmatprep.subr.bf16.mxu0 %v2934
    %3048 = vmatpush2.bf16.msra.mxu0 %v2933
    %3049 = vmatprep.subr.bf16.mxu0 %v2930
    %3050 = vmatpush2.bf16.msra.mxu0 %v2929
    %3051 = vmatprep.subr.bf16.mxu0 %v2926
    %3052 = vmatpush2.bf16.msra.mxu0 %v2925
    %3053 = vmatprep.mubr.bf16.mxu0 %v2614
    %3054 = vmatmul.mubr.bf16.gmra.mxu0 %v2612
    %v3055 = vpop.f32.mrf.mxu0
    %v3056 = vadd.f32 %v2684, %v3055
    %v3057 = vpop.f32.mrf.mxu0
    %v3058 = vadd.f32 %v2688, %v3057
    %v3059 = vpop.f32.mrf.mxu0
    %v3060 = vpop.f32.mrf.mxu0
    %3061 = vdwg.mxu0
    %3062 = vmatprep.subr.bf16.mxu0 %v2924
    %3063 = vmatpush1.bf16.msra.mxu0 %v2923
    %3064 = vmatprep.subr.bf16.mxu0 %v2920
    %3065 = vmatpush1.bf16.msra.mxu0 %v2919
    %3066 = vmatprep.subr.bf16.mxu0 %v2916
    %3067 = vmatpush1.bf16.msra.mxu0 %v2915
    %3068 = vmatprep.subr.bf16.mxu0 %v2912
    %3069 = vmatpush1.bf16.msra.mxu0 %v2911
    %3070 = vmatprep.subr.bf16.mxu0 %v2908
    %3071 = vmatpush1.bf16.msra.mxu0 %v2907
    %3072 = vmatprep.subr.bf16.mxu0 %v2904
    %3073 = vmatpush1.bf16.msra.mxu0 %v2903
    %3074 = vmatprep.subr.bf16.mxu0 %v2900
    %3075 = vmatpush1.bf16.msra.mxu0 %v2899
    %3076 = vmatprep.subr.bf16.mxu0 %v2896
    %3077 = vmatpush1.bf16.msra.mxu0 %v2895
    %3078 = vmatprep.subr.bf16.mxu0 %v2956
    %3079 = vmatpush2.bf16.msra.mxu0 %v2955
    %3080 = vmatprep.subr.bf16.mxu0 %v2952
    %3081 = vmatpush2.bf16.msra.mxu0 %v2951
    %3082 = vmatprep.subr.bf16.mxu0 %v2948
    %3083 = vmatpush2.bf16.msra.mxu0 %v2947
    %3084 = vmatprep.subr.bf16.mxu0 %v2944
    %3085 = vmatpush2.bf16.msra.mxu0 %v2943
    %3086 = vmatprep.subr.bf16.mxu0 %v2940
    %3087 = vmatpush2.bf16.msra.mxu0 %v2939
    %3088 = vmatprep.subr.bf16.mxu0 %v2936
    %3089 = vmatpush2.bf16.msra.mxu0 %v2935
    %3090 = vmatprep.subr.bf16.mxu0 %v2932
    %3091 = vmatpush2.bf16.msra.mxu0 %v2931
    %3092 = vmatprep.subr.bf16.mxu0 %v2928
    %3093 = vmatpush2.bf16.msra.mxu0 %v2927
    %3094 = vmatprep.mubr.bf16.mxu0 %v2614
    %3095 = vmatmul.mubr.bf16.gmra.mxu0 %v2612
    %v3096 = vpop.f32.mrf.mxu0
    %v3097 = vadd.f32 %v2692, %v3096
    %v3098 = vpop.f32.mrf.mxu0
    %v3099 = vadd.f32 %v2696, %v3098
    %v3100 = vpop.f32.mrf.mxu0
    %v3101 = vpop.f32.mrf.mxu0
    %3102 = vdwg.mxu0
    %v3103 = vxor.u32 %v3056, 2147483648
    %v3104 = vmul.f32 %v3103, 1.442695
    %v3105 = vpow.pop %v3104
    %v3106 = vadd.f32 %v3105, 1.0
    %v3107 = vrcp.pop %v3106
    %v3108 = vmul.f32 1.0, %v3107
    %v3109 = vxor.u32 %v3058, 2147483648
    %v3110 = vmul.f32 %v3109, 1.442695
    %v3111 = vpow.pop %v3110
    %v3112 = vadd.f32 %v3111, 1.0
    %v3113 = vrcp.pop %v3112
    %v3114 = vmul.f32 1.0, %v3113
    %v3115 = vmul.f32 %v3108, %v3099
    %v3116 = vadd.f32 %v3097, %v3115
    %v3117 = vtanh.pop %v3116
    %v3118 = vsub.f32 1.0, %v3114
    %v3119 = vmul.f32 %v3118, %v3117
    %v3120 = vmul.f32 %v3114, %v2609
    %v3121 = vadd.f32 %v3119, %v3120
    %s3122 = scalar_lea.vmem [#allocation8], 20
    %3123 = vst [vmem:[%s3122] sm:$0xf] %v3121
    %v3124 = vpack.c.bf16 %v3121, %v3121
    %s3125 = scalar_lea.vmem [#allocation2], 12
    %v3126 = vld [vmem:[%s3125] sm:$0x3]
    %v3127 = vld [vmem:[#allocation5] sm:$0xff]
    %v3128 = vld [vmem:[#allocation5 + $0x8] sm:$0xff]
    %v3129 = vld [vmem:[#allocation5 + $0x10] sm:$0xff]
    %v3130 = vld [vmem:[#allocation5 + $0x18] sm:$0xff]
    %v3131 = vld [vmem:[#allocation5 + $0x20] sm:$0xff]
    %v3132 = vld [vmem:[#allocation5 + $0x28] sm:$0xff]
    %v3133 = vld [vmem:[#allocation5 + $0x30] sm:$0xff]
    %v3134 = vld [vmem:[#allocation5 + $0x38] sm:$0xff]
    %v3135 = vld [vmem:[#allocation5 + $0x40] sm:$0xff]
    %v3136 = vld [vmem:[#allocation5 + $0x48] sm:$0xff]
    %v3137 = vld [vmem:[#allocation5 + $0x50] sm:$0xff]
    %v3138 = vld [vmem:[#allocation5 + $0x58] sm:$0xff]
    %v3139 = vld [vmem:[#allocation5 + $0x60] sm:$0xff]
    %v3140 = vld [vmem:[#allocation5 + $0x68] sm:$0xff]
    %v3141 = vld [vmem:[#allocation5 + $0x70] sm:$0xff]
    %v3142 = vld [vmem:[#allocation5 + $0x78] sm:$0xff]
    %v3143 = vld [vmem:[#allocation5 + $0x80] sm:$0xff]
    %v3144 = vld [vmem:[#allocation5 + $0x88] sm:$0xff]
    %v3145 = vld [vmem:[#allocation5 + $0x90] sm:$0xff]
    %v3146 = vld [vmem:[#allocation5 + $0x98] sm:$0xff]
    %v3147 = vld [vmem:[#allocation5 + $0xa0] sm:$0xff]
    %v3148 = vld [vmem:[#allocation5 + $0xa8] sm:$0xff]
    %v3149 = vld [vmem:[#allocation5 + $0xb0] sm:$0xff]
    %v3150 = vld [vmem:[#allocation5 + $0xb8] sm:$0xff]
    %v3151 = vld [vmem:[#allocation5 + $0xc0] sm:$0xff]
    %v3152 = vld [vmem:[#allocation5 + $0xc8] sm:$0xff]
    %v3153 = vld [vmem:[#allocation5 + $0xd0] sm:$0xff]
    %v3154 = vld [vmem:[#allocation5 + $0xd8] sm:$0xff]
    %v3155 = vld [vmem:[#allocation5 + $0xe0] sm:$0xff]
    %v3156 = vld [vmem:[#allocation5 + $0xe8] sm:$0xff]
    %v3157 = vld [vmem:[#allocation5 + $0xf0] sm:$0xff]
    %v3158 = vld [vmem:[#allocation5 + $0xf8] sm:$0xff]
    %v3159 = vld [vmem:[#allocation5 + $0x100] sm:$0xff]
    %v3160 = vld [vmem:[#allocation5 + $0x108] sm:$0xff]
    %v3161 = vld [vmem:[#allocation5 + $0x110] sm:$0xff]
    %v3162 = vld [vmem:[#allocation5 + $0x118] sm:$0xff]
    %v3163 = vld [vmem:[#allocation5 + $0x120] sm:$0xff]
    %v3164 = vld [vmem:[#allocation5 + $0x128] sm:$0xff]
    %v3165 = vld [vmem:[#allocation5 + $0x130] sm:$0xff]
    %v3166 = vld [vmem:[#allocation5 + $0x138] sm:$0xff]
    %v3167 = vld [vmem:[#allocation5 + $0x140] sm:$0xff]
    %v3168 = vld [vmem:[#allocation5 + $0x148] sm:$0xff]
    %v3169 = vld [vmem:[#allocation5 + $0x150] sm:$0xff]
    %v3170 = vld [vmem:[#allocation5 + $0x158] sm:$0xff]
    %v3171 = vld [vmem:[#allocation5 + $0x160] sm:$0xff]
    %v3172 = vld [vmem:[#allocation5 + $0x168] sm:$0xff]
    %v3173 = vld [vmem:[#allocation5 + $0x170] sm:$0xff]
    %v3174 = vld [vmem:[#allocation5 + $0x178] sm:$0xff]
    %v3175 = vld [vmem:[#allocation5 + $0x180] sm:$0xff]
    %v3176 = vld [vmem:[#allocation5 + $0x188] sm:$0xff]
    %v3177 = vld [vmem:[#allocation5 + $0x190] sm:$0xff]
    %v3178 = vld [vmem:[#allocation5 + $0x198] sm:$0xff]
    %v3179 = vld [vmem:[#allocation5 + $0x1a0] sm:$0xff]
    %v3180 = vld [vmem:[#allocation5 + $0x1a8] sm:$0xff]
    %v3181 = vld [vmem:[#allocation5 + $0x1b0] sm:$0xff]
    %v3182 = vld [vmem:[#allocation5 + $0x1b8] sm:$0xff]
    %v3183 = vld [vmem:[#allocation5 + $0x1c0] sm:$0xff]
    %v3184 = vld [vmem:[#allocation5 + $0x1c8] sm:$0xff]
    %v3185 = vld [vmem:[#allocation5 + $0x1d0] sm:$0xff]
    %v3186 = vld [vmem:[#allocation5 + $0x1d8] sm:$0xff]
    %v3187 = vld [vmem:[#allocation5 + $0x1e0] sm:$0xff]
    %v3188 = vld [vmem:[#allocation5 + $0x1e8] sm:$0xff]
    %v3189 = vld [vmem:[#allocation5 + $0x1f0] sm:$0xff]
    %v3190 = vld [vmem:[#allocation5 + $0x1f8] sm:$0xff]
    %v3191 = vld [vmem:[#allocation7] sm:$0xf]
    %v3193 = vlaneseq
    %v3194 = vshrl.u32 %v3193, 7
    %v3195 = vsub.s32 0, %v3194
    %v3196 = vrot.slane %v3191, %v3195
    %v3197 = vlaneseq
    %v3198 = vshrl.u32 %v3197, 7
    %v3199 = vsub.s32 1, %v3198
    %v3200 = vrot.slane %v3191, %v3199
    %v3201 = vlaneseq
    %v3202 = vshrl.u32 %v3201, 7
    %v3203 = vsub.s32 2, %v3202
    %v3204 = vrot.slane %v3191, %v3203
    %v3205 = vlaneseq
    %v3206 = vshrl.u32 %v3205, 7
    %v3207 = vsub.s32 3, %v3206
    %v3208 = vrot.slane %v3191, %v3207
    %v3277 = vunpack.c.l.b16 %v3127
    %v3278 = vunpack.c.h.b16 %v3127
    %v3279 = vunpack.c.l.b16 %v3128
    %v3280 = vunpack.c.h.b16 %v3128
    %v3281 = vunpack.c.l.b16 %v3129
    %v3282 = vunpack.c.h.b16 %v3129
    %v3283 = vunpack.c.l.b16 %v3130
    %v3284 = vunpack.c.h.b16 %v3130
    %v3285 = vunpack.c.l.b16 %v3131
    %v3286 = vunpack.c.h.b16 %v3131
    %v3287 = vunpack.c.l.b16 %v3132
    %v3288 = vunpack.c.h.b16 %v3132
    %v3289 = vunpack.c.l.b16 %v3133
    %v3290 = vunpack.c.h.b16 %v3133
    %v3291 = vunpack.c.l.b16 %v3134
    %v3292 = vunpack.c.h.b16 %v3134
    %v3293 = vunpack.c.l.b16 %v3135
    %v3294 = vunpack.c.h.b16 %v3135
    %v3295 = vunpack.c.l.b16 %v3136
    %v3296 = vunpack.c.h.b16 %v3136
    %v3297 = vunpack.c.l.b16 %v3137
    %v3298 = vunpack.c.h.b16 %v3137
    %v3299 = vunpack.c.l.b16 %v3138
    %v3300 = vunpack.c.h.b16 %v3138
    %v3301 = vunpack.c.l.b16 %v3139
    %v3302 = vunpack.c.h.b16 %v3139
    %v3303 = vunpack.c.l.b16 %v3140
    %v3304 = vunpack.c.h.b16 %v3140
    %v3305 = vunpack.c.l.b16 %v3141
    %v3306 = vunpack.c.h.b16 %v3141
    %v3307 = vunpack.c.l.b16 %v3142
    %v3308 = vunpack.c.h.b16 %v3142
    %v3309 = vunpack.c.l.b16 %v3143
    %v3310 = vunpack.c.h.b16 %v3143
    %v3311 = vunpack.c.l.b16 %v3144
    %v3312 = vunpack.c.h.b16 %v3144
    %v3313 = vunpack.c.l.b16 %v3145
    %v3314 = vunpack.c.h.b16 %v3145
    %v3315 = vunpack.c.l.b16 %v3146
    %v3316 = vunpack.c.h.b16 %v3146
    %v3317 = vunpack.c.l.b16 %v3147
    %v3318 = vunpack.c.h.b16 %v3147
    %v3319 = vunpack.c.l.b16 %v3148
    %v3320 = vunpack.c.h.b16 %v3148
    %v3321 = vunpack.c.l.b16 %v3149
    %v3322 = vunpack.c.h.b16 %v3149
    %v3323 = vunpack.c.l.b16 %v3150
    %v3324 = vunpack.c.h.b16 %v3150
    %v3325 = vunpack.c.l.b16 %v3151
    %v3326 = vunpack.c.h.b16 %v3151
    %v3327 = vunpack.c.l.b16 %v3152
    %v3328 = vunpack.c.h.b16 %v3152
    %v3329 = vunpack.c.l.b16 %v3153
    %v3330 = vunpack.c.h.b16 %v3153
    %v3331 = vunpack.c.l.b16 %v3154
    %v3332 = vunpack.c.h.b16 %v3154
    %v3333 = vunpack.c.l.b16 %v3155
    %v3334 = vunpack.c.h.b16 %v3155
    %v3335 = vunpack.c.l.b16 %v3156
    %v3336 = vunpack.c.h.b16 %v3156
    %v3337 = vunpack.c.l.b16 %v3157
    %v3338 = vunpack.c.h.b16 %v3157
    %v3339 = vunpack.c.l.b16 %v3158
    %v3340 = vunpack.c.h.b16 %v3158
    %v3341 = vunpack.c.l.b16 %v3159
    %v3342 = vunpack.c.h.b16 %v3159
    %v3343 = vunpack.c.l.b16 %v3160
    %v3344 = vunpack.c.h.b16 %v3160
    %v3345 = vunpack.c.l.b16 %v3161
    %v3346 = vunpack.c.h.b16 %v3161
    %v3347 = vunpack.c.l.b16 %v3162
    %v3348 = vunpack.c.h.b16 %v3162
    %v3349 = vunpack.c.l.b16 %v3163
    %v3350 = vunpack.c.h.b16 %v3163
    %v3351 = vunpack.c.l.b16 %v3164
    %v3352 = vunpack.c.h.b16 %v3164
    %v3353 = vunpack.c.l.b16 %v3165
    %v3354 = vunpack.c.h.b16 %v3165
    %v3355 = vunpack.c.l.b16 %v3166
    %v3356 = vunpack.c.h.b16 %v3166
    %v3357 = vunpack.c.l.b16 %v3167
    %v3358 = vunpack.c.h.b16 %v3167
    %v3359 = vunpack.c.l.b16 %v3168
    %v3360 = vunpack.c.h.b16 %v3168
    %v3361 = vunpack.c.l.b16 %v3169
    %v3362 = vunpack.c.h.b16 %v3169
    %v3363 = vunpack.c.l.b16 %v3170
    %v3364 = vunpack.c.h.b16 %v3170
    %v3365 = vunpack.c.l.b16 %v3171
    %v3366 = vunpack.c.h.b16 %v3171
    %v3367 = vunpack.c.l.b16 %v3172
    %v3368 = vunpack.c.h.b16 %v3172
    %v3369 = vunpack.c.l.b16 %v3173
    %v3370 = vunpack.c.h.b16 %v3173
    %v3371 = vunpack.c.l.b16 %v3174
    %v3372 = vunpack.c.h.b16 %v3174
    %v3373 = vunpack.c.l.b16 %v3175
    %v3374 = vunpack.c.h.b16 %v3175
    %v3375 = vunpack.c.l.b16 %v3176
    %v3376 = vunpack.c.h.b16 %v3176
    %v3377 = vunpack.c.l.b16 %v3177
    %v3378 = vunpack.c.h.b16 %v3177
    %v3379 = vunpack.c.l.b16 %v3178
    %v3380 = vunpack.c.h.b16 %v3178
    %v3381 = vunpack.c.l.b16 %v3179
    %v3382 = vunpack.c.h.b16 %v3179
    %v3383 = vunpack.c.l.b16 %v3180
    %v3384 = vunpack.c.h.b16 %v3180
    %v3385 = vunpack.c.l.b16 %v3181
    %v3386 = vunpack.c.h.b16 %v3181
    %v3387 = vunpack.c.l.b16 %v3182
    %v3388 = vunpack.c.h.b16 %v3182
    %v3389 = vunpack.c.l.b16 %v3183
    %v3390 = vunpack.c.h.b16 %v3183
    %v3391 = vunpack.c.l.b16 %v3184
    %v3392 = vunpack.c.h.b16 %v3184
    %v3393 = vunpack.c.l.b16 %v3185
    %v3394 = vunpack.c.h.b16 %v3185
    %v3395 = vunpack.c.l.b16 %v3186
    %v3396 = vunpack.c.h.b16 %v3186
    %v3397 = vunpack.c.l.b16 %v3187
    %v3398 = vunpack.c.h.b16 %v3187
    %v3399 = vunpack.c.l.b16 %v3188
    %v3400 = vunpack.c.h.b16 %v3188
    %v3401 = vunpack.c.l.b16 %v3189
    %v3402 = vunpack.c.h.b16 %v3189
    %v3403 = vunpack.c.l.b16 %v3190
    %v3404 = vunpack.c.h.b16 %v3190
    %v3405 = vpack.c.b16 %v3281, %v3277
    %v3406 = vpack.c.b16 %v3282, %v3278
    %v3407 = vpack.c.b16 %v3283, %v3279
    %v3408 = vpack.c.b16 %v3284, %v3280
    %v3409 = vpack.c.b16 %v3289, %v3285
    %v3410 = vpack.c.b16 %v3290, %v3286
    %v3411 = vpack.c.b16 %v3291, %v3287
    %v3412 = vpack.c.b16 %v3292, %v3288
    %v3413 = vpack.c.b16 %v3297, %v3293
    %v3414 = vpack.c.b16 %v3298, %v3294
    %v3415 = vpack.c.b16 %v3299, %v3295
    %v3416 = vpack.c.b16 %v3300, %v3296
    %v3417 = vpack.c.b16 %v3305, %v3301
    %v3418 = vpack.c.b16 %v3306, %v3302
    %v3419 = vpack.c.b16 %v3307, %v3303
    %v3420 = vpack.c.b16 %v3308, %v3304
    %v3421 = vpack.c.b16 %v3313, %v3309
    %v3422 = vpack.c.b16 %v3314, %v3310
    %v3423 = vpack.c.b16 %v3315, %v3311
    %v3424 = vpack.c.b16 %v3316, %v3312
    %v3425 = vpack.c.b16 %v3321, %v3317
    %v3426 = vpack.c.b16 %v3322, %v3318
    %v3427 = vpack.c.b16 %v3323, %v3319
    %v3428 = vpack.c.b16 %v3324, %v3320
    %v3429 = vpack.c.b16 %v3329, %v3325
    %v3430 = vpack.c.b16 %v3330, %v3326
    %v3431 = vpack.c.b16 %v3331, %v3327
    %v3432 = vpack.c.b16 %v3332, %v3328
    %v3433 = vpack.c.b16 %v3337, %v3333
    %v3434 = vpack.c.b16 %v3338, %v3334
    %v3435 = vpack.c.b16 %v3339, %v3335
    %v3436 = vpack.c.b16 %v3340, %v3336
    %v3437 = vpack.c.b16 %v3345, %v3341
    %v3438 = vpack.c.b16 %v3346, %v3342
    %v3439 = vpack.c.b16 %v3347, %v3343
    %v3440 = vpack.c.b16 %v3348, %v3344
    %v3441 = vpack.c.b16 %v3353, %v3349
    %v3442 = vpack.c.b16 %v3354, %v3350
    %v3443 = vpack.c.b16 %v3355, %v3351
    %v3444 = vpack.c.b16 %v3356, %v3352
    %v3445 = vpack.c.b16 %v3361, %v3357
    %v3446 = vpack.c.b16 %v3362, %v3358
    %v3447 = vpack.c.b16 %v3363, %v3359
    %v3448 = vpack.c.b16 %v3364, %v3360
    %v3449 = vpack.c.b16 %v3369, %v3365
    %v3450 = vpack.c.b16 %v3370, %v3366
    %v3451 = vpack.c.b16 %v3371, %v3367
    %v3452 = vpack.c.b16 %v3372, %v3368
    %v3453 = vpack.c.b16 %v3377, %v3373
    %v3454 = vpack.c.b16 %v3378, %v3374
    %v3455 = vpack.c.b16 %v3379, %v3375
    %v3456 = vpack.c.b16 %v3380, %v3376
    %v3457 = vpack.c.b16 %v3385, %v3381
    %v3458 = vpack.c.b16 %v3386, %v3382
    %v3459 = vpack.c.b16 %v3387, %v3383
    %v3460 = vpack.c.b16 %v3388, %v3384
    %v3461 = vpack.c.b16 %v3393, %v3389
    %v3462 = vpack.c.b16 %v3394, %v3390
    %v3463 = vpack.c.b16 %v3395, %v3391
    %v3464 = vpack.c.b16 %v3396, %v3392
    %v3465 = vpack.c.b16 %v3401, %v3397
    %v3466 = vpack.c.b16 %v3402, %v3398
    %v3467 = vpack.c.b16 %v3403, %v3399
    %v3468 = vpack.c.b16 %v3404, %v3400
    %3533 = vmatprep.subr.bf16.mxu0 %v3434
    %3534 = vmatpush1.bf16.msra.mxu0 %v3433
    %3535 = vmatprep.subr.bf16.mxu0 %v3430
    %3536 = vmatpush1.bf16.msra.mxu0 %v3429
    %3537 = vmatprep.subr.bf16.mxu0 %v3426
    %3538 = vmatpush1.bf16.msra.mxu0 %v3425
    %3539 = vmatprep.subr.bf16.mxu0 %v3422
    %3540 = vmatpush1.bf16.msra.mxu0 %v3421
    %3541 = vmatprep.subr.bf16.mxu0 %v3418
    %3542 = vmatpush1.bf16.msra.mxu0 %v3417
    %3543 = vmatprep.subr.bf16.mxu0 %v3414
    %3544 = vmatpush1.bf16.msra.mxu0 %v3413
    %3545 = vmatprep.subr.bf16.mxu0 %v3410
    %3546 = vmatpush1.bf16.msra.mxu0 %v3409
    %3547 = vmatprep.subr.bf16.mxu0 %v3406
    %3548 = vmatpush1.bf16.msra.mxu0 %v3405
    %3549 = vmatprep.subr.bf16.mxu0 %v3466
    %3550 = vmatpush2.bf16.msra.mxu0 %v3465
    %3551 = vmatprep.subr.bf16.mxu0 %v3462
    %3552 = vmatpush2.bf16.msra.mxu0 %v3461
    %3553 = vmatprep.subr.bf16.mxu0 %v3458
    %3554 = vmatpush2.bf16.msra.mxu0 %v3457
    %3555 = vmatprep.subr.bf16.mxu0 %v3454
    %3556 = vmatpush2.bf16.msra.mxu0 %v3453
    %3557 = vmatprep.subr.bf16.mxu0 %v3450
    %3558 = vmatpush2.bf16.msra.mxu0 %v3449
    %3559 = vmatprep.subr.bf16.mxu0 %v3446
    %3560 = vmatpush2.bf16.msra.mxu0 %v3445
    %3561 = vmatprep.subr.bf16.mxu0 %v3442
    %3562 = vmatpush2.bf16.msra.mxu0 %v3441
    %3563 = vmatprep.subr.bf16.mxu0 %v3438
    %3564 = vmatpush2.bf16.msra.mxu0 %v3437
    %3565 = vmatprep.mubr.bf16.mxu0 %v3126
    %3566 = vmatmul.mubr.bf16.gmra.mxu0 %v3124
    %v3567 = vpop.f32.mrf.mxu0
    %v3568 = vadd.f32 %v3196, %v3567
    %v3569 = vpop.f32.mrf.mxu0
    %v3570 = vadd.f32 %v3200, %v3569
    %v3571 = vpop.f32.mrf.mxu0
    %v3572 = vpop.f32.mrf.mxu0
    %3573 = vdwg.mxu0
    %3574 = vmatprep.subr.bf16.mxu0 %v3436
    %3575 = vmatpush1.bf16.msra.mxu0 %v3435
    %3576 = vmatprep.subr.bf16.mxu0 %v3432
    %3577 = vmatpush1.bf16.msra.mxu0 %v3431
    %3578 = vmatprep.subr.bf16.mxu0 %v3428
    %3579 = vmatpush1.bf16.msra.mxu0 %v3427
    %3580 = vmatprep.subr.bf16.mxu0 %v3424
    %3581 = vmatpush1.bf16.msra.mxu0 %v3423
    %3582 = vmatprep.subr.bf16.mxu0 %v3420
    %3583 = vmatpush1.bf16.msra.mxu0 %v3419
    %3584 = vmatprep.subr.bf16.mxu0 %v3416
    %3585 = vmatpush1.bf16.msra.mxu0 %v3415
    %3586 = vmatprep.subr.bf16.mxu0 %v3412
    %3587 = vmatpush1.bf16.msra.mxu0 %v3411
    %3588 = vmatprep.subr.bf16.mxu0 %v3408
    %3589 = vmatpush1.bf16.msra.mxu0 %v3407
    %3590 = vmatprep.subr.bf16.mxu0 %v3468
    %3591 = vmatpush2.bf16.msra.mxu0 %v3467
    %3592 = vmatprep.subr.bf16.mxu0 %v3464
    %3593 = vmatpush2.bf16.msra.mxu0 %v3463
    %3594 = vmatprep.subr.bf16.mxu0 %v3460
    %3595 = vmatpush2.bf16.msra.mxu0 %v3459
    %3596 = vmatprep.subr.bf16.mxu0 %v3456
    %3597 = vmatpush2.bf16.msra.mxu0 %v3455
    %3598 = vmatprep.subr.bf16.mxu0 %v3452
    %3599 = vmatpush2.bf16.msra.mxu0 %v3451
    %3600 = vmatprep.subr.bf16.mxu0 %v3448
    %3601 = vmatpush2.bf16.msra.mxu0 %v3447
    %3602 = vmatprep.subr.bf16.mxu0 %v3444
    %3603 = vmatpush2.bf16.msra.mxu0 %v3443
    %3604 = vmatprep.subr.bf16.mxu0 %v3440
    %3605 = vmatpush2.bf16.msra.mxu0 %v3439
    %3606 = vmatprep.mubr.bf16.mxu0 %v3126
    %3607 = vmatmul.mubr.bf16.gmra.mxu0 %v3124
    %v3608 = vpop.f32.mrf.mxu0
    %v3609 = vadd.f32 %v3204, %v3608
    %v3610 = vpop.f32.mrf.mxu0
    %v3611 = vadd.f32 %v3208, %v3610
    %v3612 = vpop.f32.mrf.mxu0
    %v3613 = vpop.f32.mrf.mxu0
    %3614 = vdwg.mxu0
    %v3615 = vxor.u32 %v3568, 2147483648
    %v3616 = vmul.f32 %v3615, 1.442695
    %v3617 = vpow.pop %v3616
    %v3618 = vadd.f32 %v3617, 1.0
    %v3619 = vrcp.pop %v3618
    %v3620 = vmul.f32 1.0, %v3619
    %v3621 = vxor.u32 %v3570, 2147483648
    %v3622 = vmul.f32 %v3621, 1.442695
    %v3623 = vpow.pop %v3622
    %v3624 = vadd.f32 %v3623, 1.0
    %v3625 = vrcp.pop %v3624
    %v3626 = vmul.f32 1.0, %v3625
    %v3627 = vmul.f32 %v3620, %v3611
    %v3628 = vadd.f32 %v3609, %v3627
    %v3629 = vtanh.pop %v3628
    %v3630 = vsub.f32 1.0, %v3626
    %v3631 = vmul.f32 %v3630, %v3629
    %v3632 = vmul.f32 %v3626, %v3121
    %v3633 = vadd.f32 %v3631, %v3632
    %s3634 = scalar_lea.vmem [#allocation8], 24
    %3635 = vst [vmem:[%s3634] sm:$0xf] %v3633
    %v3636 = vpack.c.bf16 %v3633, %v3633
    %s3637 = scalar_lea.vmem [#allocation2], 14
    %v3638 = vld [vmem:[%s3637] sm:$0x3]
    %v3639 = vld [vmem:[#allocation5] sm:$0xff]
    %v3640 = vld [vmem:[#allocation5 + $0x8] sm:$0xff]
    %v3641 = vld [vmem:[#allocation5 + $0x10] sm:$0xff]
    %v3642 = vld [vmem:[#allocation5 + $0x18] sm:$0xff]
    %v3643 = vld [vmem:[#allocation5 + $0x20] sm:$0xff]
    %v3644 = vld [vmem:[#allocation5 + $0x28] sm:$0xff]
    %v3645 = vld [vmem:[#allocation5 + $0x30] sm:$0xff]
    %v3646 = vld [vmem:[#allocation5 + $0x38] sm:$0xff]
    %v3647 = vld [vmem:[#allocation5 + $0x40] sm:$0xff]
    %v3648 = vld [vmem:[#allocation5 + $0x48] sm:$0xff]
    %v3649 = vld [vmem:[#allocation5 + $0x50] sm:$0xff]
    %v3650 = vld [vmem:[#allocation5 + $0x58] sm:$0xff]
    %v3651 = vld [vmem:[#allocation5 + $0x60] sm:$0xff]
    %v3652 = vld [vmem:[#allocation5 + $0x68] sm:$0xff]
    %v3653 = vld [vmem:[#allocation5 + $0x70] sm:$0xff]
    %v3654 = vld [vmem:[#allocation5 + $0x78] sm:$0xff]
    %v3655 = vld [vmem:[#allocation5 + $0x80] sm:$0xff]
    %v3656 = vld [vmem:[#allocation5 + $0x88] sm:$0xff]
    %v3657 = vld [vmem:[#allocation5 + $0x90] sm:$0xff]
    %v3658 = vld [vmem:[#allocation5 + $0x98] sm:$0xff]
    %v3659 = vld [vmem:[#allocation5 + $0xa0] sm:$0xff]
    %v3660 = vld [vmem:[#allocation5 + $0xa8] sm:$0xff]
    %v3661 = vld [vmem:[#allocation5 + $0xb0] sm:$0xff]
    %v3662 = vld [vmem:[#allocation5 + $0xb8] sm:$0xff]
    %v3663 = vld [vmem:[#allocation5 + $0xc0] sm:$0xff]
    %v3664 = vld [vmem:[#allocation5 + $0xc8] sm:$0xff]
    %v3665 = vld [vmem:[#allocation5 + $0xd0] sm:$0xff]
    %v3666 = vld [vmem:[#allocation5 + $0xd8] sm:$0xff]
    %v3667 = vld [vmem:[#allocation5 + $0xe0] sm:$0xff]
    %v3668 = vld [vmem:[#allocation5 + $0xe8] sm:$0xff]
    %v3669 = vld [vmem:[#allocation5 + $0xf0] sm:$0xff]
    %v3670 = vld [vmem:[#allocation5 + $0xf8] sm:$0xff]
    %v3671 = vld [vmem:[#allocation5 + $0x100] sm:$0xff]
    %v3672 = vld [vmem:[#allocation5 + $0x108] sm:$0xff]
    %v3673 = vld [vmem:[#allocation5 + $0x110] sm:$0xff]
    %v3674 = vld [vmem:[#allocation5 + $0x118] sm:$0xff]
    %v3675 = vld [vmem:[#allocation5 + $0x120] sm:$0xff]
    %v3676 = vld [vmem:[#allocation5 + $0x128] sm:$0xff]
    %v3677 = vld [vmem:[#allocation5 + $0x130] sm:$0xff]
    %v3678 = vld [vmem:[#allocation5 + $0x138] sm:$0xff]
    %v3679 = vld [vmem:[#allocation5 + $0x140] sm:$0xff]
    %v3680 = vld [vmem:[#allocation5 + $0x148] sm:$0xff]
    %v3681 = vld [vmem:[#allocation5 + $0x150] sm:$0xff]
    %v3682 = vld [vmem:[#allocation5 + $0x158] sm:$0xff]
    %v3683 = vld [vmem:[#allocation5 + $0x160] sm:$0xff]
    %v3684 = vld [vmem:[#allocation5 + $0x168] sm:$0xff]
    %v3685 = vld [vmem:[#allocation5 + $0x170] sm:$0xff]
    %v3686 = vld [vmem:[#allocation5 + $0x178] sm:$0xff]
    %v3687 = vld [vmem:[#allocation5 + $0x180] sm:$0xff]
    %v3688 = vld [vmem:[#allocation5 + $0x188] sm:$0xff]
    %v3689 = vld [vmem:[#allocation5 + $0x190] sm:$0xff]
    %v3690 = vld [vmem:[#allocation5 + $0x198] sm:$0xff]
    %v3691 = vld [vmem:[#allocation5 + $0x1a0] sm:$0xff]
    %v3692 = vld [vmem:[#allocation5 + $0x1a8] sm:$0xff]
    %v3693 = vld [vmem:[#allocation5 + $0x1b0] sm:$0xff]
    %v3694 = vld [vmem:[#allocation5 + $0x1b8] sm:$0xff]
    %v3695 = vld [vmem:[#allocation5 + $0x1c0] sm:$0xff]
    %v3696 = vld [vmem:[#allocation5 + $0x1c8] sm:$0xff]
    %v3697 = vld [vmem:[#allocation5 + $0x1d0] sm:$0xff]
    %v3698 = vld [vmem:[#allocation5 + $0x1d8] sm:$0xff]
    %v3699 = vld [vmem:[#allocation5 + $0x1e0] sm:$0xff]
    %v3700 = vld [vmem:[#allocation5 + $0x1e8] sm:$0xff]
    %v3701 = vld [vmem:[#allocation5 + $0x1f0] sm:$0xff]
    %v3702 = vld [vmem:[#allocation5 + $0x1f8] sm:$0xff]
    %v3703 = vld [vmem:[#allocation7] sm:$0xf]
    %v3705 = vlaneseq
    %v3706 = vshrl.u32 %v3705, 7
    %v3707 = vsub.s32 0, %v3706
    %v3708 = vrot.slane %v3703, %v3707
    %v3709 = vlaneseq
    %v3710 = vshrl.u32 %v3709, 7
    %v3711 = vsub.s32 1, %v3710
    %v3712 = vrot.slane %v3703, %v3711
    %v3713 = vlaneseq
    %v3714 = vshrl.u32 %v3713, 7
    %v3715 = vsub.s32 2, %v3714
    %v3716 = vrot.slane %v3703, %v3715
    %v3717 = vlaneseq
    %v3718 = vshrl.u32 %v3717, 7
    %v3719 = vsub.s32 3, %v3718
    %v3720 = vrot.slane %v3703, %v3719
    %v3789 = vunpack.c.l.b16 %v3639
    %v3790 = vunpack.c.h.b16 %v3639
    %v3791 = vunpack.c.l.b16 %v3640
    %v3792 = vunpack.c.h.b16 %v3640
    %v3793 = vunpack.c.l.b16 %v3641
    %v3794 = vunpack.c.h.b16 %v3641
    %v3795 = vunpack.c.l.b16 %v3642
    %v3796 = vunpack.c.h.b16 %v3642
    %v3797 = vunpack.c.l.b16 %v3643
    %v3798 = vunpack.c.h.b16 %v3643
    %v3799 = vunpack.c.l.b16 %v3644
    %v3800 = vunpack.c.h.b16 %v3644
    %v3801 = vunpack.c.l.b16 %v3645
    %v3802 = vunpack.c.h.b16 %v3645
    %v3803 = vunpack.c.l.b16 %v3646
    %v3804 = vunpack.c.h.b16 %v3646
    %v3805 = vunpack.c.l.b16 %v3647
    %v3806 = vunpack.c.h.b16 %v3647
    %v3807 = vunpack.c.l.b16 %v3648
    %v3808 = vunpack.c.h.b16 %v3648
    %v3809 = vunpack.c.l.b16 %v3649
    %v3810 = vunpack.c.h.b16 %v3649
    %v3811 = vunpack.c.l.b16 %v3650
    %v3812 = vunpack.c.h.b16 %v3650
    %v3813 = vunpack.c.l.b16 %v3651
    %v3814 = vunpack.c.h.b16 %v3651
    %v3815 = vunpack.c.l.b16 %v3652
    %v3816 = vunpack.c.h.b16 %v3652
    %v3817 = vunpack.c.l.b16 %v3653
    %v3818 = vunpack.c.h.b16 %v3653
    %v3819 = vunpack.c.l.b16 %v3654
    %v3820 = vunpack.c.h.b16 %v3654
    %v3821 = vunpack.c.l.b16 %v3655
    %v3822 = vunpack.c.h.b16 %v3655
    %v3823 = vunpack.c.l.b16 %v3656
    %v3824 = vunpack.c.h.b16 %v3656
    %v3825 = vunpack.c.l.b16 %v3657
    %v3826 = vunpack.c.h.b16 %v3657
    %v3827 = vunpack.c.l.b16 %v3658
    %v3828 = vunpack.c.h.b16 %v3658
    %v3829 = vunpack.c.l.b16 %v3659
    %v3830 = vunpack.c.h.b16 %v3659
    %v3831 = vunpack.c.l.b16 %v3660
    %v3832 = vunpack.c.h.b16 %v3660
    %v3833 = vunpack.c.l.b16 %v3661
    %v3834 = vunpack.c.h.b16 %v3661
    %v3835 = vunpack.c.l.b16 %v3662
    %v3836 = vunpack.c.h.b16 %v3662
    %v3837 = vunpack.c.l.b16 %v3663
    %v3838 = vunpack.c.h.b16 %v3663
    %v3839 = vunpack.c.l.b16 %v3664
    %v3840 = vunpack.c.h.b16 %v3664
    %v3841 = vunpack.c.l.b16 %v3665
    %v3842 = vunpack.c.h.b16 %v3665
    %v3843 = vunpack.c.l.b16 %v3666
    %v3844 = vunpack.c.h.b16 %v3666
    %v3845 = vunpack.c.l.b16 %v3667
    %v3846 = vunpack.c.h.b16 %v3667
    %v3847 = vunpack.c.l.b16 %v3668
    %v3848 = vunpack.c.h.b16 %v3668
    %v3849 = vunpack.c.l.b16 %v3669
    %v3850 = vunpack.c.h.b16 %v3669
    %v3851 = vunpack.c.l.b16 %v3670
    %v3852 = vunpack.c.h.b16 %v3670
    %v3853 = vunpack.c.l.b16 %v3671
    %v3854 = vunpack.c.h.b16 %v3671
    %v3855 = vunpack.c.l.b16 %v3672
    %v3856 = vunpack.c.h.b16 %v3672
    %v3857 = vunpack.c.l.b16 %v3673
    %v3858 = vunpack.c.h.b16 %v3673
    %v3859 = vunpack.c.l.b16 %v3674
    %v3860 = vunpack.c.h.b16 %v3674
    %v3861 = vunpack.c.l.b16 %v3675
    %v3862 = vunpack.c.h.b16 %v3675
    %v3863 = vunpack.c.l.b16 %v3676
    %v3864 = vunpack.c.h.b16 %v3676
    %v3865 = vunpack.c.l.b16 %v3677
    %v3866 = vunpack.c.h.b16 %v3677
    %v3867 = vunpack.c.l.b16 %v3678
    %v3868 = vunpack.c.h.b16 %v3678
    %v3869 = vunpack.c.l.b16 %v3679
    %v3870 = vunpack.c.h.b16 %v3679
    %v3871 = vunpack.c.l.b16 %v3680
    %v3872 = vunpack.c.h.b16 %v3680
    %v3873 = vunpack.c.l.b16 %v3681
    %v3874 = vunpack.c.h.b16 %v3681
    %v3875 = vunpack.c.l.b16 %v3682
    %v3876 = vunpack.c.h.b16 %v3682
    %v3877 = vunpack.c.l.b16 %v3683
    %v3878 = vunpack.c.h.b16 %v3683
    %v3879 = vunpack.c.l.b16 %v3684
    %v3880 = vunpack.c.h.b16 %v3684
    %v3881 = vunpack.c.l.b16 %v3685
    %v3882 = vunpack.c.h.b16 %v3685
    %v3883 = vunpack.c.l.b16 %v3686
    %v3884 = vunpack.c.h.b16 %v3686
    %v3885 = vunpack.c.l.b16 %v3687
    %v3886 = vunpack.c.h.b16 %v3687
    %v3887 = vunpack.c.l.b16 %v3688
    %v3888 = vunpack.c.h.b16 %v3688
    %v3889 = vunpack.c.l.b16 %v3689
    %v3890 = vunpack.c.h.b16 %v3689
    %v3891 = vunpack.c.l.b16 %v3690
    %v3892 = vunpack.c.h.b16 %v3690
    %v3893 = vunpack.c.l.b16 %v3691
    %v3894 = vunpack.c.h.b16 %v3691
    %v3895 = vunpack.c.l.b16 %v3692
    %v3896 = vunpack.c.h.b16 %v3692
    %v3897 = vunpack.c.l.b16 %v3693
    %v3898 = vunpack.c.h.b16 %v3693
    %v3899 = vunpack.c.l.b16 %v3694
    %v3900 = vunpack.c.h.b16 %v3694
    %v3901 = vunpack.c.l.b16 %v3695
    %v3902 = vunpack.c.h.b16 %v3695
    %v3903 = vunpack.c.l.b16 %v3696
    %v3904 = vunpack.c.h.b16 %v3696
    %v3905 = vunpack.c.l.b16 %v3697
    %v3906 = vunpack.c.h.b16 %v3697
    %v3907 = vunpack.c.l.b16 %v3698
    %v3908 = vunpack.c.h.b16 %v3698
    %v3909 = vunpack.c.l.b16 %v3699
    %v3910 = vunpack.c.h.b16 %v3699
    %v3911 = vunpack.c.l.b16 %v3700
    %v3912 = vunpack.c.h.b16 %v3700
    %v3913 = vunpack.c.l.b16 %v3701
    %v3914 = vunpack.c.h.b16 %v3701
    %v3915 = vunpack.c.l.b16 %v3702
    %v3916 = vunpack.c.h.b16 %v3702
    %v3917 = vpack.c.b16 %v3793, %v3789
    %v3918 = vpack.c.b16 %v3794, %v3790
    %v3919 = vpack.c.b16 %v3795, %v3791
    %v3920 = vpack.c.b16 %v3796, %v3792
    %v3921 = vpack.c.b16 %v3801, %v3797
    %v3922 = vpack.c.b16 %v3802, %v3798
    %v3923 = vpack.c.b16 %v3803, %v3799
    %v3924 = vpack.c.b16 %v3804, %v3800
    %v3925 = vpack.c.b16 %v3809, %v3805
    %v3926 = vpack.c.b16 %v3810, %v3806
    %v3927 = vpack.c.b16 %v3811, %v3807
    %v3928 = vpack.c.b16 %v3812, %v3808
    %v3929 = vpack.c.b16 %v3817, %v3813
    %v3930 = vpack.c.b16 %v3818, %v3814
    %v3931 = vpack.c.b16 %v3819, %v3815
    %v3932 = vpack.c.b16 %v3820, %v3816
    %v3933 = vpack.c.b16 %v3825, %v3821
    %v3934 = vpack.c.b16 %v3826, %v3822
    %v3935 = vpack.c.b16 %v3827, %v3823
    %v3936 = vpack.c.b16 %v3828, %v3824
    %v3937 = vpack.c.b16 %v3833, %v3829
    %v3938 = vpack.c.b16 %v3834, %v3830
    %v3939 = vpack.c.b16 %v3835, %v3831
    %v3940 = vpack.c.b16 %v3836, %v3832
    %v3941 = vpack.c.b16 %v3841, %v3837
    %v3942 = vpack.c.b16 %v3842, %v3838
    %v3943 = vpack.c.b16 %v3843, %v3839
    %v3944 = vpack.c.b16 %v3844, %v3840
    %v3945 = vpack.c.b16 %v3849, %v3845
    %v3946 = vpack.c.b16 %v3850, %v3846
    %v3947 = vpack.c.b16 %v3851, %v3847
    %v3948 = vpack.c.b16 %v3852, %v3848
    %v3949 = vpack.c.b16 %v3857, %v3853
    %v3950 = vpack.c.b16 %v3858, %v3854
    %v3951 = vpack.c.b16 %v3859, %v3855
    %v3952 = vpack.c.b16 %v3860, %v3856
    %v3953 = vpack.c.b16 %v3865, %v3861
    %v3954 = vpack.c.b16 %v3866, %v3862
    %v3955 = vpack.c.b16 %v3867, %v3863
    %v3956 = vpack.c.b16 %v3868, %v3864
    %v3957 = vpack.c.b16 %v3873, %v3869
    %v3958 = vpack.c.b16 %v3874, %v3870
    %v3959 = vpack.c.b16 %v3875, %v3871
    %v3960 = vpack.c.b16 %v3876, %v3872
    %v3961 = vpack.c.b16 %v3881, %v3877
    %v3962 = vpack.c.b16 %v3882, %v3878
    %v3963 = vpack.c.b16 %v3883, %v3879
    %v3964 = vpack.c.b16 %v3884, %v3880
    %v3965 = vpack.c.b16 %v3889, %v3885
    %v3966 = vpack.c.b16 %v3890, %v3886
    %v3967 = vpack.c.b16 %v3891, %v3887
    %v3968 = vpack.c.b16 %v3892, %v3888
    %v3969 = vpack.c.b16 %v3897, %v3893
    %v3970 = vpack.c.b16 %v3898, %v3894
    %v3971 = vpack.c.b16 %v3899, %v3895
    %v3972 = vpack.c.b16 %v3900, %v3896
    %v3973 = vpack.c.b16 %v3905, %v3901
    %v3974 = vpack.c.b16 %v3906, %v3902
    %v3975 = vpack.c.b16 %v3907, %v3903
    %v3976 = vpack.c.b16 %v3908, %v3904
    %v3977 = vpack.c.b16 %v3913, %v3909
    %v3978 = vpack.c.b16 %v3914, %v3910
    %v3979 = vpack.c.b16 %v3915, %v3911
    %v3980 = vpack.c.b16 %v3916, %v3912
    %4045 = vmatprep.subr.bf16.mxu0 %v3946
    %4046 = vmatpush1.bf16.msra.mxu0 %v3945
    %4047 = vmatprep.subr.bf16.mxu0 %v3942
    %4048 = vmatpush1.bf16.msra.mxu0 %v3941
    %4049 = vmatprep.subr.bf16.mxu0 %v3938
    %4050 = vmatpush1.bf16.msra.mxu0 %v3937
    %4051 = vmatprep.subr.bf16.mxu0 %v3934
    %4052 = vmatpush1.bf16.msra.mxu0 %v3933
    %4053 = vmatprep.subr.bf16.mxu0 %v3930
    %4054 = vmatpush1.bf16.msra.mxu0 %v3929
    %4055 = vmatprep.subr.bf16.mxu0 %v3926
    %4056 = vmatpush1.bf16.msra.mxu0 %v3925
    %4057 = vmatprep.subr.bf16.mxu0 %v3922
    %4058 = vmatpush1.bf16.msra.mxu0 %v3921
    %4059 = vmatprep.subr.bf16.mxu0 %v3918
    %4060 = vmatpush1.bf16.msra.mxu0 %v3917
    %4061 = vmatprep.subr.bf16.mxu0 %v3978
    %4062 = vmatpush2.bf16.msra.mxu0 %v3977
    %4063 = vmatprep.subr.bf16.mxu0 %v3974
    %4064 = vmatpush2.bf16.msra.mxu0 %v3973
    %4065 = vmatprep.subr.bf16.mxu0 %v3970
    %4066 = vmatpush2.bf16.msra.mxu0 %v3969
    %4067 = vmatprep.subr.bf16.mxu0 %v3966
    %4068 = vmatpush2.bf16.msra.mxu0 %v3965
    %4069 = vmatprep.subr.bf16.mxu0 %v3962
    %4070 = vmatpush2.bf16.msra.mxu0 %v3961
    %4071 = vmatprep.subr.bf16.mxu0 %v3958
    %4072 = vmatpush2.bf16.msra.mxu0 %v3957
    %4073 = vmatprep.subr.bf16.mxu0 %v3954
    %4074 = vmatpush2.bf16.msra.mxu0 %v3953
    %4075 = vmatprep.subr.bf16.mxu0 %v3950
    %4076 = vmatpush2.bf16.msra.mxu0 %v3949
    %4077 = vmatprep.mubr.bf16.mxu0 %v3638
    %4078 = vmatmul.mubr.bf16.gmra.mxu0 %v3636
    %v4079 = vpop.f32.mrf.mxu0
    %v4080 = vadd.f32 %v3708, %v4079
    %v4081 = vpop.f32.mrf.mxu0
    %v4082 = vadd.f32 %v3712, %v4081
    %v4083 = vpop.f32.mrf.mxu0
    %v4084 = vpop.f32.mrf.mxu0
    %4085 = vdwg.mxu0
    %4086 = vmatprep.subr.bf16.mxu0 %v3948
    %4087 = vmatpush1.bf16.msra.mxu0 %v3947
    %4088 = vmatprep.subr.bf16.mxu0 %v3944
    %4089 = vmatpush1.bf16.msra.mxu0 %v3943
    %4090 = vmatprep.subr.bf16.mxu0 %v3940
    %4091 = vmatpush1.bf16.msra.mxu0 %v3939
    %4092 = vmatprep.subr.bf16.mxu0 %v3936
    %4093 = vmatpush1.bf16.msra.mxu0 %v3935
    %4094 = vmatprep.subr.bf16.mxu0 %v3932
    %4095 = vmatpush1.bf16.msra.mxu0 %v3931
    %4096 = vmatprep.subr.bf16.mxu0 %v3928
    %4097 = vmatpush1.bf16.msra.mxu0 %v3927
    %4098 = vmatprep.subr.bf16.mxu0 %v3924
    %4099 = vmatpush1.bf16.msra.mxu0 %v3923
    %4100 = vmatprep.subr.bf16.mxu0 %v3920
    %4101 = vmatpush1.bf16.msra.mxu0 %v3919
    %4102 = vmatprep.subr.bf16.mxu0 %v3980
    %4103 = vmatpush2.bf16.msra.mxu0 %v3979
    %4104 = vmatprep.subr.bf16.mxu0 %v3976
    %4105 = vmatpush2.bf16.msra.mxu0 %v3975
    %4106 = vmatprep.subr.bf16.mxu0 %v3972
    %4107 = vmatpush2.bf16.msra.mxu0 %v3971
    %4108 = vmatprep.subr.bf16.mxu0 %v3968
    %4109 = vmatpush2.bf16.msra.mxu0 %v3967
    %4110 = vmatprep.subr.bf16.mxu0 %v3964
    %4111 = vmatpush2.bf16.msra.mxu0 %v3963
    %4112 = vmatprep.subr.bf16.mxu0 %v3960
    %4113 = vmatpush2.bf16.msra.mxu0 %v3959
    %4114 = vmatprep.subr.bf16.mxu0 %v3956
    %4115 = vmatpush2.bf16.msra.mxu0 %v3955
    %4116 = vmatprep.subr.bf16.mxu0 %v3952
    %4117 = vmatpush2.bf16.msra.mxu0 %v3951
    %4118 = vmatprep.mubr.bf16.mxu0 %v3638
    %4119 = vmatmul.mubr.bf16.gmra.mxu0 %v3636
    %v4120 = vpop.f32.mrf.mxu0
    %v4121 = vadd.f32 %v3716, %v4120
    %v4122 = vpop.f32.mrf.mxu0
    %v4123 = vadd.f32 %v3720, %v4122
    %v4124 = vpop.f32.mrf.mxu0
    %v4125 = vpop.f32.mrf.mxu0
    %4126 = vdwg.mxu0
    %v4127 = vxor.u32 %v4080, 2147483648
    %v4128 = vmul.f32 %v4127, 1.442695
    %v4129 = vpow.pop %v4128
    %v4130 = vadd.f32 %v4129, 1.0
    %v4131 = vrcp.pop %v4130
    %v4132 = vmul.f32 1.0, %v4131
    %v4133 = vxor.u32 %v4082, 2147483648
    %v4134 = vmul.f32 %v4133, 1.442695
    %v4135 = vpow.pop %v4134
    %v4136 = vadd.f32 %v4135, 1.0
    %v4137 = vrcp.pop %v4136
    %v4138 = vmul.f32 1.0, %v4137
    %v4139 = vmul.f32 %v4132, %v4123
    %v4140 = vadd.f32 %v4121, %v4139
    %v4141 = vtanh.pop %v4140
    %v4142 = vsub.f32 1.0, %v4138
    %v4143 = vmul.f32 %v4142, %v4141
    %v4144 = vmul.f32 %v4138, %v3633
    %v4145 = vadd.f32 %v4143, %v4144
    %s4146 = scalar_lea.vmem [#allocation8], 28
    %4147 = vst [vmem:[%s4146] sm:$0xf] %v4145
    %v4148 = vpack.c.bf16 %v4145, %v4145
    %s4149 = scalar_lea.vmem [#allocation2], 16
    %v4150 = vld [vmem:[%s4149] sm:$0x3]
    %v4151 = vld [vmem:[#allocation5] sm:$0xff]
    %v4152 = vld [vmem:[#allocation5 + $0x8] sm:$0xff]
    %v4153 = vld [vmem:[#allocation5 + $0x10] sm:$0xff]
    %v4154 = vld [vmem:[#allocation5 + $0x18] sm:$0xff]
    %v4155 = vld [vmem:[#allocation5 + $0x20] sm:$0xff]
    %v4156 = vld [vmem:[#allocation5 + $0x28] sm:$0xff]
    %v4157 = vld [vmem:[#allocation5 + $0x30] sm:$0xff]
    %v4158 = vld [vmem:[#allocation5 + $0x38] sm:$0xff]
    %v4159 = vld [vmem:[#allocation5 + $0x40] sm:$0xff]
    %v4160 = vld [vmem:[#allocation5 + $0x48] sm:$0xff]
    %v4161 = vld [vmem:[#allocation5 + $0x50] sm:$0xff]
    %v4162 = vld [vmem:[#allocation5 + $0x58] sm:$0xff]
    %v4163 = vld [vmem:[#allocation5 + $0x60] sm:$0xff]
    %v4164 = vld [vmem:[#allocation5 + $0x68] sm:$0xff]
    %v4165 = vld [vmem:[#allocation5 + $0x70] sm:$0xff]
    %v4166 = vld [vmem:[#allocation5 + $0x78] sm:$0xff]
    %v4167 = vld [vmem:[#allocation5 + $0x80] sm:$0xff]
    %v4168 = vld [vmem:[#allocation5 + $0x88] sm:$0xff]
    %v4169 = vld [vmem:[#allocation5 + $0x90] sm:$0xff]
    %v4170 = vld [vmem:[#allocation5 + $0x98] sm:$0xff]
    %v4171 = vld [vmem:[#allocation5 + $0xa0] sm:$0xff]
    %v4172 = vld [vmem:[#allocation5 + $0xa8] sm:$0xff]
    %v4173 = vld [vmem:[#allocation5 + $0xb0] sm:$0xff]
    %v4174 = vld [vmem:[#allocation5 + $0xb8] sm:$0xff]
    %v4175 = vld [vmem:[#allocation5 + $0xc0] sm:$0xff]
    %v4176 = vld [vmem:[#allocation5 + $0xc8] sm:$0xff]
    %v4177 = vld [vmem:[#allocation5 + $0xd0] sm:$0xff]
    %v4178 = vld [vmem:[#allocation5 + $0xd8] sm:$0xff]
    %v4179 = vld [vmem:[#allocation5 + $0xe0] sm:$0xff]
    %v4180 = vld [vmem:[#allocation5 + $0xe8] sm:$0xff]
    %v4181 = vld [vmem:[#allocation5 + $0xf0] sm:$0xff]
    %v4182 = vld [vmem:[#allocation5 + $0xf8] sm:$0xff]
    %v4183 = vld [vmem:[#allocation5 + $0x100] sm:$0xff]
    %v4184 = vld [vmem:[#allocation5 + $0x108] sm:$0xff]
    %v4185 = vld [vmem:[#allocation5 + $0x110] sm:$0xff]
    %v4186 = vld [vmem:[#allocation5 + $0x118] sm:$0xff]
    %v4187 = vld [vmem:[#allocation5 + $0x120] sm:$0xff]
    %v4188 = vld [vmem:[#allocation5 + $0x128] sm:$0xff]
    %v4189 = vld [vmem:[#allocation5 + $0x130] sm:$0xff]
    %v4190 = vld [vmem:[#allocation5 + $0x138] sm:$0xff]
    %v4191 = vld [vmem:[#allocation5 + $0x140] sm:$0xff]
    %v4192 = vld [vmem:[#allocation5 + $0x148] sm:$0xff]
    %v4193 = vld [vmem:[#allocation5 + $0x150] sm:$0xff]
    %v4194 = vld [vmem:[#allocation5 + $0x158] sm:$0xff]
    %v4195 = vld [vmem:[#allocation5 + $0x160] sm:$0xff]
    %v4196 = vld [vmem:[#allocation5 + $0x168] sm:$0xff]
    %v4197 = vld [vmem:[#allocation5 + $0x170] sm:$0xff]
    %v4198 = vld [vmem:[#allocation5 + $0x178] sm:$0xff]
    %v4199 = vld [vmem:[#allocation5 + $0x180] sm:$0xff]
    %v4200 = vld [vmem:[#allocation5 + $0x188] sm:$0xff]
    %v4201 = vld [vmem:[#allocation5 + $0x190] sm:$0xff]
    %v4202 = vld [vmem:[#allocation5 + $0x198] sm:$0xff]
    %v4203 = vld [vmem:[#allocation5 + $0x1a0] sm:$0xff]
    %v4204 = vld [vmem:[#allocation5 + $0x1a8] sm:$0xff]
    %v4205 = vld [vmem:[#allocation5 + $0x1b0] sm:$0xff]
    %v4206 = vld [vmem:[#allocation5 + $0x1b8] sm:$0xff]
    %v4207 = vld [vmem:[#allocation5 + $0x1c0] sm:$0xff]
    %v4208 = vld [vmem:[#allocation5 + $0x1c8] sm:$0xff]
    %v4209 = vld [vmem:[#allocation5 + $0x1d0] sm:$0xff]
    %v4210 = vld [vmem:[#allocation5 + $0x1d8] sm:$0xff]
    %v4211 = vld [vmem:[#allocation5 + $0x1e0] sm:$0xff]
    %v4212 = vld [vmem:[#allocation5 + $0x1e8] sm:$0xff]
    %v4213 = vld [vmem:[#allocation5 + $0x1f0] sm:$0xff]
    %v4214 = vld [vmem:[#allocation5 + $0x1f8] sm:$0xff]
    %v4215 = vld [vmem:[#allocation7] sm:$0xf]
    %v4217 = vlaneseq
    %v4218 = vshrl.u32 %v4217, 7
    %v4219 = vsub.s32 0, %v4218
    %v4220 = vrot.slane %v4215, %v4219
    %v4221 = vlaneseq
    %v4222 = vshrl.u32 %v4221, 7
    %v4223 = vsub.s32 1, %v4222
    %v4224 = vrot.slane %v4215, %v4223
    %v4225 = vlaneseq
    %v4226 = vshrl.u32 %v4225, 7
    %v4227 = vsub.s32 2, %v4226
    %v4228 = vrot.slane %v4215, %v4227
    %v4229 = vlaneseq
    %v4230 = vshrl.u32 %v4229, 7
    %v4231 = vsub.s32 3, %v4230
    %v4232 = vrot.slane %v4215, %v4231
    %v4301 = vunpack.c.l.b16 %v4151
    %v4302 = vunpack.c.h.b16 %v4151
    %v4303 = vunpack.c.l.b16 %v4152
    %v4304 = vunpack.c.h.b16 %v4152
    %v4305 = vunpack.c.l.b16 %v4153
    %v4306 = vunpack.c.h.b16 %v4153
    %v4307 = vunpack.c.l.b16 %v4154
    %v4308 = vunpack.c.h.b16 %v4154
    %v4309 = vunpack.c.l.b16 %v4155
    %v4310 = vunpack.c.h.b16 %v4155
    %v4311 = vunpack.c.l.b16 %v4156
    %v4312 = vunpack.c.h.b16 %v4156
    %v4313 = vunpack.c.l.b16 %v4157
    %v4314 = vunpack.c.h.b16 %v4157
    %v4315 = vunpack.c.l.b16 %v4158
    %v4316 = vunpack.c.h.b16 %v4158
    %v4317 = vunpack.c.l.b16 %v4159
    %v4318 = vunpack.c.h.b16 %v4159
    %v4319 = vunpack.c.l.b16 %v4160
    %v4320 = vunpack.c.h.b16 %v4160
    %v4321 = vunpack.c.l.b16 %v4161
    %v4322 = vunpack.c.h.b16 %v4161
    %v4323 = vunpack.c.l.b16 %v4162
    %v4324 = vunpack.c.h.b16 %v4162
    %v4325 = vunpack.c.l.b16 %v4163
    %v4326 = vunpack.c.h.b16 %v4163
    %v4327 = vunpack.c.l.b16 %v4164
    %v4328 = vunpack.c.h.b16 %v4164
    %v4329 = vunpack.c.l.b16 %v4165
    %v4330 = vunpack.c.h.b16 %v4165
    %v4331 = vunpack.c.l.b16 %v4166
    %v4332 = vunpack.c.h.b16 %v4166
    %v4333 = vunpack.c.l.b16 %v4167
    %v4334 = vunpack.c.h.b16 %v4167
    %v4335 = vunpack.c.l.b16 %v4168
    %v4336 = vunpack.c.h.b16 %v4168
    %v4337 = vunpack.c.l.b16 %v4169
    %v4338 = vunpack.c.h.b16 %v4169
    %v4339 = vunpack.c.l.b16 %v4170
    %v4340 = vunpack.c.h.b16 %v4170
    %v4341 = vunpack.c.l.b16 %v4171
    %v4342 = vunpack.c.h.b16 %v4171
    %v4343 = vunpack.c.l.b16 %v4172
    %v4344 = vunpack.c.h.b16 %v4172
    %v4345 = vunpack.c.l.b16 %v4173
    %v4346 = vunpack.c.h.b16 %v4173
    %v4347 = vunpack.c.l.b16 %v4174
    %v4348 = vunpack.c.h.b16 %v4174
    %v4349 = vunpack.c.l.b16 %v4175
    %v4350 = vunpack.c.h.b16 %v4175
    %v4351 = vunpack.c.l.b16 %v4176
    %v4352 = vunpack.c.h.b16 %v4176
    %v4353 = vunpack.c.l.b16 %v4177
    %v4354 = vunpack.c.h.b16 %v4177
    %v4355 = vunpack.c.l.b16 %v4178
    %v4356 = vunpack.c.h.b16 %v4178
    %v4357 = vunpack.c.l.b16 %v4179
    %v4358 = vunpack.c.h.b16 %v4179
    %v4359 = vunpack.c.l.b16 %v4180
    %v4360 = vunpack.c.h.b16 %v4180
    %v4361 = vunpack.c.l.b16 %v4181
    %v4362 = vunpack.c.h.b16 %v4181
    %v4363 = vunpack.c.l.b16 %v4182
    %v4364 = vunpack.c.h.b16 %v4182
    %v4365 = vunpack.c.l.b16 %v4183
    %v4366 = vunpack.c.h.b16 %v4183
    %v4367 = vunpack.c.l.b16 %v4184
    %v4368 = vunpack.c.h.b16 %v4184
    %v4369 = vunpack.c.l.b16 %v4185
    %v4370 = vunpack.c.h.b16 %v4185
    %v4371 = vunpack.c.l.b16 %v4186
    %v4372 = vunpack.c.h.b16 %v4186
    %v4373 = vunpack.c.l.b16 %v4187
    %v4374 = vunpack.c.h.b16 %v4187
    %v4375 = vunpack.c.l.b16 %v4188
    %v4376 = vunpack.c.h.b16 %v4188
    %v4377 = vunpack.c.l.b16 %v4189
    %v4378 = vunpack.c.h.b16 %v4189
    %v4379 = vunpack.c.l.b16 %v4190
    %v4380 = vunpack.c.h.b16 %v4190
    %v4381 = vunpack.c.l.b16 %v4191
    %v4382 = vunpack.c.h.b16 %v4191
    %v4383 = vunpack.c.l.b16 %v4192
    %v4384 = vunpack.c.h.b16 %v4192
    %v4385 = vunpack.c.l.b16 %v4193
    %v4386 = vunpack.c.h.b16 %v4193
    %v4387 = vunpack.c.l.b16 %v4194
    %v4388 = vunpack.c.h.b16 %v4194
    %v4389 = vunpack.c.l.b16 %v4195
    %v4390 = vunpack.c.h.b16 %v4195
    %v4391 = vunpack.c.l.b16 %v4196
    %v4392 = vunpack.c.h.b16 %v4196
    %v4393 = vunpack.c.l.b16 %v4197
    %v4394 = vunpack.c.h.b16 %v4197
    %v4395 = vunpack.c.l.b16 %v4198
    %v4396 = vunpack.c.h.b16 %v4198
    %v4397 = vunpack.c.l.b16 %v4199
    %v4398 = vunpack.c.h.b16 %v4199
    %v4399 = vunpack.c.l.b16 %v4200
    %v4400 = vunpack.c.h.b16 %v4200
    %v4401 = vunpack.c.l.b16 %v4201
    %v4402 = vunpack.c.h.b16 %v4201
    %v4403 = vunpack.c.l.b16 %v4202
    %v4404 = vunpack.c.h.b16 %v4202
    %v4405 = vunpack.c.l.b16 %v4203
    %v4406 = vunpack.c.h.b16 %v4203
    %v4407 = vunpack.c.l.b16 %v4204
    %v4408 = vunpack.c.h.b16 %v4204
    %v4409 = vunpack.c.l.b16 %v4205
    %v4410 = vunpack.c.h.b16 %v4205
    %v4411 = vunpack.c.l.b16 %v4206
    %v4412 = vunpack.c.h.b16 %v4206
    %v4413 = vunpack.c.l.b16 %v4207
    %v4414 = vunpack.c.h.b16 %v4207
    %v4415 = vunpack.c.l.b16 %v4208
    %v4416 = vunpack.c.h.b16 %v4208
    %v4417 = vunpack.c.l.b16 %v4209
    %v4418 = vunpack.c.h.b16 %v4209
    %v4419 = vunpack.c.l.b16 %v4210
    %v4420 = vunpack.c.h.b16 %v4210
    %v4421 = vunpack.c.l.b16 %v4211
    %v4422 = vunpack.c.h.b16 %v4211
    %v4423 = vunpack.c.l.b16 %v4212
    %v4424 = vunpack.c.h.b16 %v4212
    %v4425 = vunpack.c.l.b16 %v4213
    %v4426 = vunpack.c.h.b16 %v4213
    %v4427 = vunpack.c.l.b16 %v4214
    %v4428 = vunpack.c.h.b16 %v4214
    %v4429 = vpack.c.b16 %v4305, %v4301
    %v4430 = vpack.c.b16 %v4306, %v4302
    %v4431 = vpack.c.b16 %v4307, %v4303
    %v4432 = vpack.c.b16 %v4308, %v4304
    %v4433 = vpack.c.b16 %v4313, %v4309
    %v4434 = vpack.c.b16 %v4314, %v4310
    %v4435 = vpack.c.b16 %v4315, %v4311
    %v4436 = vpack.c.b16 %v4316, %v4312
    %v4437 = vpack.c.b16 %v4321, %v4317
    %v4438 = vpack.c.b16 %v4322, %v4318
    %v4439 = vpack.c.b16 %v4323, %v4319
    %v4440 = vpack.c.b16 %v4324, %v4320
    %v4441 = vpack.c.b16 %v4329, %v4325
    %v4442 = vpack.c.b16 %v4330, %v4326
    %v4443 = vpack.c.b16 %v4331, %v4327
    %v4444 = vpack.c.b16 %v4332, %v4328
    %v4445 = vpack.c.b16 %v4337, %v4333
    %v4446 = vpack.c.b16 %v4338, %v4334
    %v4447 = vpack.c.b16 %v4339, %v4335
    %v4448 = vpack.c.b16 %v4340, %v4336
    %v4449 = vpack.c.b16 %v4345, %v4341
    %v4450 = vpack.c.b16 %v4346, %v4342
    %v4451 = vpack.c.b16 %v4347, %v4343
    %v4452 = vpack.c.b16 %v4348, %v4344
    %v4453 = vpack.c.b16 %v4353, %v4349
    %v4454 = vpack.c.b16 %v4354, %v4350
    %v4455 = vpack.c.b16 %v4355, %v4351
    %v4456 = vpack.c.b16 %v4356, %v4352
    %v4457 = vpack.c.b16 %v4361, %v4357
    %v4458 = vpack.c.b16 %v4362, %v4358
    %v4459 = vpack.c.b16 %v4363, %v4359
    %v4460 = vpack.c.b16 %v4364, %v4360
    %v4461 = vpack.c.b16 %v4369, %v4365
    %v4462 = vpack.c.b16 %v4370, %v4366
    %v4463 = vpack.c.b16 %v4371, %v4367
    %v4464 = vpack.c.b16 %v4372, %v4368
    %v4465 = vpack.c.b16 %v4377, %v4373
    %v4466 = vpack.c.b16 %v4378, %v4374
    %v4467 = vpack.c.b16 %v4379, %v4375
    %v4468 = vpack.c.b16 %v4380, %v4376
    %v4469 = vpack.c.b16 %v4385, %v4381
    %v4470 = vpack.c.b16 %v4386, %v4382
    %v4471 = vpack.c.b16 %v4387, %v4383
    %v4472 = vpack.c.b16 %v4388, %v4384
    %v4473 = vpack.c.b16 %v4393, %v4389
    %v4474 = vpack.c.b16 %v4394, %v4390
    %v4475 = vpack.c.b16 %v4395, %v4391
    %v4476 = vpack.c.b16 %v4396, %v4392
    %v4477 = vpack.c.b16 %v4401, %v4397
    %v4478 = vpack.c.b16 %v4402, %v4398
    %v4479 = vpack.c.b16 %v4403, %v4399
    %v4480 = vpack.c.b16 %v4404, %v4400
    %v4481 = vpack.c.b16 %v4409, %v4405
    %v4482 = vpack.c.b16 %v4410, %v4406
    %v4483 = vpack.c.b16 %v4411, %v4407
    %v4484 = vpack.c.b16 %v4412, %v4408
    %v4485 = vpack.c.b16 %v4417, %v4413
    %v4486 = vpack.c.b16 %v4418, %v4414
    %v4487 = vpack.c.b16 %v4419, %v4415
    %v4488 = vpack.c.b16 %v4420, %v4416
    %v4489 = vpack.c.b16 %v4425, %v4421
    %v4490 = vpack.c.b16 %v4426, %v4422
    %v4491 = vpack.c.b16 %v4427, %v4423
    %v4492 = vpack.c.b16 %v4428, %v4424
    %4557 = vmatprep.subr.bf16.mxu0 %v4458
    %4558 = vmatpush1.bf16.msra.mxu0 %v4457
    %4559 = vmatprep.subr.bf16.mxu0 %v4454
    %4560 = vmatpush1.bf16.msra.mxu0 %v4453
    %4561 = vmatprep.subr.bf16.mxu0 %v4450
    %4562 = vmatpush1.bf16.msra.mxu0 %v4449
    %4563 = vmatprep.subr.bf16.mxu0 %v4446
    %4564 = vmatpush1.bf16.msra.mxu0 %v4445
    %4565 = vmatprep.subr.bf16.mxu0 %v4442
    %4566 = vmatpush1.bf16.msra.mxu0 %v4441
    %4567 = vmatprep.subr.bf16.mxu0 %v4438
    %4568 = vmatpush1.bf16.msra.mxu0 %v4437
    %4569 = vmatprep.subr.bf16.mxu0 %v4434
    %4570 = vmatpush1.bf16.msra.mxu0 %v4433
    %4571 = vmatprep.subr.bf16.mxu0 %v4430
    %4572 = vmatpush1.bf16.msra.mxu0 %v4429
    %4573 = vmatprep.subr.bf16.mxu0 %v4490
    %4574 = vmatpush2.bf16.msra.mxu0 %v4489
    %4575 = vmatprep.subr.bf16.mxu0 %v4486
    %4576 = vmatpush2.bf16.msra.mxu0 %v4485
    %4577 = vmatprep.subr.bf16.mxu0 %v4482
    %4578 = vmatpush2.bf16.msra.mxu0 %v4481
    %4579 = vmatprep.subr.bf16.mxu0 %v4478
    %4580 = vmatpush2.bf16.msra.mxu0 %v4477
    %4581 = vmatprep.subr.bf16.mxu0 %v4474
    %4582 = vmatpush2.bf16.msra.mxu0 %v4473
    %4583 = vmatprep.subr.bf16.mxu0 %v4470
    %4584 = vmatpush2.bf16.msra.mxu0 %v4469
    %4585 = vmatprep.subr.bf16.mxu0 %v4466
    %4586 = vmatpush2.bf16.msra.mxu0 %v4465
    %4587 = vmatprep.subr.bf16.mxu0 %v4462
    %4588 = vmatpush2.bf16.msra.mxu0 %v4461
    %4589 = vmatprep.mubr.bf16.mxu0 %v4150
    %4590 = vmatmul.mubr.bf16.gmra.mxu0 %v4148
    %v4591 = vpop.f32.mrf.mxu0
    %v4592 = vadd.f32 %v4220, %v4591
    %v4593 = vpop.f32.mrf.mxu0
    %v4594 = vadd.f32 %v4224, %v4593
    %v4595 = vpop.f32.mrf.mxu0
    %v4596 = vpop.f32.mrf.mxu0
    %4597 = vdwg.mxu0
    %4598 = vmatprep.subr.bf16.mxu0 %v4460
    %4599 = vmatpush1.bf16.msra.mxu0 %v4459
    %4600 = vmatprep.subr.bf16.mxu0 %v4456
    %4601 = vmatpush1.bf16.msra.mxu0 %v4455
    %4602 = vmatprep.subr.bf16.mxu0 %v4452
    %4603 = vmatpush1.bf16.msra.mxu0 %v4451
    %4604 = vmatprep.subr.bf16.mxu0 %v4448
    %4605 = vmatpush1.bf16.msra.mxu0 %v4447
    %4606 = vmatprep.subr.bf16.mxu0 %v4444
    %4607 = vmatpush1.bf16.msra.mxu0 %v4443
    %4608 = vmatprep.subr.bf16.mxu0 %v4440
    %4609 = vmatpush1.bf16.msra.mxu0 %v4439
    %4610 = vmatprep.subr.bf16.mxu0 %v4436
    %4611 = vmatpush1.bf16.msra.mxu0 %v4435
    %4612 = vmatprep.subr.bf16.mxu0 %v4432
    %4613 = vmatpush1.bf16.msra.mxu0 %v4431
    %4614 = vmatprep.subr.bf16.mxu0 %v4492
    %4615 = vmatpush2.bf16.msra.mxu0 %v4491
    %4616 = vmatprep.subr.bf16.mxu0 %v4488
    %4617 = vmatpush2.bf16.msra.mxu0 %v4487
    %4618 = vmatprep.subr.bf16.mxu0 %v4484
    %4619 = vmatpush2.bf16.msra.mxu0 %v4483
    %4620 = vmatprep.subr.bf16.mxu0 %v4480
    %4621 = vmatpush2.bf16.msra.mxu0 %v4479
    %4622 = vmatprep.subr.bf16.mxu0 %v4476
    %4623 = vmatpush2.bf16.msra.mxu0 %v4475
    %4624 = vmatprep.subr.bf16.mxu0 %v4472
    %4625 = vmatpush2.bf16.msra.mxu0 %v4471
    %4626 = vmatprep.subr.bf16.mxu0 %v4468
    %4627 = vmatpush2.bf16.msra.mxu0 %v4467
    %4628 = vmatprep.subr.bf16.mxu0 %v4464
    %4629 = vmatpush2.bf16.msra.mxu0 %v4463
    %4630 = vmatprep.mubr.bf16.mxu0 %v4150
    %4631 = vmatmul.mubr.bf16.gmra.mxu0 %v4148
    %v4632 = vpop.f32.mrf.mxu0
    %v4633 = vadd.f32 %v4228, %v4632
    %v4634 = vpop.f32.mrf.mxu0
    %v4635 = vadd.f32 %v4232, %v4634
    %v4636 = vpop.f32.mrf.mxu0
    %v4637 = vpop.f32.mrf.mxu0
    %4638 = vdwg.mxu0
    %v4639 = vxor.u32 %v4592, 2147483648
    %v4640 = vmul.f32 %v4639, 1.442695
    %v4641 = vpow.pop %v4640
    %v4642 = vadd.f32 %v4641, 1.0
    %v4643 = vrcp.pop %v4642
    %v4644 = vmul.f32 1.0, %v4643
    %v4645 = vxor.u32 %v4594, 2147483648
    %v4646 = vmul.f32 %v4645, 1.442695
    %v4647 = vpow.pop %v4646
    %v4648 = vadd.f32 %v4647, 1.0
    %v4649 = vrcp.pop %v4648
    %v4650 = vmul.f32 1.0, %v4649
    %v4651 = vmul.f32 %v4644, %v4635
    %v4652 = vadd.f32 %v4633, %v4651
    %v4653 = vtanh.pop %v4652
    %v4654 = vsub.f32 1.0, %v4650
    %v4655 = vmul.f32 %v4654, %v4653
    %v4656 = vmul.f32 %v4650, %v4145
    %v4657 = vadd.f32 %v4655, %v4656
    %s4658 = scalar_lea.vmem [#allocation8], 32
    %4659 = vst [vmem:[%s4658] sm:$0xf] %v4657
    %v4660 = vpack.c.bf16 %v4657, %v4657
    %s4661 = scalar_lea.vmem [#allocation2], 18
    %v4662 = vld [vmem:[%s4661] sm:$0x3]
    %v4663 = vld [vmem:[#allocation5] sm:$0xff]
    %v4664 = vld [vmem:[#allocation5 + $0x8] sm:$0xff]
    %v4665 = vld [vmem:[#allocation5 + $0x10] sm:$0xff]
    %v4666 = vld [vmem:[#allocation5 + $0x18] sm:$0xff]
    %v4667 = vld [vmem:[#allocation5 + $0x20] sm:$0xff]
    %v4668 = vld [vmem:[#allocation5 + $0x28] sm:$0xff]
    %v4669 = vld [vmem:[#allocation5 + $0x30] sm:$0xff]
    %v4670 = vld [vmem:[#allocation5 + $0x38] sm:$0xff]
    %v4671 = vld [vmem:[#allocation5 + $0x40] sm:$0xff]
    %v4672 = vld [vmem:[#allocation5 + $0x48] sm:$0xff]
    %v4673 = vld [vmem:[#allocation5 + $0x50] sm:$0xff]
    %v4674 = vld [vmem:[#allocation5 + $0x58] sm:$0xff]
    %v4675 = vld [vmem:[#allocation5 + $0x60] sm:$0xff]
    %v4676 = vld [vmem:[#allocation5 + $0x68] sm:$0xff]
    %v4677 = vld [vmem:[#allocation5 + $0x70] sm:$0xff]
    %v4678 = vld [vmem:[#allocation5 + $0x78] sm:$0xff]
    %v4679 = vld [vmem:[#allocation5 + $0x80] sm:$0xff]
    %v4680 = vld [vmem:[#allocation5 + $0x88] sm:$0xff]
    %v4681 = vld [vmem:[#allocation5 + $0x90] sm:$0xff]
    %v4682 = vld [vmem:[#allocation5 + $0x98] sm:$0xff]
    %v4683 = vld [vmem:[#allocation5 + $0xa0] sm:$0xff]
    %v4684 = vld [vmem:[#allocation5 + $0xa8] sm:$0xff]
    %v4685 = vld [vmem:[#allocation5 + $0xb0] sm:$0xff]
    %v4686 = vld [vmem:[#allocation5 + $0xb8] sm:$0xff]
    %v4687 = vld [vmem:[#allocation5 + $0xc0] sm:$0xff]
    %v4688 = vld [vmem:[#allocation5 + $0xc8] sm:$0xff]
    %v4689 = vld [vmem:[#allocation5 + $0xd0] sm:$0xff]
    %v4690 = vld [vmem:[#allocation5 + $0xd8] sm:$0xff]
    %v4691 = vld [vmem:[#allocation5 + $0xe0] sm:$0xff]
    %v4692 = vld [vmem:[#allocation5 + $0xe8] sm:$0xff]
    %v4693 = vld [vmem:[#allocation5 + $0xf0] sm:$0xff]
    %v4694 = vld [vmem:[#allocation5 + $0xf8] sm:$0xff]
    %v4695 = vld [vmem:[#allocation5 + $0x100] sm:$0xff]
    %v4696 = vld [vmem:[#allocation5 + $0x108] sm:$0xff]
    %v4697 = vld [vmem:[#allocation5 + $0x110] sm:$0xff]
    %v4698 = vld [vmem:[#allocation5 + $0x118] sm:$0xff]
    %v4699 = vld [vmem:[#allocation5 + $0x120] sm:$0xff]
    %v4700 = vld [vmem:[#allocation5 + $0x128] sm:$0xff]
    %v4701 = vld [vmem:[#allocation5 + $0x130] sm:$0xff]
    %v4702 = vld [vmem:[#allocation5 + $0x138] sm:$0xff]
    %v4703 = vld [vmem:[#allocation5 + $0x140] sm:$0xff]
    %v4704 = vld [vmem:[#allocation5 + $0x148] sm:$0xff]
    %v4705 = vld [vmem:[#allocation5 + $0x150] sm:$0xff]
    %v4706 = vld [vmem:[#allocation5 + $0x158] sm:$0xff]
    %v4707 = vld [vmem:[#allocation5 + $0x160] sm:$0xff]
    %v4708 = vld [vmem:[#allocation5 + $0x168] sm:$0xff]
    %v4709 = vld [vmem:[#allocation5 + $0x170] sm:$0xff]
    %v4710 = vld [vmem:[#allocation5 + $0x178] sm:$0xff]
    %v4711 = vld [vmem:[#allocation5 + $0x180] sm:$0xff]
    %v4712 = vld [vmem:[#allocation5 + $0x188] sm:$0xff]
    %v4713 = vld [vmem:[#allocation5 + $0x190] sm:$0xff]
    %v4714 = vld [vmem:[#allocation5 + $0x198] sm:$0xff]
    %v4715 = vld [vmem:[#allocation5 + $0x1a0] sm:$0xff]
    %v4716 = vld [vmem:[#allocation5 + $0x1a8] sm:$0xff]
    %v4717 = vld [vmem:[#allocation5 + $0x1b0] sm:$0xff]
    %v4718 = vld [vmem:[#allocation5 + $0x1b8] sm:$0xff]
    %v4719 = vld [vmem:[#allocation5 + $0x1c0] sm:$0xff]
    %v4720 = vld [vmem:[#allocation5 + $0x1c8] sm:$0xff]
    %v4721 = vld [vmem:[#allocation5 + $0x1d0] sm:$0xff]
    %v4722 = vld [vmem:[#allocation5 + $0x1d8] sm:$0xff]
    %v4723 = vld [vmem:[#allocation5 + $0x1e0] sm:$0xff]
    %v4724 = vld [vmem:[#allocation5 + $0x1e8] sm:$0xff]
    %v4725 = vld [vmem:[#allocation5 + $0x1f0] sm:$0xff]
    %v4726 = vld [vmem:[#allocation5 + $0x1f8] sm:$0xff]
    %v4727 = vld [vmem:[#allocation7] sm:$0xf]
    %v4729 = vlaneseq
    %v4730 = vshrl.u32 %v4729, 7
    %v4731 = vsub.s32 0, %v4730
    %v4732 = vrot.slane %v4727, %v4731
    %v4733 = vlaneseq
    %v4734 = vshrl.u32 %v4733, 7
    %v4735 = vsub.s32 1, %v4734
    %v4736 = vrot.slane %v4727, %v4735
    %v4737 = vlaneseq
    %v4738 = vshrl.u32 %v4737, 7
    %v4739 = vsub.s32 2, %v4738
    %v4740 = vrot.slane %v4727, %v4739
    %v4741 = vlaneseq
    %v4742 = vshrl.u32 %v4741, 7
    %v4743 = vsub.s32 3, %v4742
    %v4744 = vrot.slane %v4727, %v4743
    %v4813 = vunpack.c.l.b16 %v4663
    %v4814 = vunpack.c.h.b16 %v4663
    %v4815 = vunpack.c.l.b16 %v4664
    %v4816 = vunpack.c.h.b16 %v4664
    %v4817 = vunpack.c.l.b16 %v4665
    %v4818 = vunpack.c.h.b16 %v4665
    %v4819 = vunpack.c.l.b16 %v4666
    %v4820 = vunpack.c.h.b16 %v4666
    %v4821 = vunpack.c.l.b16 %v4667
    %v4822 = vunpack.c.h.b16 %v4667
    %v4823 = vunpack.c.l.b16 %v4668
    %v4824 = vunpack.c.h.b16 %v4668
    %v4825 = vunpack.c.l.b16 %v4669
    %v4826 = vunpack.c.h.b16 %v4669
    %v4827 = vunpack.c.l.b16 %v4670
    %v4828 = vunpack.c.h.b16 %v4670
    %v4829 = vunpack.c.l.b16 %v4671
    %v4830 = vunpack.c.h.b16 %v4671
    %v4831 = vunpack.c.l.b16 %v4672
    %v4832 = vunpack.c.h.b16 %v4672
    %v4833 = vunpack.c.l.b16 %v4673
    %v4834 = vunpack.c.h.b16 %v4673
    %v4835 = vunpack.c.l.b16 %v4674
    %v4836 = vunpack.c.h.b16 %v4674
    %v4837 = vunpack.c.l.b16 %v4675
    %v4838 = vunpack.c.h.b16 %v4675
    %v4839 = vunpack.c.l.b16 %v4676
    %v4840 = vunpack.c.h.b16 %v4676
    %v4841 = vunpack.c.l.b16 %v4677
    %v4842 = vunpack.c.h.b16 %v4677
    %v4843 = vunpack.c.l.b16 %v4678
    %v4844 = vunpack.c.h.b16 %v4678
    %v4845 = vunpack.c.l.b16 %v4679
    %v4846 = vunpack.c.h.b16 %v4679
    %v4847 = vunpack.c.l.b16 %v4680
    %v4848 = vunpack.c.h.b16 %v4680
    %v4849 = vunpack.c.l.b16 %v4681
    %v4850 = vunpack.c.h.b16 %v4681
    %v4851 = vunpack.c.l.b16 %v4682
    %v4852 = vunpack.c.h.b16 %v4682
    %v4853 = vunpack.c.l.b16 %v4683
    %v4854 = vunpack.c.h.b16 %v4683
    %v4855 = vunpack.c.l.b16 %v4684
    %v4856 = vunpack.c.h.b16 %v4684
    %v4857 = vunpack.c.l.b16 %v4685
    %v4858 = vunpack.c.h.b16 %v4685
    %v4859 = vunpack.c.l.b16 %v4686
    %v4860 = vunpack.c.h.b16 %v4686
    %v4861 = vunpack.c.l.b16 %v4687
    %v4862 = vunpack.c.h.b16 %v4687
    %v4863 = vunpack.c.l.b16 %v4688
    %v4864 = vunpack.c.h.b16 %v4688
    %v4865 = vunpack.c.l.b16 %v4689
    %v4866 = vunpack.c.h.b16 %v4689
    %v4867 = vunpack.c.l.b16 %v4690
    %v4868 = vunpack.c.h.b16 %v4690
    %v4869 = vunpack.c.l.b16 %v4691
    %v4870 = vunpack.c.h.b16 %v4691
    %v4871 = vunpack.c.l.b16 %v4692
    %v4872 = vunpack.c.h.b16 %v4692
    %v4873 = vunpack.c.l.b16 %v4693
    %v4874 = vunpack.c.h.b16 %v4693
    %v4875 = vunpack.c.l.b16 %v4694
    %v4876 = vunpack.c.h.b16 %v4694
    %v4877 = vunpack.c.l.b16 %v4695
    %v4878 = vunpack.c.h.b16 %v4695
    %v4879 = vunpack.c.l.b16 %v4696
    %v4880 = vunpack.c.h.b16 %v4696
    %v4881 = vunpack.c.l.b16 %v4697
    %v4882 = vunpack.c.h.b16 %v4697
    %v4883 = vunpack.c.l.b16 %v4698
    %v4884 = vunpack.c.h.b16 %v4698
    %v4885 = vunpack.c.l.b16 %v4699
    %v4886 = vunpack.c.h.b16 %v4699
    %v4887 = vunpack.c.l.b16 %v4700
    %v4888 = vunpack.c.h.b16 %v4700
    %v4889 = vunpack.c.l.b16 %v4701
    %v4890 = vunpack.c.h.b16 %v4701
    %v4891 = vunpack.c.l.b16 %v4702
    %v4892 = vunpack.c.h.b16 %v4702
    %v4893 = vunpack.c.l.b16 %v4703
    %v4894 = vunpack.c.h.b16 %v4703
    %v4895 = vunpack.c.l.b16 %v4704
    %v4896 = vunpack.c.h.b16 %v4704
    %v4897 = vunpack.c.l.b16 %v4705
    %v4898 = vunpack.c.h.b16 %v4705
    %v4899 = vunpack.c.l.b16 %v4706
    %v4900 = vunpack.c.h.b16 %v4706
    %v4901 = vunpack.c.l.b16 %v4707
    %v4902 = vunpack.c.h.b16 %v4707
    %v4903 = vunpack.c.l.b16 %v4708
    %v4904 = vunpack.c.h.b16 %v4708
    %v4905 = vunpack.c.l.b16 %v4709
    %v4906 = vunpack.c.h.b16 %v4709
    %v4907 = vunpack.c.l.b16 %v4710
    %v4908 = vunpack.c.h.b16 %v4710
    %v4909 = vunpack.c.l.b16 %v4711
    %v4910 = vunpack.c.h.b16 %v4711
    %v4911 = vunpack.c.l.b16 %v4712
    %v4912 = vunpack.c.h.b16 %v4712
    %v4913 = vunpack.c.l.b16 %v4713
    %v4914 = vunpack.c.h.b16 %v4713
    %v4915 = vunpack.c.l.b16 %v4714
    %v4916 = vunpack.c.h.b16 %v4714
    %v4917 = vunpack.c.l.b16 %v4715
    %v4918 = vunpack.c.h.b16 %v4715
    %v4919 = vunpack.c.l.b16 %v4716
    %v4920 = vunpack.c.h.b16 %v4716
    %v4921 = vunpack.c.l.b16 %v4717
    %v4922 = vunpack.c.h.b16 %v4717
    %v4923 = vunpack.c.l.b16 %v4718
    %v4924 = vunpack.c.h.b16 %v4718
    %v4925 = vunpack.c.l.b16 %v4719
    %v4926 = vunpack.c.h.b16 %v4719
    %v4927 = vunpack.c.l.b16 %v4720
    %v4928 = vunpack.c.h.b16 %v4720
    %v4929 = vunpack.c.l.b16 %v4721
    %v4930 = vunpack.c.h.b16 %v4721
    %v4931 = vunpack.c.l.b16 %v4722
    %v4932 = vunpack.c.h.b16 %v4722
    %v4933 = vunpack.c.l.b16 %v4723
    %v4934 = vunpack.c.h.b16 %v4723
    %v4935 = vunpack.c.l.b16 %v4724
    %v4936 = vunpack.c.h.b16 %v4724
    %v4937 = vunpack.c.l.b16 %v4725
    %v4938 = vunpack.c.h.b16 %v4725
    %v4939 = vunpack.c.l.b16 %v4726
    %v4940 = vunpack.c.h.b16 %v4726
    %v4941 = vpack.c.b16 %v4817, %v4813
    %v4942 = vpack.c.b16 %v4818, %v4814
    %v4943 = vpack.c.b16 %v4819, %v4815
    %v4944 = vpack.c.b16 %v4820, %v4816
    %v4945 = vpack.c.b16 %v4825, %v4821
    %v4946 = vpack.c.b16 %v4826, %v4822
    %v4947 = vpack.c.b16 %v4827, %v4823
    %v4948 = vpack.c.b16 %v4828, %v4824
    %v4949 = vpack.c.b16 %v4833, %v4829
    %v4950 = vpack.c.b16 %v4834, %v4830
    %v4951 = vpack.c.b16 %v4835, %v4831
    %v4952 = vpack.c.b16 %v4836, %v4832
    %v4953 = vpack.c.b16 %v4841, %v4837
    %v4954 = vpack.c.b16 %v4842, %v4838
    %v4955 = vpack.c.b16 %v4843, %v4839
    %v4956 = vpack.c.b16 %v4844, %v4840
    %v4957 = vpack.c.b16 %v4849, %v4845
    %v4958 = vpack.c.b16 %v4850, %v4846
    %v4959 = vpack.c.b16 %v4851, %v4847
    %v4960 = vpack.c.b16 %v4852, %v4848
    %v4961 = vpack.c.b16 %v4857, %v4853
    %v4962 = vpack.c.b16 %v4858, %v4854
    %v4963 = vpack.c.b16 %v4859, %v4855
    %v4964 = vpack.c.b16 %v4860, %v4856
    %v4965 = vpack.c.b16 %v4865, %v4861
    %v4966 = vpack.c.b16 %v4866, %v4862
    %v4967 = vpack.c.b16 %v4867, %v4863
    %v4968 = vpack.c.b16 %v4868, %v4864
    %v4969 = vpack.c.b16 %v4873, %v4869
    %v4970 = vpack.c.b16 %v4874, %v4870
    %v4971 = vpack.c.b16 %v4875, %v4871
    %v4972 = vpack.c.b16 %v4876, %v4872
    %v4973 = vpack.c.b16 %v4881, %v4877
    %v4974 = vpack.c.b16 %v4882, %v4878
    %v4975 = vpack.c.b16 %v4883, %v4879
    %v4976 = vpack.c.b16 %v4884, %v4880
    %v4977 = vpack.c.b16 %v4889, %v4885
    %v4978 = vpack.c.b16 %v4890, %v4886
    %v4979 = vpack.c.b16 %v4891, %v4887
    %v4980 = vpack.c.b16 %v4892, %v4888
    %v4981 = vpack.c.b16 %v4897, %v4893
    %v4982 = vpack.c.b16 %v4898, %v4894
    %v4983 = vpack.c.b16 %v4899, %v4895
    %v4984 = vpack.c.b16 %v4900, %v4896
    %v4985 = vpack.c.b16 %v4905, %v4901
    %v4986 = vpack.c.b16 %v4906, %v4902
    %v4987 = vpack.c.b16 %v4907, %v4903
    %v4988 = vpack.c.b16 %v4908, %v4904
    %v4989 = vpack.c.b16 %v4913, %v4909
    %v4990 = vpack.c.b16 %v4914, %v4910
    %v4991 = vpack.c.b16 %v4915, %v4911
    %v4992 = vpack.c.b16 %v4916, %v4912
    %v4993 = vpack.c.b16 %v4921, %v4917
    %v4994 = vpack.c.b16 %v4922, %v4918
    %v4995 = vpack.c.b16 %v4923, %v4919
    %v4996 = vpack.c.b16 %v4924, %v4920
    %v4997 = vpack.c.b16 %v4929, %v4925
    %v4998 = vpack.c.b16 %v4930, %v4926
    %v4999 = vpack.c.b16 %v4931, %v4927
    %v5000 = vpack.c.b16 %v4932, %v4928
    %v5001 = vpack.c.b16 %v4937, %v4933
    %v5002 = vpack.c.b16 %v4938, %v4934
    %v5003 = vpack.c.b16 %v4939, %v4935
    %v5004 = vpack.c.b16 %v4940, %v4936
    %5069 = vmatprep.subr.bf16.mxu0 %v4970
    %5070 = vmatpush1.bf16.msra.mxu0 %v4969
    %5071 = vmatprep.subr.bf16.mxu0 %v4966
    %5072 = vmatpush1.bf16.msra.mxu0 %v4965
    %5073 = vmatprep.subr.bf16.mxu0 %v4962
    %5074 = vmatpush1.bf16.msra.mxu0 %v4961
    %5075 = vmatprep.subr.bf16.mxu0 %v4958
    %5076 = vmatpush1.bf16.msra.mxu0 %v4957
    %5077 = vmatprep.subr.bf16.mxu0 %v4954
    %5078 = vmatpush1.bf16.msra.mxu0 %v4953
    %5079 = vmatprep.subr.bf16.mxu0 %v4950
    %5080 = vmatpush1.bf16.msra.mxu0 %v4949
    %5081 = vmatprep.subr.bf16.mxu0 %v4946
    %5082 = vmatpush1.bf16.msra.mxu0 %v4945
    %5083 = vmatprep.subr.bf16.mxu0 %v4942
    %5084 = vmatpush1.bf16.msra.mxu0 %v4941
    %5085 = vmatprep.subr.bf16.mxu0 %v5002
    %5086 = vmatpush2.bf16.msra.mxu0 %v5001
    %5087 = vmatprep.subr.bf16.mxu0 %v4998
    %5088 = vmatpush2.bf16.msra.mxu0 %v4997
    %5089 = vmatprep.subr.bf16.mxu0 %v4994
    %5090 = vmatpush2.bf16.msra.mxu0 %v4993
    %5091 = vmatprep.subr.bf16.mxu0 %v4990
    %5092 = vmatpush2.bf16.msra.mxu0 %v4989
    %5093 = vmatprep.subr.bf16.mxu0 %v4986
    %5094 = vmatpush2.bf16.msra.mxu0 %v4985
    %5095 = vmatprep.subr.bf16.mxu0 %v4982
    %5096 = vmatpush2.bf16.msra.mxu0 %v4981
    %5097 = vmatprep.subr.bf16.mxu0 %v4978
    %5098 = vmatpush2.bf16.msra.mxu0 %v4977
    %5099 = vmatprep.subr.bf16.mxu0 %v4974
    %5100 = vmatpush2.bf16.msra.mxu0 %v4973
    %5101 = vmatprep.mubr.bf16.mxu0 %v4662
    %5102 = vmatmul.mubr.bf16.gmra.mxu0 %v4660
    %v5103 = vpop.f32.mrf.mxu0
    %v5104 = vadd.f32 %v4732, %v5103
    %v5105 = vpop.f32.mrf.mxu0
    %v5106 = vadd.f32 %v4736, %v5105
    %v5107 = vpop.f32.mrf.mxu0
    %v5108 = vpop.f32.mrf.mxu0
    %5109 = vdwg.mxu0
    %5110 = vmatprep.subr.bf16.mxu0 %v4972
    %5111 = vmatpush1.bf16.msra.mxu0 %v4971
    %5112 = vmatprep.subr.bf16.mxu0 %v4968
    %5113 = vmatpush1.bf16.msra.mxu0 %v4967
    %5114 = vmatprep.subr.bf16.mxu0 %v4964
    %5115 = vmatpush1.bf16.msra.mxu0 %v4963
    %5116 = vmatprep.subr.bf16.mxu0 %v4960
    %5117 = vmatpush1.bf16.msra.mxu0 %v4959
    %5118 = vmatprep.subr.bf16.mxu0 %v4956
    %5119 = vmatpush1.bf16.msra.mxu0 %v4955
    %5120 = vmatprep.subr.bf16.mxu0 %v4952
    %5121 = vmatpush1.bf16.msra.mxu0 %v4951
    %5122 = vmatprep.subr.bf16.mxu0 %v4948
    %5123 = vmatpush1.bf16.msra.mxu0 %v4947
    %5124 = vmatprep.subr.bf16.mxu0 %v4944
    %5125 = vmatpush1.bf16.msra.mxu0 %v4943
    %5126 = vmatprep.subr.bf16.mxu0 %v5004
    %5127 = vmatpush2.bf16.msra.mxu0 %v5003
    %5128 = vmatprep.subr.bf16.mxu0 %v5000
    %5129 = vmatpush2.bf16.msra.mxu0 %v4999
    %5130 = vmatprep.subr.bf16.mxu0 %v4996
    %5131 = vmatpush2.bf16.msra.mxu0 %v4995
    %5132 = vmatprep.subr.bf16.mxu0 %v4992
    %5133 = vmatpush2.bf16.msra.mxu0 %v4991
    %5134 = vmatprep.subr.bf16.mxu0 %v4988
    %5135 = vmatpush2.bf16.msra.mxu0 %v4987
    %5136 = vmatprep.subr.bf16.mxu0 %v4984
    %5137 = vmatpush2.bf16.msra.mxu0 %v4983
    %5138 = vmatprep.subr.bf16.mxu0 %v4980
    %5139 = vmatpush2.bf16.msra.mxu0 %v4979
    %5140 = vmatprep.subr.bf16.mxu0 %v4976
    %5141 = vmatpush2.bf16.msra.mxu0 %v4975
    %5142 = vmatprep.mubr.bf16.mxu0 %v4662
    %5143 = vmatmul.mubr.bf16.gmra.mxu0 %v4660
    %v5144 = vpop.f32.mrf.mxu0
    %v5145 = vadd.f32 %v4740, %v5144
    %v5146 = vpop.f32.mrf.mxu0
    %v5147 = vadd.f32 %v4744, %v5146
    %v5148 = vpop.f32.mrf.mxu0
    %v5149 = vpop.f32.mrf.mxu0
    %5150 = vdwg.mxu0
    %v5151 = vxor.u32 %v5104, 2147483648
    %v5152 = vmul.f32 %v5151, 1.442695
    %v5153 = vpow.pop %v5152
    %v5154 = vadd.f32 %v5153, 1.0
    %v5155 = vrcp.pop %v5154
    %v5156 = vmul.f32 1.0, %v5155
    %v5157 = vxor.u32 %v5106, 2147483648
    %v5158 = vmul.f32 %v5157, 1.442695
    %v5159 = vpow.pop %v5158
    %v5160 = vadd.f32 %v5159, 1.0
    %v5161 = vrcp.pop %v5160
    %v5162 = vmul.f32 1.0, %v5161
    %v5163 = vmul.f32 %v5156, %v5147
    %v5164 = vadd.f32 %v5145, %v5163
    %v5165 = vtanh.pop %v5164
    %v5166 = vsub.f32 1.0, %v5162
    %v5167 = vmul.f32 %v5166, %v5165
    %v5168 = vmul.f32 %v5162, %v4657
    %v5169 = vadd.f32 %v5167, %v5168
    %s5170 = scalar_lea.vmem [#allocation8], 36
    %5171 = vst [vmem:[%s5170] sm:$0xf] %v5169
    %v5172 = vpack.c.bf16 %v5169, %v5169
    %s5173 = scalar_lea.vmem [#allocation2], 20
    %v5174 = vld [vmem:[%s5173] sm:$0x3]
    %v5175 = vld [vmem:[#allocation5] sm:$0xff]
    %v5176 = vld [vmem:[#allocation5 + $0x8] sm:$0xff]
    %v5177 = vld [vmem:[#allocation5 + $0x10] sm:$0xff]
    %v5178 = vld [vmem:[#allocation5 + $0x18] sm:$0xff]
    %v5179 = vld [vmem:[#allocation5 + $0x20] sm:$0xff]
    %v5180 = vld [vmem:[#allocation5 + $0x28] sm:$0xff]
    %v5181 = vld [vmem:[#allocation5 + $0x30] sm:$0xff]
    %v5182 = vld [vmem:[#allocation5 + $0x38] sm:$0xff]
    %v5183 = vld [vmem:[#allocation5 + $0x40] sm:$0xff]
    %v5184 = vld [vmem:[#allocation5 + $0x48] sm:$0xff]
    %v5185 = vld [vmem:[#allocation5 + $0x50] sm:$0xff]
    %v5186 = vld [vmem:[#allocation5 + $0x58] sm:$0xff]
    %v5187 = vld [vmem:[#allocation5 + $0x60] sm:$0xff]
    %v5188 = vld [vmem:[#allocation5 + $0x68] sm:$0xff]
    %v5189 = vld [vmem:[#allocation5 + $0x70] sm:$0xff]
    %v5190 = vld [vmem:[#allocation5 + $0x78] sm:$0xff]
    %v5191 = vld [vmem:[#allocation5 + $0x80] sm:$0xff]
    %v5192 = vld [vmem:[#allocation5 + $0x88] sm:$0xff]
    %v5193 = vld [vmem:[#allocation5 + $0x90] sm:$0xff]
    %v5194 = vld [vmem:[#allocation5 + $0x98] sm:$0xff]
    %v5195 = vld [vmem:[#allocation5 + $0xa0] sm:$0xff]
    %v5196 = vld [vmem:[#allocation5 + $0xa8] sm:$0xff]
    %v5197 = vld [vmem:[#allocation5 + $0xb0] sm:$0xff]
    %v5198 = vld [vmem:[#allocation5 + $0xb8] sm:$0xff]
    %v5199 = vld [vmem:[#allocation5 + $0xc0] sm:$0xff]
    %v5200 = vld [vmem:[#allocation5 + $0xc8] sm:$0xff]
    %v5201 = vld [vmem:[#allocation5 + $0xd0] sm:$0xff]
    %v5202 = vld [vmem:[#allocation5 + $0xd8] sm:$0xff]
    %v5203 = vld [vmem:[#allocation5 + $0xe0] sm:$0xff]
    %v5204 = vld [vmem:[#allocation5 + $0xe8] sm:$0xff]
    %v5205 = vld [vmem:[#allocation5 + $0xf0] sm:$0xff]
    %v5206 = vld [vmem:[#allocation5 + $0xf8] sm:$0xff]
    %v5207 = vld [vmem:[#allocation5 + $0x100] sm:$0xff]
    %v5208 = vld [vmem:[#allocation5 + $0x108] sm:$0xff]
    %v5209 = vld [vmem:[#allocation5 + $0x110] sm:$0xff]
    %v5210 = vld [vmem:[#allocation5 + $0x118] sm:$0xff]
    %v5211 = vld [vmem:[#allocation5 + $0x120] sm:$0xff]
    %v5212 = vld [vmem:[#allocation5 + $0x128] sm:$0xff]
    %v5213 = vld [vmem:[#allocation5 + $0x130] sm:$0xff]
    %v5214 = vld [vmem:[#allocation5 + $0x138] sm:$0xff]
    %v5215 = vld [vmem:[#allocation5 + $0x140] sm:$0xff]
    %v5216 = vld [vmem:[#allocation5 + $0x148] sm:$0xff]
    %v5217 = vld [vmem:[#allocation5 + $0x150] sm:$0xff]
    %v5218 = vld [vmem:[#allocation5 + $0x158] sm:$0xff]
    %v5219 = vld [vmem:[#allocation5 + $0x160] sm:$0xff]
    %v5220 = vld [vmem:[#allocation5 + $0x168] sm:$0xff]
    %v5221 = vld [vmem:[#allocation5 + $0x170] sm:$0xff]
    %v5222 = vld [vmem:[#allocation5 + $0x178] sm:$0xff]
    %v5223 = vld [vmem:[#allocation5 + $0x180] sm:$0xff]
    %v5224 = vld [vmem:[#allocation5 + $0x188] sm:$0xff]
    %v5225 = vld [vmem:[#allocation5 + $0x190] sm:$0xff]
    %v5226 = vld [vmem:[#allocation5 + $0x198] sm:$0xff]
    %v5227 = vld [vmem:[#allocation5 + $0x1a0] sm:$0xff]
    %v5228 = vld [vmem:[#allocation5 + $0x1a8] sm:$0xff]
    %v5229 = vld [vmem:[#allocation5 + $0x1b0] sm:$0xff]
    %v5230 = vld [vmem:[#allocation5 + $0x1b8] sm:$0xff]
    %v5231 = vld [vmem:[#allocation5 + $0x1c0] sm:$0xff]
    %v5232 = vld [vmem:[#allocation5 + $0x1c8] sm:$0xff]
    %v5233 = vld [vmem:[#allocation5 + $0x1d0] sm:$0xff]
    %v5234 = vld [vmem:[#allocation5 + $0x1d8] sm:$0xff]
    %v5235 = vld [vmem:[#allocation5 + $0x1e0] sm:$0xff]
    %v5236 = vld [vmem:[#allocation5 + $0x1e8] sm:$0xff]
    %v5237 = vld [vmem:[#allocation5 + $0x1f0] sm:$0xff]
    %v5238 = vld [vmem:[#allocation5 + $0x1f8] sm:$0xff]
    %v5239 = vld [vmem:[#allocation7] sm:$0xf]
    %v5241 = vlaneseq
    %v5242 = vshrl.u32 %v5241, 7
    %v5243 = vsub.s32 0, %v5242
    %v5244 = vrot.slane %v5239, %v5243
    %v5245 = vlaneseq
    %v5246 = vshrl.u32 %v5245, 7
    %v5247 = vsub.s32 1, %v5246
    %v5248 = vrot.slane %v5239, %v5247
    %v5249 = vlaneseq
    %v5250 = vshrl.u32 %v5249, 7
    %v5251 = vsub.s32 2, %v5250
    %v5252 = vrot.slane %v5239, %v5251
    %v5253 = vlaneseq
    %v5254 = vshrl.u32 %v5253, 7
    %v5255 = vsub.s32 3, %v5254
    %v5256 = vrot.slane %v5239, %v5255
    %v5325 = vunpack.c.l.b16 %v5175
    %v5326 = vunpack.c.h.b16 %v5175
    %v5327 = vunpack.c.l.b16 %v5176
    %v5328 = vunpack.c.h.b16 %v5176
    %v5329 = vunpack.c.l.b16 %v5177
    %v5330 = vunpack.c.h.b16 %v5177
    %v5331 = vunpack.c.l.b16 %v5178
    %v5332 = vunpack.c.h.b16 %v5178
    %v5333 = vunpack.c.l.b16 %v5179
    %v5334 = vunpack.c.h.b16 %v5179
    %v5335 = vunpack.c.l.b16 %v5180
    %v5336 = vunpack.c.h.b16 %v5180
    %v5337 = vunpack.c.l.b16 %v5181
    %v5338 = vunpack.c.h.b16 %v5181
    %v5339 = vunpack.c.l.b16 %v5182
    %v5340 = vunpack.c.h.b16 %v5182
    %v5341 = vunpack.c.l.b16 %v5183
    %v5342 = vunpack.c.h.b16 %v5183
    %v5343 = vunpack.c.l.b16 %v5184
    %v5344 = vunpack.c.h.b16 %v5184
    %v5345 = vunpack.c.l.b16 %v5185
    %v5346 = vunpack.c.h.b16 %v5185
    %v5347 = vunpack.c.l.b16 %v5186
    %v5348 = vunpack.c.h.b16 %v5186
    %v5349 = vunpack.c.l.b16 %v5187
    %v5350 = vunpack.c.h.b16 %v5187
    %v5351 = vunpack.c.l.b16 %v5188
    %v5352 = vunpack.c.h.b16 %v5188
    %v5353 = vunpack.c.l.b16 %v5189
    %v5354 = vunpack.c.h.b16 %v5189
    %v5355 = vunpack.c.l.b16 %v5190
    %v5356 = vunpack.c.h.b16 %v5190
    %v5357 = vunpack.c.l.b16 %v5191
    %v5358 = vunpack.c.h.b16 %v5191
    %v5359 = vunpack.c.l.b16 %v5192
    %v5360 = vunpack.c.h.b16 %v5192
    %v5361 = vunpack.c.l.b16 %v5193
    %v5362 = vunpack.c.h.b16 %v5193
    %v5363 = vunpack.c.l.b16 %v5194
    %v5364 = vunpack.c.h.b16 %v5194
    %v5365 = vunpack.c.l.b16 %v5195
    %v5366 = vunpack.c.h.b16 %v5195
    %v5367 = vunpack.c.l.b16 %v5196
    %v5368 = vunpack.c.h.b16 %v5196
    %v5369 = vunpack.c.l.b16 %v5197
    %v5370 = vunpack.c.h.b16 %v5197
    %v5371 = vunpack.c.l.b16 %v5198
    %v5372 = vunpack.c.h.b16 %v5198
    %v5373 = vunpack.c.l.b16 %v5199
    %v5374 = vunpack.c.h.b16 %v5199
    %v5375 = vunpack.c.l.b16 %v5200
    %v5376 = vunpack.c.h.b16 %v5200
    %v5377 = vunpack.c.l.b16 %v5201
    %v5378 = vunpack.c.h.b16 %v5201
    %v5379 = vunpack.c.l.b16 %v5202
    %v5380 = vunpack.c.h.b16 %v5202
    %v5381 = vunpack.c.l.b16 %v5203
    %v5382 = vunpack.c.h.b16 %v5203
    %v5383 = vunpack.c.l.b16 %v5204
    %v5384 = vunpack.c.h.b16 %v5204
    %v5385 = vunpack.c.l.b16 %v5205
    %v5386 = vunpack.c.h.b16 %v5205
    %v5387 = vunpack.c.l.b16 %v5206
    %v5388 = vunpack.c.h.b16 %v5206
    %v5389 = vunpack.c.l.b16 %v5207
    %v5390 = vunpack.c.h.b16 %v5207
    %v5391 = vunpack.c.l.b16 %v5208
    %v5392 = vunpack.c.h.b16 %v5208
    %v5393 = vunpack.c.l.b16 %v5209
    %v5394 = vunpack.c.h.b16 %v5209
    %v5395 = vunpack.c.l.b16 %v5210
    %v5396 = vunpack.c.h.b16 %v5210
    %v5397 = vunpack.c.l.b16 %v5211
    %v5398 = vunpack.c.h.b16 %v5211
    %v5399 = vunpack.c.l.b16 %v5212
    %v5400 = vunpack.c.h.b16 %v5212
    %v5401 = vunpack.c.l.b16 %v5213
    %v5402 = vunpack.c.h.b16 %v5213
    %v5403 = vunpack.c.l.b16 %v5214
    %v5404 = vunpack.c.h.b16 %v5214
    %v5405 = vunpack.c.l.b16 %v5215
    %v5406 = vunpack.c.h.b16 %v5215
    %v5407 = vunpack.c.l.b16 %v5216
    %v5408 = vunpack.c.h.b16 %v5216
    %v5409 = vunpack.c.l.b16 %v5217
    %v5410 = vunpack.c.h.b16 %v5217
    %v5411 = vunpack.c.l.b16 %v5218
    %v5412 = vunpack.c.h.b16 %v5218
    %v5413 = vunpack.c.l.b16 %v5219
    %v5414 = vunpack.c.h.b16 %v5219
    %v5415 = vunpack.c.l.b16 %v5220
    %v5416 = vunpack.c.h.b16 %v5220
    %v5417 = vunpack.c.l.b16 %v5221
    %v5418 = vunpack.c.h.b16 %v5221
    %v5419 = vunpack.c.l.b16 %v5222
    %v5420 = vunpack.c.h.b16 %v5222
    %v5421 = vunpack.c.l.b16 %v5223
    %v5422 = vunpack.c.h.b16 %v5223
    %v5423 = vunpack.c.l.b16 %v5224
    %v5424 = vunpack.c.h.b16 %v5224
    %v5425 = vunpack.c.l.b16 %v5225
    %v5426 = vunpack.c.h.b16 %v5225
    %v5427 = vunpack.c.l.b16 %v5226
    %v5428 = vunpack.c.h.b16 %v5226
    %v5429 = vunpack.c.l.b16 %v5227
    %v5430 = vunpack.c.h.b16 %v5227
    %v5431 = vunpack.c.l.b16 %v5228
    %v5432 = vunpack.c.h.b16 %v5228
    %v5433 = vunpack.c.l.b16 %v5229
    %v5434 = vunpack.c.h.b16 %v5229
    %v5435 = vunpack.c.l.b16 %v5230
    %v5436 = vunpack.c.h.b16 %v5230
    %v5437 = vunpack.c.l.b16 %v5231
    %v5438 = vunpack.c.h.b16 %v5231
    %v5439 = vunpack.c.l.b16 %v5232
    %v5440 = vunpack.c.h.b16 %v5232
    %v5441 = vunpack.c.l.b16 %v5233
    %v5442 = vunpack.c.h.b16 %v5233
    %v5443 = vunpack.c.l.b16 %v5234
    %v5444 = vunpack.c.h.b16 %v5234
    %v5445 = vunpack.c.l.b16 %v5235
    %v5446 = vunpack.c.h.b16 %v5235
    %v5447 = vunpack.c.l.b16 %v5236
    %v5448 = vunpack.c.h.b16 %v5236
    %v5449 = vunpack.c.l.b16 %v5237
    %v5450 = vunpack.c.h.b16 %v5237
    %v5451 = vunpack.c.l.b16 %v5238
    %v5452 = vunpack.c.h.b16 %v5238
    %v5453 = vpack.c.b16 %v5329, %v5325
    %v5454 = vpack.c.b16 %v5330, %v5326
    %v5455 = vpack.c.b16 %v5331, %v5327
    %v5456 = vpack.c.b16 %v5332, %v5328
    %v5457 = vpack.c.b16 %v5337, %v5333
    %v5458 = vpack.c.b16 %v5338, %v5334
    %v5459 = vpack.c.b16 %v5339, %v5335
    %v5460 = vpack.c.b16 %v5340, %v5336
    %v5461 = vpack.c.b16 %v5345, %v5341
    %v5462 = vpack.c.b16 %v5346, %v5342
    %v5463 = vpack.c.b16 %v5347, %v5343
    %v5464 = vpack.c.b16 %v5348, %v5344
    %v5465 = vpack.c.b16 %v5353, %v5349
    %v5466 = vpack.c.b16 %v5354, %v5350
    %v5467 = vpack.c.b16 %v5355, %v5351
    %v5468 = vpack.c.b16 %v5356, %v5352
    %v5469 = vpack.c.b16 %v5361, %v5357
    %v5470 = vpack.c.b16 %v5362, %v5358
    %v5471 = vpack.c.b16 %v5363, %v5359
    %v5472 = vpack.c.b16 %v5364, %v5360
    %v5473 = vpack.c.b16 %v5369, %v5365
    %v5474 = vpack.c.b16 %v5370, %v5366
    %v5475 = vpack.c.b16 %v5371, %v5367
    %v5476 = vpack.c.b16 %v5372, %v5368
    %v5477 = vpack.c.b16 %v5377, %v5373
    %v5478 = vpack.c.b16 %v5378, %v5374
    %v5479 = vpack.c.b16 %v5379, %v5375
    %v5480 = vpack.c.b16 %v5380, %v5376
    %v5481 = vpack.c.b16 %v5385, %v5381
    %v5482 = vpack.c.b16 %v5386, %v5382
    %v5483 = vpack.c.b16 %v5387, %v5383
    %v5484 = vpack.c.b16 %v5388, %v5384
    %v5485 = vpack.c.b16 %v5393, %v5389
    %v5486 = vpack.c.b16 %v5394, %v5390
    %v5487 = vpack.c.b16 %v5395, %v5391
    %v5488 = vpack.c.b16 %v5396, %v5392
    %v5489 = vpack.c.b16 %v5401, %v5397
    %v5490 = vpack.c.b16 %v5402, %v5398
    %v5491 = vpack.c.b16 %v5403, %v5399
    %v5492 = vpack.c.b16 %v5404, %v5400
    %v5493 = vpack.c.b16 %v5409, %v5405
    %v5494 = vpack.c.b16 %v5410, %v5406
    %v5495 = vpack.c.b16 %v5411, %v5407
    %v5496 = vpack.c.b16 %v5412, %v5408
    %v5497 = vpack.c.b16 %v5417, %v5413
    %v5498 = vpack.c.b16 %v5418, %v5414
    %v5499 = vpack.c.b16 %v5419, %v5415
    %v5500 = vpack.c.b16 %v5420, %v5416
    %v5501 = vpack.c.b16 %v5425, %v5421
    %v5502 = vpack.c.b16 %v5426, %v5422
    %v5503 = vpack.c.b16 %v5427, %v5423
    %v5504 = vpack.c.b16 %v5428, %v5424
    %v5505 = vpack.c.b16 %v5433, %v5429
    %v5506 = vpack.c.b16 %v5434, %v5430
    %v5507 = vpack.c.b16 %v5435, %v5431
    %v5508 = vpack.c.b16 %v5436, %v5432
    %v5509 = vpack.c.b16 %v5441, %v5437
    %v5510 = vpack.c.b16 %v5442, %v5438
    %v5511 = vpack.c.b16 %v5443, %v5439
    %v5512 = vpack.c.b16 %v5444, %v5440
    %v5513 = vpack.c.b16 %v5449, %v5445
    %v5514 = vpack.c.b16 %v5450, %v5446
    %v5515 = vpack.c.b16 %v5451, %v5447
    %v5516 = vpack.c.b16 %v5452, %v5448
    %5581 = vmatprep.subr.bf16.mxu0 %v5482
    %5582 = vmatpush1.bf16.msra.mxu0 %v5481
    %5583 = vmatprep.subr.bf16.mxu0 %v5478
    %5584 = vmatpush1.bf16.msra.mxu0 %v5477
    %5585 = vmatprep.subr.bf16.mxu0 %v5474
    %5586 = vmatpush1.bf16.msra.mxu0 %v5473
    %5587 = vmatprep.subr.bf16.mxu0 %v5470
    %5588 = vmatpush1.bf16.msra.mxu0 %v5469
    %5589 = vmatprep.subr.bf16.mxu0 %v5466
    %5590 = vmatpush1.bf16.msra.mxu0 %v5465
    %5591 = vmatprep.subr.bf16.mxu0 %v5462
    %5592 = vmatpush1.bf16.msra.mxu0 %v5461
    %5593 = vmatprep.subr.bf16.mxu0 %v5458
    %5594 = vmatpush1.bf16.msra.mxu0 %v5457
    %5595 = vmatprep.subr.bf16.mxu0 %v5454
    %5596 = vmatpush1.bf16.msra.mxu0 %v5453
    %5597 = vmatprep.subr.bf16.mxu0 %v5514
    %5598 = vmatpush2.bf16.msra.mxu0 %v5513
    %5599 = vmatprep.subr.bf16.mxu0 %v5510
    %5600 = vmatpush2.bf16.msra.mxu0 %v5509
    %5601 = vmatprep.subr.bf16.mxu0 %v5506
    %5602 = vmatpush2.bf16.msra.mxu0 %v5505
    %5603 = vmatprep.subr.bf16.mxu0 %v5502
    %5604 = vmatpush2.bf16.msra.mxu0 %v5501
    %5605 = vmatprep.subr.bf16.mxu0 %v5498
    %5606 = vmatpush2.bf16.msra.mxu0 %v5497
    %5607 = vmatprep.subr.bf16.mxu0 %v5494
    %5608 = vmatpush2.bf16.msra.mxu0 %v5493
    %5609 = vmatprep.subr.bf16.mxu0 %v5490
    %5610 = vmatpush2.bf16.msra.mxu0 %v5489
    %5611 = vmatprep.subr.bf16.mxu0 %v5486
    %5612 = vmatpush2.bf16.msra.mxu0 %v5485
    %5613 = vmatprep.mubr.bf16.mxu0 %v5174
    %5614 = vmatmul.mubr.bf16.gmra.mxu0 %v5172
    %v5615 = vpop.f32.mrf.mxu0
    %v5616 = vadd.f32 %v5244, %v5615
    %v5617 = vpop.f32.mrf.mxu0
    %v5618 = vadd.f32 %v5248, %v5617
    %v5619 = vpop.f32.mrf.mxu0
    %v5620 = vpop.f32.mrf.mxu0
    %5621 = vdwg.mxu0
    %5622 = vmatprep.subr.bf16.mxu0 %v5484
    %5623 = vmatpush1.bf16.msra.mxu0 %v5483
    %5624 = vmatprep.subr.bf16.mxu0 %v5480
    %5625 = vmatpush1.bf16.msra.mxu0 %v5479
    %5626 = vmatprep.subr.bf16.mxu0 %v5476
    %5627 = vmatpush1.bf16.msra.mxu0 %v5475
    %5628 = vmatprep.subr.bf16.mxu0 %v5472
    %5629 = vmatpush1.bf16.msra.mxu0 %v5471
    %5630 = vmatprep.subr.bf16.mxu0 %v5468
    %5631 = vmatpush1.bf16.msra.mxu0 %v5467
    %5632 = vmatprep.subr.bf16.mxu0 %v5464
    %5633 = vmatpush1.bf16.msra.mxu0 %v5463
    %5634 = vmatprep.subr.bf16.mxu0 %v5460
    %5635 = vmatpush1.bf16.msra.mxu0 %v5459
    %5636 = vmatprep.subr.bf16.mxu0 %v5456
    %5637 = vmatpush1.bf16.msra.mxu0 %v5455
    %5638 = vmatprep.subr.bf16.mxu0 %v5516
    %5639 = vmatpush2.bf16.msra.mxu0 %v5515
    %5640 = vmatprep.subr.bf16.mxu0 %v5512
    %5641 = vmatpush2.bf16.msra.mxu0 %v5511
    %5642 = vmatprep.subr.bf16.mxu0 %v5508
    %5643 = vmatpush2.bf16.msra.mxu0 %v5507
    %5644 = vmatprep.subr.bf16.mxu0 %v5504
    %5645 = vmatpush2.bf16.msra.mxu0 %v5503
    %5646 = vmatprep.subr.bf16.mxu0 %v5500
    %5647 = vmatpush2.bf16.msra.mxu0 %v5499
    %5648 = vmatprep.subr.bf16.mxu0 %v5496
    %5649 = vmatpush2.bf16.msra.mxu0 %v5495
    %5650 = vmatprep.subr.bf16.mxu0 %v5492
    %5651 = vmatpush2.bf16.msra.mxu0 %v5491
    %5652 = vmatprep.subr.bf16.mxu0 %v5488
    %5653 = vmatpush2.bf16.msra.mxu0 %v5487
    %5654 = vmatprep.mubr.bf16.mxu0 %v5174
    %5655 = vmatmul.mubr.bf16.gmra.mxu0 %v5172
    %v5656 = vpop.f32.mrf.mxu0
    %v5657 = vadd.f32 %v5252, %v5656
    %v5658 = vpop.f32.mrf.mxu0
    %v5659 = vadd.f32 %v5256, %v5658
    %v5660 = vpop.f32.mrf.mxu0
    %v5661 = vpop.f32.mrf.mxu0
    %5662 = vdwg.mxu0
    %v5663 = vxor.u32 %v5616, 2147483648
    %v5664 = vmul.f32 %v5663, 1.442695
    %v5665 = vpow.pop %v5664
    %v5666 = vadd.f32 %v5665, 1.0
    %v5667 = vrcp.pop %v5666
    %v5668 = vmul.f32 1.0, %v5667
    %v5669 = vxor.u32 %v5618, 2147483648
    %v5670 = vmul.f32 %v5669, 1.442695
    %v5671 = vpow.pop %v5670
    %v5672 = vadd.f32 %v5671, 1.0
    %v5673 = vrcp.pop %v5672
    %v5674 = vmul.f32 1.0, %v5673
    %v5675 = vmul.f32 %v5668, %v5659
    %v5676 = vadd.f32 %v5657, %v5675
    %v5677 = vtanh.pop %v5676
    %v5678 = vsub.f32 1.0, %v5674
    %v5679 = vmul.f32 %v5678, %v5677
    %v5680 = vmul.f32 %v5674, %v5169
    %v5681 = vadd.f32 %v5679, %v5680
    %s5682 = scalar_lea.vmem [#allocation8], 40
    %5683 = vst [vmem:[%s5682] sm:$0xf] %v5681
    // Predicated region
    $region26: #{tpu_custom_call.1} parent=1 // pred_check
      _
    $region27: #{tpu_custom_call.1} parent=1 // pred_check_branch
      %5685 = sbr.rel (0) target = $region29
    $region28: #{tpu_custom_call.1} parent=1 // pred_region
      %s5687 = ssub.s32 704, 704
      %5688 = vsyncadd [#allocation4], %s5687
      %s5689 = sshll.u32 [#allocation8], 4
      %s5690 = int_to_ptr.vmem [resolvable:$true] %s5689
      %5695 = dma.vmem_to_hbm [thread:$0]  %s5690, 704, %s3, [#allocation4], 64, 64, 4
    $region29: #{tpu_custom_call.1} parent=1 // pred_fallthru
      _
    // Predicated region
    $region30: #{tpu_custom_call.1} parent=1 // pred_check
      _
    $region31: #{tpu_custom_call.1} parent=1 // pred_check_branch
      %5697 = sbr.rel (0) target = $region33
    $region32: #{tpu_custom_call.1} parent=1 // pred_region
      %5698 = dma.done [#allocation4], 704
    $region33: #{tpu_custom_call.1} parent=1 // pred_fallthru
      _
    %5699 = vsyncpa [#allocation3], 1
    %5700 = vsyncpa [#allocation6], 1
    %5701 = vsyncpa [#allocation4], 1

</llo_original>
